<compile_context>
chip_gen: v7x
topology: tpu7x:2x2x1
jax: 0.10.0
libtpu: 0.0.40
codegen_flags: <defaults>
</compile_context>

<pallas_src>
import jax
import jax.numpy as jnp
import numpy as np
from jax.experimental import pallas as pl
from jax.experimental.pallas import tpu as pltpu


# ----------------------------------------------------------------------------- #
# Precomputed one-hot gather matrices realising a 3x3 "same" conv on the flat grid#
# ----------------------------------------------------------------------------- #
def _build_conv_gather_matrices(n1, n2):
    """G[s] (M, M), s = kh*3 + kw, such that (x @ G[s])[:, p] picks the (kh, kw)
    neighbour of flat grid point p = i1*n2 + i2 (zero where the neighbour is
    outside the grid, i.e. zero padding)."""
    M = n1 * n2
    G = np.zeros((9, M, M), np.float32)
    for kh in range(3):
        for kw in range(3):
            s = kh * 3 + kw
            for i1 in range(n1):
                j1 = i1 + kw - 1
                if not (0 <= j1 < n1):
                    continue
                for i2 in range(n2):
                    j2 = i2 + kh - 1
                    if 0 <= j2 < n2:
                        G[s, j1 * n2 + j2, i1 * n2 + i2] = 1.0
    return jnp.asarray(G)


# ----------------------------------------------------------------------------- #
# Fused Pallas kernel: RKHS embed -> conv3x3+ReLU -> conv3x3 -> kernel smooth     #
# ----------------------------------------------------------------------------- #
def equiv_deepset_forward_pallas(XgT, Xg, X_context, HT, XtT, G, w1t, b1c, w2t, b2c,
                                 *, emb_sigma, out_sigma,
                                 normalise_embedding, normalise_output, dim):
    B, N, _ = X_context.shape
    M = XgT.shape[1]
    C_emb = HT.shape[1]
    hidden = w1t.shape[1]
    Cout = w2t.shape[1]
    T = XtT.shape[2]
    inv2s2_emb = 1.0 / (2.0 * emb_sigma * emb_sigma)
    inv2s2_out = 1.0 / (2.0 * out_sigma * out_sigma)

    def kernel(xgt_ref, xg_ref, xc_ref, ht_ref, xtt_ref, g_ref,
               w1_ref, b1_ref, w2_ref, b2_ref, out_ref):
        xgt = xgt_ref[...]                       # (dim, M)
        xc = xc_ref[0]                           # (N, dim)

        # ---- encode: discretised RKHS embedding, lane-dense (N, M) exp ----
        d2 = jnp.zeros((N, M), jnp.float32)
        for a in range(dim):                     # static tiny loop over coordinates
            diff = xc[:, a:a + 1] - xgt[a:a + 1, :]
            d2 = d2 + diff * diff
        k_emb = jnp.exp(-d2 * inv2s2_emb)                                        # (N, M)
        ygT = jnp.dot(ht_ref[0], k_emb, preferred_element_type=jnp.float32)      # (C_emb, M)
        if normalise_embedding:
            inv_dens = pl.reciprocal(ygT[0:1, :] + 1e-8, approx=True)            # (1, M)
            row = jax.lax.broadcasted_iota(jnp.int32, (C_emb, M), 0)
            ygT = jnp.where(row == 0, ygT, ygT * inv_dens)

        # ---- CNN: two 3x3 "same" convs as 9 shifted matmuls, channels-first ----
        h1 = jnp.zeros((hidden, M), jnp.float32)
        for s in range(9):
            xs = jnp.dot(ygT, g_ref[s], preferred_element_type=jnp.float32)      # (C_emb, M)
            h1 = h1 + jnp.dot(w1_ref[s], xs, preferred_element_type=jnp.float32)  # (hidden, M)
        h1 = jnp.maximum(h1 + b1_ref[...], 0.0)

        h2 = jnp.zeros((Cout, M), jnp.float32)
        for s in range(9):
            xs = jnp.dot(h1, g_ref[s], preferred_element_type=jnp.float32)       # (hidden, M)
            h2 = h2 + jnp.dot(w2_ref[s], xs, preferred_element_type=jnp.float32)  # (Cout, M)
        h2 = h2 + b2_ref[...]

        # ---- decode: kernel smoothing grid -> target points ----
        xg = xg_ref[...]                         # (M, dim)
        xtt = xtt_ref[0]                         # (dim, T)
        d2t = jnp.zeros((M, T), jnp.float32)
        for a in range(dim):
            diff = xg[:, a:a + 1] - xtt[a:a + 1, :]
            d2t = d2t + diff * diff
        kt = jnp.exp(-d2t * inv2s2_out)                                          # (M, T)
        num = jnp.dot(h2, kt, preferred_element_type=jnp.float32)                # (Cout, T)
        if normalise_output:
            den = jnp.dot(jnp.ones((1, M), jnp.float32), kt,
                          preferred_element_type=jnp.float32)                    # (1, T)
            num = num * pl.reciprocal(den, approx=True)
        out_ref[0] = num

    out_T = pl.pallas_call(
        kernel,
        out_shape=jax.ShapeDtypeStruct((B, Cout, T), jnp.float32),
        grid=(B,),
        in_specs=[
            pl.BlockSpec((dim, M), lambda b: (0, 0)),               # X_grid^T
            pl.BlockSpec((M, dim), lambda b: (0, 0)),               # X_grid
            pl.BlockSpec((1, N, dim), lambda b: (b, 0, 0)),         # X_context
            pl.BlockSpec((1, C_emb, N), lambda b: (b, 0, 0)),       # [1, Y_context]^T
            pl.BlockSpec((1, dim, T), lambda b: (b, 0, 0)),         # X_target^T
            pl.BlockSpec((9, M, M), lambda b: (0, 0, 0)),           # conv gather matrices
            pl.BlockSpec((9, hidden, C_emb), lambda b: (0, 0, 0)),  # W1 per-tap, transposed
            pl.BlockSpec((hidden, 1), lambda b: (0, 0)),            # b1
            pl.BlockSpec((9, Cout, hidden), lambda b: (0, 0, 0)),   # W2 per-tap, transposed
            pl.BlockSpec((Cout, 1), lambda b: (0, 0)),              # b2
        ],
        out_specs=pl.BlockSpec((1, Cout, T), lambda b: (b, 0, 0)),
        compiler_params=pltpu.CompilerParams(dimension_semantics=("parallel",)),
    )(XgT, Xg, X_context, HT, XtT, G, w1t, b1c, w2t, b2c)
    return jnp.swapaxes(out_T, 1, 2)             # (B, T, Cout)


# ----------------------------------------------------------------------------- #
# EquivDeepSet (dim == 2)                                                         #
# ----------------------------------------------------------------------------- #
class EquivDeepSetPallas:
    def __init__(self, grid_ranges, n_axes, dy, hidden, out_channels,
                 emb_sigma, out_sigma, normalise_embedding, normalise_output, key):
        assert len(n_axes) == 2, "implemented for dim = 2"
        self.dim = 2
        self.n_axes = tuple(int(n) for n in n_axes)
        self.emb_sigma = float(emb_sigma)
        self.out_sigma = float(out_sigma)
        self.normalise_embedding = normalise_embedding
        self.normalise_output = normalise_output

        axes = [jnp.linspace(r0, r1, n) for (r0, r1), n in zip(grid_ranges, n_axes)]
        mesh = jnp.meshgrid(*axes, indexing="ij")                 # m1 outer, m2 inner
        self.X_grid = jnp.stack(mesh, axis=-1).reshape(-1, 2).astype(jnp.float32)
        self.X_gridT = jnp.asarray(self.X_grid.T)                 # (dim, M)
        self.G = _build_conv_gather_matrices(*self.n_axes)        # (9, M, M)

        c_emb = dy + 1
        k1, k2, k3, k4 = jax.random.split(key, 4)
        self.W1 = (jax.random.normal(k1, (3, 3, c_emb, hidden), jnp.float32)
                   / jnp.sqrt(9.0 * c_emb))
        self.b1 = 0.01 * jax.random.normal(k2, (hidden,), jnp.float32)
        self.W2 = (jax.random.normal(k3, (3, 3, hidden, out_channels), jnp.float32)
                   / jnp.sqrt(9.0 * hidden))
        self.b2 = 0.01 * jax.random.normal(k4, (out_channels,), jnp.float32)
        # Per-tap transposed weights / column biases for the channels-first kernel layout.
        self.W1t = jnp.transpose(self.W1.reshape(9, c_emb, hidden), (0, 2, 1))        # (9, hidden, c_emb)
        self.b1c = self.b1.reshape(hidden, 1)
        self.W2t = jnp.transpose(self.W2.reshape(9, hidden, out_channels), (0, 2, 1))  # (9, out, hidden)
        self.b2c = self.b2.reshape(out_channels, 1)

    # Reference-only layout helpers ('b (m1 m2) d -> b d m2 m1', kept NHWC = (b, m2, m1, d)).
    def _stack_to_grid(self, Y):
        n1, n2 = self.n_axes
        B, M, C = Y.shape
        return Y.reshape(B, n1, n2, C).transpose(0, 2, 1, 3)

    def _grid_to_stack(self, img):
        B, H, W, C = img.shape                    # H = m2, W = m1
        return img.transpose(0, 2, 1, 3).reshape(B, W * H, C)

    def __call__(self, X_context, Y_context, X_target):
        B, N, _ = X_context.shape
        # Tiny layout glue (density channel + point-cloud transposes) stays in XLA;
        # all heavy lifting happens inside the single fused Pallas kernel.
        H = jnp.concatenate([jnp.ones((B, N, 1), Y_context.dtype), Y_context], axis=-1)
        HT = jnp.swapaxes(H, 1, 2)                # (B, dy+1, N)
        XtT = jnp.swapaxes(X_target, 1, 2)        # (B, dim, T)
        return equiv_deepset_forward_pallas(
            self.X_gridT, self.X_grid, X_context, HT, XtT, self.G,
            self.W1t, self.b1c, self.W2t, self.b2c,
            emb_sigma=self.emb_sigma, out_sigma=self.out_sigma,
            normalise_embedding=self.normalise_embedding,
            normalise_output=self.normalise_output, dim=self.dim)


# ----------------------------------------------------------------------------- #
# Pure-JAX reference for a sanity check                                           #
# ----------------------------------------------------------------------------- #
def ref_forward(model, Xc, Yc, Xt):
    Xg = model.X_grid
    d2 = jnp.sum((Xg[None, :, None, :] - Xc[:, None, :, :]) ** 2, axis=-1)        # (B,M,N)
    K = jnp.exp(-d2 / (2.0 * model.emb_sigma ** 2))
    H = jnp.concatenate([jnp.ones(Yc.shape[:-1] + (1,), Yc.dtype), Yc], axis=-1)
    Yg = jnp.einsum("bmn,bnc->bmc", K, H, precision="highest")
    if model.normalise_embedding:
        dens = Yg[..., :1]
        Yg = jnp.concatenate([dens, Yg[..., 1:] / (dens + 1e-8)], axis=-1)
    img = model._stack_to_grid(Yg)
    dn = ("NHWC", "HWIO", "NHWC")
    img = jax.nn.relu(jax.lax.conv_general_dilated(
        img, model.W1, (1, 1), "SAME", dimension_numbers=dn,
        precision=jax.lax.Precision.HIGHEST) + model.b1)
    img = jax.lax.conv_general_dilated(
        img, model.W2, (1, 1), "SAME", dimension_numbers=dn,
        precision=jax.lax.Precision.HIGHEST) + model.b2
    Yg2 = model._grid_to_stack(img)
    d2t = jnp.sum((Xt[:, :, None, :] - Xg[None, None, :, :]) ** 2, axis=-1)       # (B,T,M)
    Kt = jnp.exp(-d2t / (2.0 * model.out_sigma ** 2))
    Y = jnp.einsum("btm,bmc->btc", Kt, Yg2, precision="highest")
    if model.normalise_output:
        Y = Y / jnp.sum(Kt, axis=-1, keepdims=True)
    return Y


if __name__ == "__main__":
    key = jax.random.PRNGKey(0)
    kmodel, kxc, kyc, kxt = jax.random.split(key, 4)

    B, N, T, dy = 2, 8, 12, 2
    model = EquivDeepSetPallas(
        grid_ranges=[(-3.0, 3.0), (-3.0, 3.0)], n_axes=(16, 16), dy=dy,
        hidden=8, out_channels=4, emb_sigma=0.5, out_sigma=0.5,
        normalise_embedding=True, normalise_output=True, key=kmodel)

    X_context = jax.random.uniform(kxc, (B, N, 2), jnp.float32, minval=-2.5, maxval=2.5)
    Y_context = jax.random.normal(kyc, (B, N, dy), jnp.float32)
    X_target = jax.random.uniform(kxt, (B, T, 2), jnp.float32, minval=-2.5, maxval=2.5)

    out = jax.block_until_ready(model(X_context, Y_context, X_target))
    ref = jax.block_until_ready(ref_forward(model, X_context, Y_context, X_target))

    assert out.shape == (B, T, 4), out.shape
    rel_err = float(jnp.max(jnp.abs(out - ref)) / (jnp.max(jnp.abs(ref)) + 1e-8))
    assert np.isfinite(rel_err) and rel_err < 5e-2, f"mismatch vs reference: {rel_err}"
    print("KERNEL_OK")
</pallas_src>

<mosaic_0001>
module attributes {stable_mosaic.version = 11 : i64} {
  func.func @kernel(%arg0: i32, %arg1: memref<2x256xf32, #tpu.memory_space<vmem>>, %arg2: memref<256x2xf32, #tpu.memory_space<vmem>>, %arg3: memref<1x8x2xf32, #tpu.memory_space<vmem>>, %arg4: memref<1x3x8xf32, #tpu.memory_space<vmem>>, %arg5: memref<1x2x12xf32, #tpu.memory_space<vmem>>, %arg6: memref<9x256x256xf32, #tpu.memory_space<vmem>>, %arg7: memref<9x8x3xf32, #tpu.memory_space<vmem>>, %arg8: memref<8x1xf32, #tpu.memory_space<vmem>>, %arg9: memref<9x4x8xf32, #tpu.memory_space<vmem>>, %arg10: memref<4x1xf32, #tpu.memory_space<vmem>>, %arg11: memref<1x4x12xf32, #tpu.memory_space<vmem>>) attributes {dimension_semantics = [#tpu.dimension_semantics<parallel>], iteration_bounds = array<i64: 2>, scalar_prefetch = 0 : i64, scratch_operands = 0 : i64, tpu.core_type = #tpu.core_type<tc>, window_params = [{pipeline_mode = #tpu.pipeline_mode<synchronous>, transform_indices = @transform_0, window_bounds = array<i64: 2, 256>}, {pipeline_mode = #tpu.pipeline_mode<synchronous>, transform_indices = @transform_1, window_bounds = array<i64: 256, 2>}, {transform_indices = @transform_2, window_bounds = array<i64: 1, 8, 2>}, {transform_indices = @transform_3, window_bounds = array<i64: 1, 3, 8>}, {transform_indices = @transform_4, window_bounds = array<i64: 1, 2, 12>}, {pipeline_mode = #tpu.pipeline_mode<synchronous>, transform_indices = @transform_5, window_bounds = array<i64: 9, 256, 256>}, {pipeline_mode = #tpu.pipeline_mode<synchronous>, transform_indices = @transform_6, window_bounds = array<i64: 9, 8, 3>}, {pipeline_mode = #tpu.pipeline_mode<synchronous>, transform_indices = @transform_7, window_bounds = array<i64: 8, 1>}, {pipeline_mode = #tpu.pipeline_mode<synchronous>, transform_indices = @transform_8, window_bounds = array<i64: 9, 4, 8>}, {pipeline_mode = #tpu.pipeline_mode<synchronous>, transform_indices = @transform_9, window_bounds = array<i64: 4, 1>}, {transform_indices = @transform_10, window_bounds = array<i64: 1, 4, 12>}]} {
    %c0 = arith.constant 0 : index
    %c0_0 = arith.constant 0 : index
    %0 = vector.load %arg1[%c0, %c0_0] : memref<2x256xf32, #tpu.memory_space<vmem>>, vector<2x256xf32>
    %c0_1 = arith.constant 0 : index
    %c0_2 = arith.constant 0 : index
    %c0_3 = arith.constant 0 : index
    %1 = vector.load %arg3[%c0_1, %c0_2, %c0_3] : memref<1x8x2xf32, #tpu.memory_space<vmem>>, vector<1x8x2xf32>
    %2 = vector.shape_cast %1 : vector<1x8x2xf32> to vector<8x2xf32>
    %cst = arith.constant 0.000000e+00 : f32
    %3 = vector.broadcast %cst : f32 to vector<8x256xf32>
    %4 = vector.extract_strided_slice %2 {offsets = [0, 0], sizes = [8, 1], strides = [1, 1]} : vector<8x2xf32> to vector<8x1xf32>
    %5 = vector.extract_strided_slice %0 {offsets = [0, 0], sizes = [1, 256], strides = [1, 1]} : vector<2x256xf32> to vector<1x256xf32>
    %6 = vector.broadcast %4 : vector<8x1xf32> to vector<8x256xf32>
    %7 = vector.broadcast %5 : vector<1x256xf32> to vector<8x256xf32>
    %8 = arith.subf %6, %7 : vector<8x256xf32>
    %9 = arith.mulf %8, %8 : vector<8x256xf32>
    %10 = arith.addf %3, %9 : vector<8x256xf32>
    %11 = vector.extract_strided_slice %2 {offsets = [0, 1], sizes = [8, 1], strides = [1, 1]} : vector<8x2xf32> to vector<8x1xf32>
    %12 = vector.extract_strided_slice %0 {offsets = [1, 0], sizes = [1, 256], strides = [1, 1]} : vector<2x256xf32> to vector<1x256xf32>
    %13 = vector.broadcast %11 : vector<8x1xf32> to vector<8x256xf32>
    %14 = vector.broadcast %12 : vector<1x256xf32> to vector<8x256xf32>
    %15 = arith.subf %13, %14 : vector<8x256xf32>
    %16 = arith.mulf %15, %15 : vector<8x256xf32>
    %17 = arith.addf %10, %16 : vector<8x256xf32>
    %cst_4 = arith.constant 0.000000e+00 : f32
    %18 = vector.broadcast %cst_4 : f32 to vector<8x256xf32>
    %19 = arith.subf %18, %17 : vector<8x256xf32>
    %cst_5 = arith.constant 2.000000e+00 : f32
    %20 = vector.broadcast %cst_5 : f32 to vector<8x256xf32>
    %21 = arith.mulf %19, %20 : vector<8x256xf32>
    %22 = math.exp %21 : vector<8x256xf32>
    %c0_6 = arith.constant 0 : index
    %c0_7 = arith.constant 0 : index
    %c0_8 = arith.constant 0 : index
    %23 = vector.load %arg4[%c0_6, %c0_7, %c0_8] : memref<1x3x8xf32, #tpu.memory_space<vmem>>, vector<1x3x8xf32>
    %24 = vector.shape_cast %23 : vector<1x3x8xf32> to vector<3x8xf32>
    %cst_9 = arith.constant dense<0.000000e+00> : vector<3x256xf32>
    %25 = tpu.matmul %24, %22, %cst_9 {dimension_numbers = #tpu.dot_dimension_numbers<[1], [0], [0], [1], [0, 0, 1, 1], [], []>} : vector<3x8xf32>, vector<8x256xf32>, vector<3x256xf32> -> vector<3x256xf32>
    %26 = vector.extract_strided_slice %25 {offsets = [0, 0], sizes = [1, 256], strides = [1, 1]} : vector<3x256xf32> to vector<1x256xf32>
    %cst_10 = arith.constant 9.99999993E-9 : f32
    %27 = vector.broadcast %cst_10 : f32 to vector<1x256xf32>
    %28 = arith.addf %26, %27 : vector<1x256xf32>
    %29 = tpu.reciprocal %28 {approx = true} : vector<1x256xf32> -> vector<1x256xf32>
    %30 = tpu.iota {dimensions = array<i32: 0>} : vector<3x256xi32>
    %c0_i32 = arith.constant 0 : i32
    %31 = vector.broadcast %c0_i32 : i32 to vector<3x256xi32>
    %32 = arith.cmpi eq, %30, %31 : vector<3x256xi32>
    %33 = vector.broadcast %29 : vector<1x256xf32> to vector<3x256xf32>
    %34 = arith.mulf %25, %33 : vector<3x256xf32>
    %35 = arith.select %32, %25, %34 : vector<3x256xi1>, vector<3x256xf32>
    %cst_11 = arith.constant 0.000000e+00 : f32
    %36 = vector.broadcast %cst_11 : f32 to vector<8x256xf32>
    %c0_12 = arith.constant 0 : index
    %c0_13 = arith.constant 0 : index
    %c0_14 = arith.constant 0 : index
    %37 = vector.load %arg6[%c0_12, %c0_13, %c0_14] : memref<9x256x256xf32, #tpu.memory_space<vmem>>, vector<1x256x256xf32>
    %38 = vector.shape_cast %37 : vector<1x256x256xf32> to vector<256x256xf32>
    %cst_15 = arith.constant dense<0.000000e+00> : vector<3x256xf32>
    %39 = tpu.matmul %35, %38, %cst_15 {dimension_numbers = #tpu.dot_dimension_numbers<[1], [0], [0], [1], [0, 0, 1, 1], [], []>} : vector<3x256xf32>, vector<256x256xf32>, vector<3x256xf32> -> vector<3x256xf32>
    %c0_16 = arith.constant 0 : index
    %c0_17 = arith.constant 0 : index
    %c0_18 = arith.constant 0 : index
    %40 = vector.load %arg7[%c0_16, %c0_17, %c0_18] : memref<9x8x3xf32, #tpu.memory_space<vmem>>, vector<1x8x3xf32>
    %41 = vector.shape_cast %40 : vector<1x8x3xf32> to vector<8x3xf32>
    %cst_19 = arith.constant dense<0.000000e+00> : vector<8x256xf32>
    %42 = tpu.matmul %41, %39, %cst_19 {dimension_numbers = #tpu.dot_dimension_numbers<[1], [0], [0], [1], [0, 0, 1, 1], [], []>} : vector<8x3xf32>, vector<3x256xf32>, vector<8x256xf32> -> vector<8x256xf32>
    %43 = arith.addf %36, %42 : vector<8x256xf32>
    %c1 = arith.constant 1 : index
    %c0_20 = arith.constant 0 : index
    %c0_21 = arith.constant 0 : index
    %44 = vector.load %arg6[%c1, %c0_20, %c0_21] : memref<9x256x256xf32, #tpu.memory_space<vmem>>, vector<1x256x256xf32>
    %45 = vector.shape_cast %44 : vector<1x256x256xf32> to vector<256x256xf32>
    %cst_22 = arith.constant dense<0.000000e+00> : vector<3x256xf32>
    %46 = tpu.matmul %35, %45, %cst_22 {dimension_numbers = #tpu.dot_dimension_numbers<[1], [0], [0], [1], [0, 0, 1, 1], [], []>} : vector<3x256xf32>, vector<256x256xf32>, vector<3x256xf32> -> vector<3x256xf32>
    %c1_23 = arith.constant 1 : index
    %c0_24 = arith.constant 0 : index
    %c0_25 = arith.constant 0 : index
    %47 = vector.load %arg7[%c1_23, %c0_24, %c0_25] : memref<9x8x3xf32, #tpu.memory_space<vmem>>, vector<1x8x3xf32>
    %48 = vector.shape_cast %47 : vector<1x8x3xf32> to vector<8x3xf32>
    %cst_26 = arith.constant dense<0.000000e+00> : vector<8x256xf32>
    %49 = tpu.matmul %48, %46, %cst_26 {dimension_numbers = #tpu.dot_dimension_numbers<[1], [0], [0], [1], [0, 0, 1, 1], [], []>} : vector<8x3xf32>, vector<3x256xf32>, vector<8x256xf32> -> vector<8x256xf32>
    %50 = arith.addf %43, %49 : vector<8x256xf32>
    %c2 = arith.constant 2 : index
    %c0_27 = arith.constant 0 : index
    %c0_28 = arith.constant 0 : index
    %51 = vector.load %arg6[%c2, %c0_27, %c0_28] : memref<9x256x256xf32, #tpu.memory_space<vmem>>, vector<1x256x256xf32>
    %52 = vector.shape_cast %51 : vector<1x256x256xf32> to vector<256x256xf32>
    %cst_29 = arith.constant dense<0.000000e+00> : vector<3x256xf32>
    %53 = tpu.matmul %35, %52, %cst_29 {dimension_numbers = #tpu.dot_dimension_numbers<[1], [0], [0], [1], [0, 0, 1, 1], [], []>} : vector<3x256xf32>, vector<256x256xf32>, vector<3x256xf32> -> vector<3x256xf32>
    %c2_30 = arith.constant 2 : index
    %c0_31 = arith.constant 0 : index
    %c0_32 = arith.constant 0 : index
    %54 = vector.load %arg7[%c2_30, %c0_31, %c0_32] : memref<9x8x3xf32, #tpu.memory_space<vmem>>, vector<1x8x3xf32>
    %55 = vector.shape_cast %54 : vector<1x8x3xf32> to vector<8x3xf32>
    %cst_33 = arith.constant dense<0.000000e+00> : vector<8x256xf32>
    %56 = tpu.matmul %55, %53, %cst_33 {dimension_numbers = #tpu.dot_dimension_numbers<[1], [0], [0], [1], [0, 0, 1, 1], [], []>} : vector<8x3xf32>, vector<3x256xf32>, vector<8x256xf32> -> vector<8x256xf32>
    %57 = arith.addf %50, %56 : vector<8x256xf32>
    %c3 = arith.constant 3 : index
    %c0_34 = arith.constant 0 : index
    %c0_35 = arith.constant 0 : index
    %58 = vector.load %arg6[%c3, %c0_34, %c0_35] : memref<9x256x256xf32, #tpu.memory_space<vmem>>, vector<1x256x256xf32>
    %59 = vector.shape_cast %58 : vector<1x256x256xf32> to vector<256x256xf32>
    %cst_36 = arith.constant dense<0.000000e+00> : vector<3x256xf32>
    %60 = tpu.matmul %35, %59, %cst_36 {dimension_numbers = #tpu.dot_dimension_numbers<[1], [0], [0], [1], [0, 0, 1, 1], [], []>} : vector<3x256xf32>, vector<256x256xf32>, vector<3x256xf32> -> vector<3x256xf32>
    %c3_37 = arith.constant 3 : index
    %c0_38 = arith.constant 0 : index
    %c0_39 = arith.constant 0 : index
    %61 = vector.load %arg7[%c3_37, %c0_38, %c0_39] : memref<9x8x3xf32, #tpu.memory_space<vmem>>, vector<1x8x3xf32>
    %62 = vector.shape_cast %61 : vector<1x8x3xf32> to vector<8x3xf32>
    %cst_40 = arith.constant dense<0.000000e+00> : vector<8x256xf32>
    %63 = tpu.matmul %62, %60, %cst_40 {dimension_numbers = #tpu.dot_dimension_numbers<[1], [0], [0], [1], [0, 0, 1, 1], [], []>} : vector<8x3xf32>, vector<3x256xf32>, vector<8x256xf32> -> vector<8x256xf32>
    %64 = arith.addf %57, %63 : vector<8x256xf32>
    %c4 = arith.constant 4 : index
    %c0_41 = arith.constant 0 : index
    %c0_42 = arith.constant 0 : index
    %65 = vector.load %arg6[%c4, %c0_41, %c0_42] : memref<9x256x256xf32, #tpu.memory_space<vmem>>, vector<1x256x256xf32>
    %66 = vector.shape_cast %65 : vector<1x256x256xf32> to vector<256x256xf32>
    %cst_43 = arith.constant dense<0.000000e+00> : vector<3x256xf32>
    %67 = tpu.matmul %35, %66, %cst_43 {dimension_numbers = #tpu.dot_dimension_numbers<[1], [0], [0], [1], [0, 0, 1, 1], [], []>} : vector<3x256xf32>, vector<256x256xf32>, vector<3x256xf32> -> vector<3x256xf32>
    %c4_44 = arith.constant 4 : index
    %c0_45 = arith.constant 0 : index
    %c0_46 = arith.constant 0 : index
    %68 = vector.load %arg7[%c4_44, %c0_45, %c0_46] : memref<9x8x3xf32, #tpu.memory_space<vmem>>, vector<1x8x3xf32>
    %69 = vector.shape_cast %68 : vector<1x8x3xf32> to vector<8x3xf32>
    %cst_47 = arith.constant dense<0.000000e+00> : vector<8x256xf32>
    %70 = tpu.matmul %69, %67, %cst_47 {dimension_numbers = #tpu.dot_dimension_numbers<[1], [0], [0], [1], [0, 0, 1, 1], [], []>} : vector<8x3xf32>, vector<3x256xf32>, vector<8x256xf32> -> vector<8x256xf32>
    %71 = arith.addf %64, %70 : vector<8x256xf32>
    %c5 = arith.constant 5 : index
    %c0_48 = arith.constant 0 : index
    %c0_49 = arith.constant 0 : index
    %72 = vector.load %arg6[%c5, %c0_48, %c0_49] : memref<9x256x256xf32, #tpu.memory_space<vmem>>, vector<1x256x256xf32>
    %73 = vector.shape_cast %72 : vector<1x256x256xf32> to vector<256x256xf32>
    %cst_50 = arith.constant dense<0.000000e+00> : vector<3x256xf32>
    %74 = tpu.matmul %35, %73, %cst_50 {dimension_numbers = #tpu.dot_dimension_numbers<[1], [0], [0], [1], [0, 0, 1, 1], [], []>} : vector<3x256xf32>, vector<256x256xf32>, vector<3x256xf32> -> vector<3x256xf32>
    %c5_51 = arith.constant 5 : index
    %c0_52 = arith.constant 0 : index
    %c0_53 = arith.constant 0 : index
    %75 = vector.load %arg7[%c5_51, %c0_52, %c0_53] : memref<9x8x3xf32, #tpu.memory_space<vmem>>, vector<1x8x3xf32>
    %76 = vector.shape_cast %75 : vector<1x8x3xf32> to vector<8x3xf32>
    %cst_54 = arith.constant dense<0.000000e+00> : vector<8x256xf32>
    %77 = tpu.matmul %76, %74, %cst_54 {dimension_numbers = #tpu.dot_dimension_numbers<[1], [0], [0], [1], [0, 0, 1, 1], [], []>} : vector<8x3xf32>, vector<3x256xf32>, vector<8x256xf32> -> vector<8x256xf32>
    %78 = arith.addf %71, %77 : vector<8x256xf32>
    %c6 = arith.constant 6 : index
    %c0_55 = arith.constant 0 : index
    %c0_56 = arith.constant 0 : index
    %79 = vector.load %arg6[%c6, %c0_55, %c0_56] : memref<9x256x256xf32, #tpu.memory_space<vmem>>, vector<1x256x256xf32>
    %80 = vector.shape_cast %79 : vector<1x256x256xf32> to vector<256x256xf32>
    %cst_57 = arith.constant dense<0.000000e+00> : vector<3x256xf32>
    %81 = tpu.matmul %35, %80, %cst_57 {dimension_numbers = #tpu.dot_dimension_numbers<[1], [0], [0], [1], [0, 0, 1, 1], [], []>} : vector<3x256xf32>, vector<256x256xf32>, vector<3x256xf32> -> vector<3x256xf32>
    %c6_58 = arith.constant 6 : index
    %c0_59 = arith.constant 0 : index
    %c0_60 = arith.constant 0 : index
    %82 = vector.load %arg7[%c6_58, %c0_59, %c0_60] : memref<9x8x3xf32, #tpu.memory_space<vmem>>, vector<1x8x3xf32>
    %83 = vector.shape_cast %82 : vector<1x8x3xf32> to vector<8x3xf32>
    %cst_61 = arith.constant dense<0.000000e+00> : vector<8x256xf32>
    %84 = tpu.matmul %83, %81, %cst_61 {dimension_numbers = #tpu.dot_dimension_numbers<[1], [0], [0], [1], [0, 0, 1, 1], [], []>} : vector<8x3xf32>, vector<3x256xf32>, vector<8x256xf32> -> vector<8x256xf32>
    %85 = arith.addf %78, %84 : vector<8x256xf32>
    %c7 = arith.constant 7 : index
    %c0_62 = arith.constant 0 : index
    %c0_63 = arith.constant 0 : index
    %86 = vector.load %arg6[%c7, %c0_62, %c0_63] : memref<9x256x256xf32, #tpu.memory_space<vmem>>, vector<1x256x256xf32>
    %87 = vector.shape_cast %86 : vector<1x256x256xf32> to vector<256x256xf32>
    %cst_64 = arith.constant dense<0.000000e+00> : vector<3x256xf32>
    %88 = tpu.matmul %35, %87, %cst_64 {dimension_numbers = #tpu.dot_dimension_numbers<[1], [0], [0], [1], [0, 0, 1, 1], [], []>} : vector<3x256xf32>, vector<256x256xf32>, vector<3x256xf32> -> vector<3x256xf32>
    %c7_65 = arith.constant 7 : index
    %c0_66 = arith.constant 0 : index
    %c0_67 = arith.constant 0 : index
    %89 = vector.load %arg7[%c7_65, %c0_66, %c0_67] : memref<9x8x3xf32, #tpu.memory_space<vmem>>, vector<1x8x3xf32>
    %90 = vector.shape_cast %89 : vector<1x8x3xf32> to vector<8x3xf32>
    %cst_68 = arith.constant dense<0.000000e+00> : vector<8x256xf32>
    %91 = tpu.matmul %90, %88, %cst_68 {dimension_numbers = #tpu.dot_dimension_numbers<[1], [0], [0], [1], [0, 0, 1, 1], [], []>} : vector<8x3xf32>, vector<3x256xf32>, vector<8x256xf32> -> vector<8x256xf32>
    %92 = arith.addf %85, %91 : vector<8x256xf32>
    %c8 = arith.constant 8 : index
    %c0_69 = arith.constant 0 : index
    %c0_70 = arith.constant 0 : index
    %93 = vector.load %arg6[%c8, %c0_69, %c0_70] : memref<9x256x256xf32, #tpu.memory_space<vmem>>, vector<1x256x256xf32>
    %94 = vector.shape_cast %93 : vector<1x256x256xf32> to vector<256x256xf32>
    %cst_71 = arith.constant dense<0.000000e+00> : vector<3x256xf32>
    %95 = tpu.matmul %35, %94, %cst_71 {dimension_numbers = #tpu.dot_dimension_numbers<[1], [0], [0], [1], [0, 0, 1, 1], [], []>} : vector<3x256xf32>, vector<256x256xf32>, vector<3x256xf32> -> vector<3x256xf32>
    %c8_72 = arith.constant 8 : index
    %c0_73 = arith.constant 0 : index
    %c0_74 = arith.constant 0 : index
    %96 = vector.load %arg7[%c8_72, %c0_73, %c0_74] : memref<9x8x3xf32, #tpu.memory_space<vmem>>, vector<1x8x3xf32>
    %97 = vector.shape_cast %96 : vector<1x8x3xf32> to vector<8x3xf32>
    %cst_75 = arith.constant dense<0.000000e+00> : vector<8x256xf32>
    %98 = tpu.matmul %97, %95, %cst_75 {dimension_numbers = #tpu.dot_dimension_numbers<[1], [0], [0], [1], [0, 0, 1, 1], [], []>} : vector<8x3xf32>, vector<3x256xf32>, vector<8x256xf32> -> vector<8x256xf32>
    %99 = arith.addf %92, %98 : vector<8x256xf32>
    %c0_76 = arith.constant 0 : index
    %c0_77 = arith.constant 0 : index
    %100 = vector.load %arg8[%c0_76, %c0_77] : memref<8x1xf32, #tpu.memory_space<vmem>>, vector<8x1xf32>
    %101 = vector.broadcast %100 : vector<8x1xf32> to vector<8x256xf32>
    %102 = arith.addf %99, %101 : vector<8x256xf32>
    %cst_78 = arith.constant 0.000000e+00 : f32
    %103 = vector.broadcast %cst_78 : f32 to vector<8x256xf32>
    %104 = arith.maximumf %102, %103 : vector<8x256xf32>
    %cst_79 = arith.constant 0.000000e+00 : f32
    %105 = vector.broadcast %cst_79 : f32 to vector<4x256xf32>
    %c0_80 = arith.constant 0 : index
    %c0_81 = arith.constant 0 : index
    %c0_82 = arith.constant 0 : index
    %106 = vector.load %arg6[%c0_80, %c0_81, %c0_82] : memref<9x256x256xf32, #tpu.memory_space<vmem>>, vector<1x256x256xf32>
    %107 = vector.shape_cast %106 : vector<1x256x256xf32> to vector<256x256xf32>
    %cst_83 = arith.constant dense<0.000000e+00> : vector<8x256xf32>
    %108 = tpu.matmul %104, %107, %cst_83 {dimension_numbers = #tpu.dot_dimension_numbers<[1], [0], [0], [1], [0, 0, 1, 1], [], []>} : vector<8x256xf32>, vector<256x256xf32>, vector<8x256xf32> -> vector<8x256xf32>
    %c0_84 = arith.constant 0 : index
    %c0_85 = arith.constant 0 : index
    %c0_86 = arith.constant 0 : index
    %109 = vector.load %arg9[%c0_84, %c0_85, %c0_86] : memref<9x4x8xf32, #tpu.memory_space<vmem>>, vector<1x4x8xf32>
    %110 = vector.shape_cast %109 : vector<1x4x8xf32> to vector<4x8xf32>
    %cst_87 = arith.constant dense<0.000000e+00> : vector<4x256xf32>
    %111 = tpu.matmul %110, %108, %cst_87 {dimension_numbers = #tpu.dot_dimension_numbers<[1], [0], [0], [1], [0, 0, 1, 1], [], []>} : vector<4x8xf32>, vector<8x256xf32>, vector<4x256xf32> -> vector<4x256xf32>
    %112 = arith.addf %105, %111 : vector<4x256xf32>
    %c1_88 = arith.constant 1 : index
    %c0_89 = arith.constant 0 : index
    %c0_90 = arith.constant 0 : index
    %113 = vector.load %arg6[%c1_88, %c0_89, %c0_90] : memref<9x256x256xf32, #tpu.memory_space<vmem>>, vector<1x256x256xf32>
    %114 = vector.shape_cast %113 : vector<1x256x256xf32> to vector<256x256xf32>
    %cst_91 = arith.constant dense<0.000000e+00> : vector<8x256xf32>
    %115 = tpu.matmul %104, %114, %cst_91 {dimension_numbers = #tpu.dot_dimension_numbers<[1], [0], [0], [1], [0, 0, 1, 1], [], []>} : vector<8x256xf32>, vector<256x256xf32>, vector<8x256xf32> -> vector<8x256xf32>
    %c1_92 = arith.constant 1 : index
    %c0_93 = arith.constant 0 : index
    %c0_94 = arith.constant 0 : index
    %116 = vector.load %arg9[%c1_92, %c0_93, %c0_94] : memref<9x4x8xf32, #tpu.memory_space<vmem>>, vector<1x4x8xf32>
    %117 = vector.shape_cast %116 : vector<1x4x8xf32> to vector<4x8xf32>
    %cst_95 = arith.constant dense<0.000000e+00> : vector<4x256xf32>
    %118 = tpu.matmul %117, %115, %cst_95 {dimension_numbers = #tpu.dot_dimension_numbers<[1], [0], [0], [1], [0, 0, 1, 1], [], []>} : vector<4x8xf32>, vector<8x256xf32>, vector<4x256xf32> -> vector<4x256xf32>
    %119 = arith.addf %112, %118 : vector<4x256xf32>
    %c2_96 = arith.constant 2 : index
    %c0_97 = arith.constant 0 : index
    %c0_98 = arith.constant 0 : index
    %120 = vector.load %arg6[%c2_96, %c0_97, %c0_98] : memref<9x256x256xf32, #tpu.memory_space<vmem>>, vector<1x256x256xf32>
    %121 = vector.shape_cast %120 : vector<1x256x256xf32> to vector<256x256xf32>
    %cst_99 = arith.constant dense<0.000000e+00> : vector<8x256xf32>
    %122 = tpu.matmul %104, %121, %cst_99 {dimension_numbers = #tpu.dot_dimension_numbers<[1], [0], [0], [1], [0, 0, 1, 1], [], []>} : vector<8x256xf32>, vector<256x256xf32>, vector<8x256xf32> -> vector<8x256xf32>
    %c2_100 = arith.constant 2 : index
    %c0_101 = arith.constant 0 : index
    %c0_102 = arith.constant 0 : index
    %123 = vector.load %arg9[%c2_100, %c0_101, %c0_102] : memref<9x4x8xf32, #tpu.memory_space<vmem>>, vector<1x4x8xf32>
    %124 = vector.shape_cast %123 : vector<1x4x8xf32> to vector<4x8xf32>
    %cst_103 = arith.constant dense<0.000000e+00> : vector<4x256xf32>
    %125 = tpu.matmul %124, %122, %cst_103 {dimension_numbers = #tpu.dot_dimension_numbers<[1], [0], [0], [1], [0, 0, 1, 1], [], []>} : vector<4x8xf32>, vector<8x256xf32>, vector<4x256xf32> -> vector<4x256xf32>
    %126 = arith.addf %119, %125 : vector<4x256xf32>
    %c3_104 = arith.constant 3 : index
    %c0_105 = arith.constant 0 : index
    %c0_106 = arith.constant 0 : index
    %127 = vector.load %arg6[%c3_104, %c0_105, %c0_106] : memref<9x256x256xf32, #tpu.memory_space<vmem>>, vector<1x256x256xf32>
    %128 = vector.shape_cast %127 : vector<1x256x256xf32> to vector<256x256xf32>
    %cst_107 = arith.constant dense<0.000000e+00> : vector<8x256xf32>
    %129 = tpu.matmul %104, %128, %cst_107 {dimension_numbers = #tpu.dot_dimension_numbers<[1], [0], [0], [1], [0, 0, 1, 1], [], []>} : vector<8x256xf32>, vector<256x256xf32>, vector<8x256xf32> -> vector<8x256xf32>
    %c3_108 = arith.constant 3 : index
    %c0_109 = arith.constant 0 : index
    %c0_110 = arith.constant 0 : index
    %130 = vector.load %arg9[%c3_108, %c0_109, %c0_110] : memref<9x4x8xf32, #tpu.memory_space<vmem>>, vector<1x4x8xf32>
    %131 = vector.shape_cast %130 : vector<1x4x8xf32> to vector<4x8xf32>
    %cst_111 = arith.constant dense<0.000000e+00> : vector<4x256xf32>
    %132 = tpu.matmul %131, %129, %cst_111 {dimension_numbers = #tpu.dot_dimension_numbers<[1], [0], [0], [1], [0, 0, 1, 1], [], []>} : vector<4x8xf32>, vector<8x256xf32>, vector<4x256xf32> -> vector<4x256xf32>
    %133 = arith.addf %126, %132 : vector<4x256xf32>
    %c4_112 = arith.constant 4 : index
    %c0_113 = arith.constant 0 : index
    %c0_114 = arith.constant 0 : index
    %134 = vector.load %arg6[%c4_112, %c0_113, %c0_114] : memref<9x256x256xf32, #tpu.memory_space<vmem>>, vector<1x256x256xf32>
    %135 = vector.shape_cast %134 : vector<1x256x256xf32> to vector<256x256xf32>
    %cst_115 = arith.constant dense<0.000000e+00> : vector<8x256xf32>
    %136 = tpu.matmul %104, %135, %cst_115 {dimension_numbers = #tpu.dot_dimension_numbers<[1], [0], [0], [1], [0, 0, 1, 1], [], []>} : vector<8x256xf32>, vector<256x256xf32>, vector<8x256xf32> -> vector<8x256xf32>
    %c4_116 = arith.constant 4 : index
    %c0_117 = arith.constant 0 : index
    %c0_118 = arith.constant 0 : index
    %137 = vector.load %arg9[%c4_116, %c0_117, %c0_118] : memref<9x4x8xf32, #tpu.memory_space<vmem>>, vector<1x4x8xf32>
    %138 = vector.shape_cast %137 : vector<1x4x8xf32> to vector<4x8xf32>
    %cst_119 = arith.constant dense<0.000000e+00> : vector<4x256xf32>
    %139 = tpu.matmul %138, %136, %cst_119 {dimension_numbers = #tpu.dot_dimension_numbers<[1], [0], [0], [1], [0, 0, 1, 1], [], []>} : vector<4x8xf32>, vector<8x256xf32>, vector<4x256xf32> -> vector<4x256xf32>
    %140 = arith.addf %133, %139 : vector<4x256xf32>
    %c5_120 = arith.constant 5 : index
    %c0_121 = arith.constant 0 : index
    %c0_122 = arith.constant 0 : index
    %141 = vector.load %arg6[%c5_120, %c0_121, %c0_122] : memref<9x256x256xf32, #tpu.memory_space<vmem>>, vector<1x256x256xf32>
    %142 = vector.shape_cast %141 : vector<1x256x256xf32> to vector<256x256xf32>
    %cst_123 = arith.constant dense<0.000000e+00> : vector<8x256xf32>
    %143 = tpu.matmul %104, %142, %cst_123 {dimension_numbers = #tpu.dot_dimension_numbers<[1], [0], [0], [1], [0, 0, 1, 1], [], []>} : vector<8x256xf32>, vector<256x256xf32>, vector<8x256xf32> -> vector<8x256xf32>
    %c5_124 = arith.constant 5 : index
    %c0_125 = arith.constant 0 : index
    %c0_126 = arith.constant 0 : index
    %144 = vector.load %arg9[%c5_124, %c0_125, %c0_126] : memref<9x4x8xf32, #tpu.memory_space<vmem>>, vector<1x4x8xf32>
    %145 = vector.shape_cast %144 : vector<1x4x8xf32> to vector<4x8xf32>
    %cst_127 = arith.constant dense<0.000000e+00> : vector<4x256xf32>
    %146 = tpu.matmul %145, %143, %cst_127 {dimension_numbers = #tpu.dot_dimension_numbers<[1], [0], [0], [1], [0, 0, 1, 1], [], []>} : vector<4x8xf32>, vector<8x256xf32>, vector<4x256xf32> -> vector<4x256xf32>
    %147 = arith.addf %140, %146 : vector<4x256xf32>
    %c6_128 = arith.constant 6 : index
    %c0_129 = arith.constant 0 : index
    %c0_130 = arith.constant 0 : index
    %148 = vector.load %arg6[%c6_128, %c0_129, %c0_130] : memref<9x256x256xf32, #tpu.memory_space<vmem>>, vector<1x256x256xf32>
    %149 = vector.shape_cast %148 : vector<1x256x256xf32> to vector<256x256xf32>
    %cst_131 = arith.constant dense<0.000000e+00> : vector<8x256xf32>
    %150 = tpu.matmul %104, %149, %cst_131 {dimension_numbers = #tpu.dot_dimension_numbers<[1], [0], [0], [1], [0, 0, 1, 1], [], []>} : vector<8x256xf32>, vector<256x256xf32>, vector<8x256xf32> -> vector<8x256xf32>
    %c6_132 = arith.constant 6 : index
    %c0_133 = arith.constant 0 : index
    %c0_134 = arith.constant 0 : index
    %151 = vector.load %arg9[%c6_132, %c0_133, %c0_134] : memref<9x4x8xf32, #tpu.memory_space<vmem>>, vector<1x4x8xf32>
    %152 = vector.shape_cast %151 : vector<1x4x8xf32> to vector<4x8xf32>
    %cst_135 = arith.constant dense<0.000000e+00> : vector<4x256xf32>
    %153 = tpu.matmul %152, %150, %cst_135 {dimension_numbers = #tpu.dot_dimension_numbers<[1], [0], [0], [1], [0, 0, 1, 1], [], []>} : vector<4x8xf32>, vector<8x256xf32>, vector<4x256xf32> -> vector<4x256xf32>
    %154 = arith.addf %147, %153 : vector<4x256xf32>
    %c7_136 = arith.constant 7 : index
    %c0_137 = arith.constant 0 : index
    %c0_138 = arith.constant 0 : index
    %155 = vector.load %arg6[%c7_136, %c0_137, %c0_138] : memref<9x256x256xf32, #tpu.memory_space<vmem>>, vector<1x256x256xf32>
    %156 = vector.shape_cast %155 : vector<1x256x256xf32> to vector<256x256xf32>
    %cst_139 = arith.constant dense<0.000000e+00> : vector<8x256xf32>
    %157 = tpu.matmul %104, %156, %cst_139 {dimension_numbers = #tpu.dot_dimension_numbers<[1], [0], [0], [1], [0, 0, 1, 1], [], []>} : vector<8x256xf32>, vector<256x256xf32>, vector<8x256xf32> -> vector<8x256xf32>
    %c7_140 = arith.constant 7 : index
    %c0_141 = arith.constant 0 : index
    %c0_142 = arith.constant 0 : index
    %158 = vector.load %arg9[%c7_140, %c0_141, %c0_142] : memref<9x4x8xf32, #tpu.memory_space<vmem>>, vector<1x4x8xf32>
    %159 = vector.shape_cast %158 : vector<1x4x8xf32> to vector<4x8xf32>
    %cst_143 = arith.constant dense<0.000000e+00> : vector<4x256xf32>
    %160 = tpu.matmul %159, %157, %cst_143 {dimension_numbers = #tpu.dot_dimension_numbers<[1], [0], [0], [1], [0, 0, 1, 1], [], []>} : vector<4x8xf32>, vector<8x256xf32>, vector<4x256xf32> -> vector<4x256xf32>
    %161 = arith.addf %154, %160 : vector<4x256xf32>
    %c8_144 = arith.constant 8 : index
    %c0_145 = arith.constant 0 : index
    %c0_146 = arith.constant 0 : index
    %162 = vector.load %arg6[%c8_144, %c0_145, %c0_146] : memref<9x256x256xf32, #tpu.memory_space<vmem>>, vector<1x256x256xf32>
    %163 = vector.shape_cast %162 : vector<1x256x256xf32> to vector<256x256xf32>
    %cst_147 = arith.constant dense<0.000000e+00> : vector<8x256xf32>
    %164 = tpu.matmul %104, %163, %cst_147 {dimension_numbers = #tpu.dot_dimension_numbers<[1], [0], [0], [1], [0, 0, 1, 1], [], []>} : vector<8x256xf32>, vector<256x256xf32>, vector<8x256xf32> -> vector<8x256xf32>
    %c8_148 = arith.constant 8 : index
    %c0_149 = arith.constant 0 : index
    %c0_150 = arith.constant 0 : index
    %165 = vector.load %arg9[%c8_148, %c0_149, %c0_150] : memref<9x4x8xf32, #tpu.memory_space<vmem>>, vector<1x4x8xf32>
    %166 = vector.shape_cast %165 : vector<1x4x8xf32> to vector<4x8xf32>
    %cst_151 = arith.constant dense<0.000000e+00> : vector<4x256xf32>
    %167 = tpu.matmul %166, %164, %cst_151 {dimension_numbers = #tpu.dot_dimension_numbers<[1], [0], [0], [1], [0, 0, 1, 1], [], []>} : vector<4x8xf32>, vector<8x256xf32>, vector<4x256xf32> -> vector<4x256xf32>
    %168 = arith.addf %161, %167 : vector<4x256xf32>
    %c0_152 = arith.constant 0 : index
    %c0_153 = arith.constant 0 : index
    %169 = vector.load %arg10[%c0_152, %c0_153] : memref<4x1xf32, #tpu.memory_space<vmem>>, vector<4x1xf32>
    %170 = vector.broadcast %169 : vector<4x1xf32> to vector<4x256xf32>
    %171 = arith.addf %168, %170 : vector<4x256xf32>
    %c0_154 = arith.constant 0 : index
    %c0_155 = arith.constant 0 : index
    %172 = vector.load %arg2[%c0_154, %c0_155] : memref<256x2xf32, #tpu.memory_space<vmem>>, vector<256x2xf32>
    %c0_156 = arith.constant 0 : index
    %c0_157 = arith.constant 0 : index
    %c0_158 = arith.constant 0 : index
    %173 = vector.load %arg5[%c0_156, %c0_157, %c0_158] : memref<1x2x12xf32, #tpu.memory_space<vmem>>, vector<1x2x12xf32>
    %174 = vector.shape_cast %173 : vector<1x2x12xf32> to vector<2x12xf32>
    %cst_159 = arith.constant 0.000000e+00 : f32
    %175 = vector.broadcast %cst_159 : f32 to vector<256x12xf32>
    %176 = vector.extract_strided_slice %172 {offsets = [0, 0], sizes = [256, 1], strides = [1, 1]} : vector<256x2xf32> to vector<256x1xf32>
    %177 = vector.extract_strided_slice %174 {offsets = [0, 0], sizes = [1, 12], strides = [1, 1]} : vector<2x12xf32> to vector<1x12xf32>
    %178 = vector.broadcast %176 : vector<256x1xf32> to vector<256x12xf32>
    %179 = vector.broadcast %177 : vector<1x12xf32> to vector<256x12xf32>
    %180 = arith.subf %178, %179 : vector<256x12xf32>
    %181 = arith.mulf %180, %180 : vector<256x12xf32>
    %182 = arith.addf %175, %181 : vector<256x12xf32>
    %183 = vector.extract_strided_slice %172 {offsets = [0, 1], sizes = [256, 1], strides = [1, 1]} : vector<256x2xf32> to vector<256x1xf32>
    %184 = vector.extract_strided_slice %174 {offsets = [1, 0], sizes = [1, 12], strides = [1, 1]} : vector<2x12xf32> to vector<1x12xf32>
    %185 = vector.broadcast %183 : vector<256x1xf32> to vector<256x12xf32>
    %186 = vector.broadcast %184 : vector<1x12xf32> to vector<256x12xf32>
    %187 = arith.subf %185, %186 : vector<256x12xf32>
    %188 = arith.mulf %187, %187 : vector<256x12xf32>
    %189 = arith.addf %182, %188 : vector<256x12xf32>
    %cst_160 = arith.constant 0.000000e+00 : f32
    %190 = vector.broadcast %cst_160 : f32 to vector<256x12xf32>
    %191 = arith.subf %190, %189 : vector<256x12xf32>
    %cst_161 = arith.constant 2.000000e+00 : f32
    %192 = vector.broadcast %cst_161 : f32 to vector<256x12xf32>
    %193 = arith.mulf %191, %192 : vector<256x12xf32>
    %194 = math.exp %193 : vector<256x12xf32>
    %cst_162 = arith.constant dense<0.000000e+00> : vector<4x12xf32>
    %195 = tpu.matmul %171, %194, %cst_162 {dimension_numbers = #tpu.dot_dimension_numbers<[1], [0], [0], [1], [0, 0, 1, 1], [], []>} : vector<4x256xf32>, vector<256x12xf32>, vector<4x12xf32> -> vector<4x12xf32>
    %cst_163 = arith.constant 1.000000e+00 : f32
    %196 = vector.broadcast %cst_163 : f32 to vector<1x256xf32>
    %cst_164 = arith.constant dense<0.000000e+00> : vector<1x12xf32>
    %197 = tpu.matmul %196, %194, %cst_164 {dimension_numbers = #tpu.dot_dimension_numbers<[1], [0], [0], [1], [0, 0, 1, 1], [], []>} : vector<1x256xf32>, vector<256x12xf32>, vector<1x12xf32> -> vector<1x12xf32>
    %198 = tpu.reciprocal %197 {approx = true} : vector<1x12xf32> -> vector<1x12xf32>
    %199 = vector.broadcast %198 : vector<1x12xf32> to vector<4x12xf32>
    %200 = arith.mulf %195, %199 : vector<4x12xf32>
    %c0_165 = arith.constant 0 : index
    %c0_166 = arith.constant 0 : index
    %c0_167 = arith.constant 0 : index
    %201 = vector.load %arg11[%c0_165, %c0_166, %c0_167] : memref<1x4x12xf32, #tpu.memory_space<vmem>>, vector<1x4x12xf32>
    %202 = vector.shape_cast %201 : vector<1x4x12xf32> to vector<4x12xf32>
    %203 = vector.shape_cast %200 : vector<4x12xf32> to vector<1x4x12xf32>
    tpu.vector_store %arg11[%c0_165, %c0_166, %c0_167], %203 {strides = array<i32>} : memref<1x4x12xf32, #tpu.memory_space<vmem>>, vector<1x4x12xf32>,
    return
  }
  func.func @transform_0(%arg0: i32) -> (i32, i32) {
    %c0_i32 = arith.constant 0 : i32
    %c0_i32_0 = arith.constant 0 : i32
    %c0_i32_1 = arith.constant 0 : i32
    return %c0_i32, %c0_i32_0 : i32, i32
  }
  func.func @transform_1(%arg0: i32) -> (i32, i32) {
    %c0_i32 = arith.constant 0 : i32
    %c0_i32_0 = arith.constant 0 : i32
    %c0_i32_1 = arith.constant 0 : i32
    return %c0_i32, %c0_i32_0 : i32, i32
  }
  func.func @transform_2(%arg0: i32) -> (i32, i32, i32) {
    %c0_i32 = arith.constant 0 : i32
    %c0_i32_0 = arith.constant 0 : i32
    %c0_i32_1 = arith.constant 0 : i32
    return %arg0, %c0_i32, %c0_i32_0 : i32, i32, i32
  }
  func.func @transform_3(%arg0: i32) -> (i32, i32, i32) {
    %c0_i32 = arith.constant 0 : i32
    %c0_i32_0 = arith.constant 0 : i32
    %c0_i32_1 = arith.constant 0 : i32
    return %arg0, %c0_i32, %c0_i32_0 : i32, i32, i32
  }
  func.func @transform_4(%arg0: i32) -> (i32, i32, i32) {
    %c0_i32 = arith.constant 0 : i32
    %c0_i32_0 = arith.constant 0 : i32
    %c0_i32_1 = arith.constant 0 : i32
    return %arg0, %c0_i32, %c0_i32_0 : i32, i32, i32
  }
  func.func @transform_5(%arg0: i32) -> (i32, i32, i32) {
    %c0_i32 = arith.constant 0 : i32
    %c0_i32_0 = arith.constant 0 : i32
    %c0_i32_1 = arith.constant 0 : i32
    %c0_i32_2 = arith.constant 0 : i32
    return %c0_i32, %c0_i32_0, %c0_i32_1 : i32, i32, i32
  }
  func.func @transform_6(%arg0: i32) -> (i32, i32, i32) {
    %c0_i32 = arith.constant 0 : i32
    %c0_i32_0 = arith.constant 0 : i32
    %c0_i32_1 = arith.constant 0 : i32
    %c0_i32_2 = arith.constant 0 : i32
    return %c0_i32, %c0_i32_0, %c0_i32_1 : i32, i32, i32
  }
  func.func @transform_7(%arg0: i32) -> (i32, i32) {
    %c0_i32 = arith.constant 0 : i32
    %c0_i32_0 = arith.constant 0 : i32
    %c0_i32_1 = arith.constant 0 : i32
    return %c0_i32, %c0_i32_0 : i32, i32
  }
  func.func @transform_8(%arg0: i32) -> (i32, i32, i32) {
    %c0_i32 = arith.constant 0 : i32
    %c0_i32_0 = arith.constant 0 : i32
    %c0_i32_1 = arith.constant 0 : i32
    %c0_i32_2 = arith.constant 0 : i32
    return %c0_i32, %c0_i32_0, %c0_i32_1 : i32, i32, i32
  }
  func.func @transform_9(%arg0: i32) -> (i32, i32) {
    %c0_i32 = arith.constant 0 : i32
    %c0_i32_0 = arith.constant 0 : i32
    %c0_i32_1 = arith.constant 0 : i32
    return %c0_i32, %c0_i32_0 : i32, i32
  }
  func.func @transform_10(%arg0: i32) -> (i32, i32, i32) {
    %c0_i32 = arith.constant 0 : i32
    %c0_i32_0 = arith.constant 0 : i32
    %c0_i32_1 = arith.constant 0 : i32
    return %arg0, %c0_i32, %c0_i32_0 : i32, i32, i32
  }
}

</mosaic_0001>

<llo_original>
// kernel: tpu_custom_call.1
$region0: #{tpu_custom_call.1}
  #allocation0 [shape = 'u32[]', space=smem, size = 0x4, offset = 0x4, fixed_abs, tag = 'smem constant byte address 0x4 - core index']
  #allocation1 [shape = 'u32[144,128]{1,0:T(1,128)}', space=vmem, size = 0x12000, scoped, tag = 'internal scratch']
  %s0 = inlined_call_operand.hbm [shape: f32[2,256], index: 0, kind: input, shape index: {}]
  %s1 = inlined_call_operand.vmem [shape: f32[256,2], index: 1, kind: input, shape index: {}]
  %s2 = inlined_call_operand.vmem [shape: f32[2,8,2], index: 2, kind: input, shape index: {}]
  %s3 = inlined_call_operand.vmem [shape: f32[2,3,8], index: 3, kind: input, shape index: {}]
  %s4 = inlined_call_operand.hbm [shape: f32[2,2,12], index: 4, kind: input, shape index: {}]
  %s5 = inlined_call_operand.hbm [shape: f32[9,256,256], index: 5, kind: input, shape index: {}]
  %s6 = inlined_call_operand.vmem [shape: f32[9,8,3], index: 6, kind: input, shape index: {}]
  %s7 = inlined_call_operand.vmem [shape: f32[8,1], index: 7, kind: input, shape index: {}]
  %s8 = inlined_call_operand.vmem [shape: f32[9,4,8], index: 8, kind: input, shape index: {}]
  %s9 = inlined_call_operand.vmem [shape: f32[4,1], index: 9, kind: input, shape index: {}]
  %s10 = inlined_call_operand.hbm [shape: f32[2,4,12], index: 10, kind: output, shape index: {}]
  %s11 = sld [smem:[#allocation0]]
  $region85: #{tpu_custom_call.1} parent=0
    _
  %s13 = ssub.s32 1, %s11
  %s14 = scalar_select 0, %s13, %s11
  $region1: #{tpu_custom_call.1} parent=0
    #allocation2 [shape = 'u8[2048]{0}', space=vmem, size = 0x800, scoped, tag = 'input window, operand 0, single buffered']
    #allocation3 [shape = 's32[2]{0}', space=sflag, size = 0x8, scoped, tag = 'scoped memory for tpu_custom_call.1']
    #allocation4 [shape = 's32[2]{0}', space=sflag, size = 0x8, scoped, tag = 'scoped memory for tpu_custom_call.1']
    #allocation5 [shape = 'u8[2048]{0}', space=vmem, size = 0x800, scoped, tag = 'input window, operand 4']
    #allocation6 [shape = 's32[2]{0}', space=sflag, size = 0x8, scoped, tag = 'scoped memory for tpu_custom_call.1']
    #allocation7 [shape = 'u8[2359296]{0}', space=vmem, size = 0x240000, scoped, tag = 'input window, operand 5, single buffered']
    #allocation8 [shape = 'u8[4096]{0}', space=vmem, size = 0x1000, scoped, tag = 'output window, operand 0']
    %15 = vsyncpa [#allocation3], 0
    %16 = vsyncpa [#allocation6], 0
    %s17 = scalar_lea.sflag [#allocation6], 1
    %18 = vsyncpa %s17, 0
    %19 = vsyncpa [#allocation4], 0
    %s20 = scalar_lea.sflag [#allocation4], 1
    %21 = vsyncpa %s20, 0
    loop: start=0, step=1, limit=4
    $region2: #{tpu_custom_call.1} parent=1 // loop_pre_header
      _
    $region3: #{tpu_custom_call.1} parent=1 // loop_header
      %s23 = sphi 0, %s27
      %p24 = scmp.ge.s32.totalorder %s23, 4
      %s31 = sphi 0, %s31
      %s33 = sphi 0, %s31
      %s34 = sphi 0, %s33
      %s48 = sphi 0, %s34
      %s52 = sphi 0, %s52
      %s54 = sphi 0, %s52
      %s55 = sphi 0, %s54
      %s69 = sphi 0, %s55
      %s75 = sphi 0, %s77
      %s78 = sphi 0, %s75
      %s79 = sphi 0, %s78
      %s95 = sphi 0, %s79
      %s101 = sphi 0, %s103
      %s104 = sphi 0, %s101
      %s105 = sphi 0, %s104
      %s121 = sphi 0, %s105
      %s127 = sphi 0, %s129
      %s130 = sphi 0, %s127
      %s131 = sphi 0, %s130
      %s147 = sphi 0, %s131
      %s151 = sphi 0, %s151
      %s153 = sphi 0, %s151
      %s154 = sphi 0, %s153
      %s168 = sphi 0, %s154
      %s172 = sphi 0, %s172
      %s174 = sphi 0, %s172
      %s175 = sphi 0, %s174
      %s189 = sphi 0, %s175
      %s193 = sphi 0, %s193
      %s195 = sphi 0, %s193
      %s196 = sphi 0, %s195
      %s210 = sphi 0, %s196
      %s214 = sphi 0, %s214
      %s216 = sphi 0, %s214
      %s217 = sphi 0, %s216
      %s231 = sphi 0, %s217
      %s235 = sphi 0, %s235
      %s237 = sphi 0, %s235
      %s238 = sphi 0, %s237
      %s252 = sphi 0, %s238
      %s258 = sphi 0, %s260
      %s261 = sphi 0, %s258
      %s262 = sphi 0, %s261
      %s278 = sphi 0, %s262
    $region4: #{tpu_custom_call.1} parent=1 // loop_header_branch
      %26 = sbr.rel (%p24) target = $region8
    $region5: #{tpu_custom_call.1} parent=1 // loop_body
      %s28 = ssub.s32 %s23, 1
      %s29 = ssub.s32 %s23, 2
      %s30 = sadd.s32 %s23, 1
      %s32 = sadd.s32 %s31, 1
      %p35 = scmp.eq.s32.totalorder %s23, 1
      %p36 = scmp.ne.s32.totalorder %s31, %s33
      %p37 = scmp.eq.s32.totalorder %s23, 0
      %p38 = por %p36, %p37
      %p39 = scmp.ne.s32.totalorder %s31, %s33
      %p40 = scmp.eq.s32.totalorder %s28, 1
      %p41 = por %p39, %p40
      %p42 = scmp.ne.s32.totalorder %s33, %s34
      %p43 = scmp.eq.s32.totalorder %s28, 0
      %p44 = por %p42, %p43
      %p45 = scmp.ne.s32.totalorder %s33, %s34
      %p46 = scmp.eq.s32.totalorder %s29, 1
      %p47 = por %p45, %p46
      %p49 = scmp.ne.s32.totalorder %s34, %s48
      %p50 = scmp.eq.s32.totalorder %s29, 0
      %p51 = por %p49, %p50
      %s53 = sadd.s32 %s52, 1
      %p56 = scmp.eq.s32.totalorder %s23, 1
      %p57 = scmp.ne.s32.totalorder %s52, %s54
      %p58 = scmp.eq.s32.totalorder %s23, 0
      %p59 = por %p57, %p58
      %p60 = scmp.ne.s32.totalorder %s52, %s54
      %p61 = scmp.eq.s32.totalorder %s28, 1
      %p62 = por %p60, %p61
      %p63 = scmp.ne.s32.totalorder %s54, %s55
      %p64 = scmp.eq.s32.totalorder %s28, 0
      %p65 = por %p63, %p64
      %p66 = scmp.ne.s32.totalorder %s54, %s55
      %p67 = scmp.eq.s32.totalorder %s29, 1
      %p68 = por %p66, %p67
      %p70 = scmp.ne.s32.totalorder %s55, %s69
      %p71 = scmp.eq.s32.totalorder %s29, 0
      %p72 = por %p70, %p71
      %s73 = ssub.s32 %s23, %s30
      %p74 = scmp.eq.s32.totalorder %s73, 0
      %s76 = sadd.s32 %s75, 1
      %s77 = scalar_select %p74, %s75, %s76
      %p80 = pneg %p74
      %p81 = scmp.eq.s32.totalorder %s23, 1
      %p82 = por %p80, %p81
      %p83 = scmp.ne.s32.totalorder %s75, %s78
      %p84 = scmp.eq.s32.totalorder %s23, 0
      %p85 = por %p83, %p84
      %p86 = scmp.ne.s32.totalorder %s75, %s78
      %p87 = scmp.eq.s32.totalorder %s28, 1
      %p88 = por %p86, %p87
      %p89 = scmp.ne.s32.totalorder %s78, %s79
      %p90 = scmp.eq.s32.totalorder %s28, 0
      %p91 = por %p89, %p90
      %p92 = scmp.ne.s32.totalorder %s78, %s79
      %p93 = scmp.eq.s32.totalorder %s29, 1
      %p94 = por %p92, %p93
      %p96 = scmp.ne.s32.totalorder %s79, %s95
      %p97 = scmp.eq.s32.totalorder %s29, 0
      %p98 = por %p96, %p97
      %s99 = ssub.s32 %s23, %s30
      %p100 = scmp.eq.s32.totalorder %s99, 0
      %s102 = sadd.s32 %s101, 1
      %s103 = scalar_select %p100, %s101, %s102
      %p106 = pneg %p100
      %p107 = scmp.eq.s32.totalorder %s23, 1
      %p108 = por %p106, %p107
      %p109 = scmp.ne.s32.totalorder %s101, %s104
      %p110 = scmp.eq.s32.totalorder %s23, 0
      %p111 = por %p109, %p110
      %p112 = scmp.ne.s32.totalorder %s101, %s104
      %p113 = scmp.eq.s32.totalorder %s28, 1
      %p114 = por %p112, %p113
      %p115 = scmp.ne.s32.totalorder %s104, %s105
      %p116 = scmp.eq.s32.totalorder %s28, 0
      %p117 = por %p115, %p116
      %p118 = scmp.ne.s32.totalorder %s104, %s105
      %p119 = scmp.eq.s32.totalorder %s29, 1
      %p120 = por %p118, %p119
      %p122 = scmp.ne.s32.totalorder %s105, %s121
      %p123 = scmp.eq.s32.totalorder %s29, 0
      %p124 = por %p122, %p123
      %s125 = ssub.s32 %s23, %s30
      %p126 = scmp.eq.s32.totalorder %s125, 0
      %s128 = sadd.s32 %s127, 1
      %s129 = scalar_select %p126, %s127, %s128
      %p132 = pneg %p126
      %p133 = scmp.eq.s32.totalorder %s23, 1
      %p134 = por %p132, %p133
      %p135 = scmp.ne.s32.totalorder %s127, %s130
      %p136 = scmp.eq.s32.totalorder %s23, 0
      %p137 = por %p135, %p136
      %p138 = scmp.ne.s32.totalorder %s127, %s130
      %p139 = scmp.eq.s32.totalorder %s28, 1
      %p140 = por %p138, %p139
      %p141 = scmp.ne.s32.totalorder %s130, %s131
      %p142 = scmp.eq.s32.totalorder %s28, 0
      %p143 = por %p141, %p142
      %p144 = scmp.ne.s32.totalorder %s130, %s131
      %p145 = scmp.eq.s32.totalorder %s29, 1
      %p146 = por %p144, %p145
      %p148 = scmp.ne.s32.totalorder %s131, %s147
      %p149 = scmp.eq.s32.totalorder %s29, 0
      %p150 = por %p148, %p149
      %s152 = sadd.s32 %s151, 1
      %p155 = scmp.eq.s32.totalorder %s23, 1
      %p156 = scmp.ne.s32.totalorder %s151, %s153
      %p157 = scmp.eq.s32.totalorder %s23, 0
      %p158 = por %p156, %p157
      %p159 = scmp.ne.s32.totalorder %s151, %s153
      %p160 = scmp.eq.s32.totalorder %s28, 1
      %p161 = por %p159, %p160
      %p162 = scmp.ne.s32.totalorder %s153, %s154
      %p163 = scmp.eq.s32.totalorder %s28, 0
      %p164 = por %p162, %p163
      %p165 = scmp.ne.s32.totalorder %s153, %s154
      %p166 = scmp.eq.s32.totalorder %s29, 1
      %p167 = por %p165, %p166
      %p169 = scmp.ne.s32.totalorder %s154, %s168
      %p170 = scmp.eq.s32.totalorder %s29, 0
      %p171 = por %p169, %p170
      %s173 = sadd.s32 %s172, 1
      %p176 = scmp.eq.s32.totalorder %s23, 1
      %p177 = scmp.ne.s32.totalorder %s172, %s174
      %p178 = scmp.eq.s32.totalorder %s23, 0
      %p179 = por %p177, %p178
      %p180 = scmp.ne.s32.totalorder %s172, %s174
      %p181 = scmp.eq.s32.totalorder %s28, 1
      %p182 = por %p180, %p181
      %p183 = scmp.ne.s32.totalorder %s174, %s175
      %p184 = scmp.eq.s32.totalorder %s28, 0
      %p185 = por %p183, %p184
      %p186 = scmp.ne.s32.totalorder %s174, %s175
      %p187 = scmp.eq.s32.totalorder %s29, 1
      %p188 = por %p186, %p187
      %p190 = scmp.ne.s32.totalorder %s175, %s189
      %p191 = scmp.eq.s32.totalorder %s29, 0
      %p192 = por %p190, %p191
      %s194 = sadd.s32 %s193, 1
      %p197 = scmp.eq.s32.totalorder %s23, 1
      %p198 = scmp.ne.s32.totalorder %s193, %s195
      %p199 = scmp.eq.s32.totalorder %s23, 0
      %p200 = por %p198, %p199
      %p201 = scmp.ne.s32.totalorder %s193, %s195
      %p202 = scmp.eq.s32.totalorder %s28, 1
      %p203 = por %p201, %p202
      %p204 = scmp.ne.s32.totalorder %s195, %s196
      %p205 = scmp.eq.s32.totalorder %s28, 0
      %p206 = por %p204, %p205
      %p207 = scmp.ne.s32.totalorder %s195, %s196
      %p208 = scmp.eq.s32.totalorder %s29, 1
      %p209 = por %p207, %p208
      %p211 = scmp.ne.s32.totalorder %s196, %s210
      %p212 = scmp.eq.s32.totalorder %s29, 0
      %p213 = por %p211, %p212
      %s215 = sadd.s32 %s214, 1
      %p218 = scmp.eq.s32.totalorder %s23, 1
      %p219 = scmp.ne.s32.totalorder %s214, %s216
      %p220 = scmp.eq.s32.totalorder %s23, 0
      %p221 = por %p219, %p220
      %p222 = scmp.ne.s32.totalorder %s214, %s216
      %p223 = scmp.eq.s32.totalorder %s28, 1
      %p224 = por %p222, %p223
      %p225 = scmp.ne.s32.totalorder %s216, %s217
      %p226 = scmp.eq.s32.totalorder %s28, 0
      %p227 = por %p225, %p226
      %p228 = scmp.ne.s32.totalorder %s216, %s217
      %p229 = scmp.eq.s32.totalorder %s29, 1
      %p230 = por %p228, %p229
      %p232 = scmp.ne.s32.totalorder %s217, %s231
      %p233 = scmp.eq.s32.totalorder %s29, 0
      %p234 = por %p232, %p233
      %s236 = sadd.s32 %s235, 1
      %p239 = scmp.eq.s32.totalorder %s23, 1
      %p240 = scmp.ne.s32.totalorder %s235, %s237
      %p241 = scmp.eq.s32.totalorder %s23, 0
      %p242 = por %p240, %p241
      %p243 = scmp.ne.s32.totalorder %s235, %s237
      %p244 = scmp.eq.s32.totalorder %s28, 1
      %p245 = por %p243, %p244
      %p246 = scmp.ne.s32.totalorder %s237, %s238
      %p247 = scmp.eq.s32.totalorder %s28, 0
      %p248 = por %p246, %p247
      %p249 = scmp.ne.s32.totalorder %s237, %s238
      %p250 = scmp.eq.s32.totalorder %s29, 1
      %p251 = por %p249, %p250
      %p253 = scmp.ne.s32.totalorder %s238, %s252
      %p254 = scmp.eq.s32.totalorder %s29, 0
      %p255 = por %p253, %p254
      %s256 = ssub.s32 %s23, %s30
      %p257 = scmp.eq.s32.totalorder %s256, 0
      %s259 = sadd.s32 %s258, 1
      %s260 = scalar_select %p257, %s258, %s259
      %p263 = pneg %p257
      %p264 = scmp.eq.s32.totalorder %s23, 1
      %p265 = por %p263, %p264
      %p266 = scmp.ne.s32.totalorder %s258, %s261
      %p267 = scmp.eq.s32.totalorder %s23, 0
      %p268 = por %p266, %p267
      %p269 = scmp.ne.s32.totalorder %s258, %s261
      %p270 = scmp.eq.s32.totalorder %s28, 1
      %p271 = por %p269, %p270
      %p272 = scmp.ne.s32.totalorder %s261, %s262
      %p273 = scmp.eq.s32.totalorder %s28, 0
      %p274 = por %p272, %p273
      %p275 = scmp.ne.s32.totalorder %s261, %s262
      %p276 = scmp.eq.s32.totalorder %s29, 1
      %p277 = por %p275, %p276
      %p279 = scmp.ne.s32.totalorder %s262, %s278
      %p280 = scmp.eq.s32.totalorder %s29, 0
      %p281 = por %p279, %p280
      %p282 = scmp.le.s32.totalorder 1, %s23
      %p283 = scmp.lt.s32.totalorder %s23, 3
      %p284 = pnand %p282, %p283
      %p285 = pneg %p284
      // Predicated region
      $region9: #{tpu_custom_call.1} parent=5 // pred_check
        _
      $region10: #{tpu_custom_call.1} parent=5 // pred_check_branch
        %287 = sbr.rel (%p284) target = $region12
      $region11: #{tpu_custom_call.1} parent=5 // pred_region
        %s288 = ssub.s32 %s23, 1
        // Predicated region
        $region13: #{tpu_custom_call.1} parent=11 // pred_check
          %p289 = pneg %p44
        $region14: #{tpu_custom_call.1} parent=11 // pred_check_branch
          %291 = sbr.rel (%p289) target = $region16
        $region15: #{tpu_custom_call.1} parent=11 // pred_region
          %s293 = ssub.s32 64, 64
          %294 = vsyncadd [#allocation3], %s293
          %s296 = sshll.u32 [#allocation2], 4
          %s297 = int_to_ptr.vmem [resolvable:$true] %s296
          %299 = dma.hbm_to_vmem [thread:$0]  %s0, 64, %s297, [#allocation3]
        $region16: #{tpu_custom_call.1} parent=11 // pred_fallthru
          _
        // Predicated region
        $region17: #{tpu_custom_call.1} parent=11 // pred_check
          %p300 = pneg %p65
        $region18: #{tpu_custom_call.1} parent=11 // pred_check_branch
          %302 = sbr.rel (%p300) target = $region20
        $region19: #{tpu_custom_call.1} parent=11 // pred_region
          _
        $region20: #{tpu_custom_call.1} parent=11 // pred_fallthru
          _
        // Predicated region
        $region21: #{tpu_custom_call.1} parent=11 // pred_check
          %p303 = pneg %p164
        $region22: #{tpu_custom_call.1} parent=11 // pred_check_branch
          %305 = sbr.rel (%p303) target = $region24
        $region23: #{tpu_custom_call.1} parent=11 // pred_region
          %s307 = ssub.s32 73728, 73728
          %308 = vsyncadd [#allocation6], %s307
          %s309 = sshll.u32 [#allocation7], 4
          %s310 = int_to_ptr.vmem [resolvable:$true] %s309
          %315 = dma.hbm_to_vmem [thread:$0]  %s5, 73728, %s310, [#allocation6], 256, 256, 16
        $region24: #{tpu_custom_call.1} parent=11 // pred_fallthru
          _
        // Predicated region
        $region25: #{tpu_custom_call.1} parent=11 // pred_check
          %p316 = pneg %p185
        $region26: #{tpu_custom_call.1} parent=11 // pred_check_branch
          %318 = sbr.rel (%p316) target = $region28
        $region27: #{tpu_custom_call.1} parent=11 // pred_region
          _
        $region28: #{tpu_custom_call.1} parent=11 // pred_fallthru
          _
        // Predicated region
        $region29: #{tpu_custom_call.1} parent=11 // pred_check
          %p319 = pneg %p206
        $region30: #{tpu_custom_call.1} parent=11 // pred_check_branch
          %321 = sbr.rel (%p319) target = $region32
        $region31: #{tpu_custom_call.1} parent=11 // pred_region
          _
        $region32: #{tpu_custom_call.1} parent=11 // pred_fallthru
          _
        // Predicated region
        $region33: #{tpu_custom_call.1} parent=11 // pred_check
          %p322 = pneg %p227
        $region34: #{tpu_custom_call.1} parent=11 // pred_check_branch
          %324 = sbr.rel (%p322) target = $region36
        $region35: #{tpu_custom_call.1} parent=11 // pred_region
          _
        $region36: #{tpu_custom_call.1} parent=11 // pred_fallthru
          _
        // Predicated region
        $region37: #{tpu_custom_call.1} parent=11 // pred_check
          %p325 = pneg %p248
        $region38: #{tpu_custom_call.1} parent=11 // pred_check_branch
          %327 = sbr.rel (%p325) target = $region40
        $region39: #{tpu_custom_call.1} parent=11 // pred_region
          _
        $region40: #{tpu_custom_call.1} parent=11 // pred_fallthru
          _
      $region12: #{tpu_custom_call.1} parent=5 // pred_fallthru
        _
      %p328 = scmp.lt.s32.totalorder %s23, 2
      // Predicated region
      $region41: #{tpu_custom_call.1} parent=5 // pred_check
        %p329 = pneg %p328
      $region42: #{tpu_custom_call.1} parent=5 // pred_check_branch
        %331 = sbr.rel (%p329) target = $region44
      $region43: #{tpu_custom_call.1} parent=5 // pred_region
        // Predicated region
        $region45: #{tpu_custom_call.1} parent=43 // pred_check
          %p332 = pneg %p85
        $region46: #{tpu_custom_call.1} parent=43 // pred_check_branch
          %334 = sbr.rel (%p332) target = $region48
        $region47: #{tpu_custom_call.1} parent=43 // pred_region
          %p335 = scmp.lt.s32.totalorder %s23, 1
          %s336 = scalar_select %p335, %s23, 1
          %s337 = smul.addr %s336, 8
          %s338 = scalar_lea.vmem %s2, %s337
        $region48: #{tpu_custom_call.1} parent=43 // pred_fallthru
          _
        // Predicated region
        $region49: #{tpu_custom_call.1} parent=43 // pred_check
          %p339 = pneg %p111
        $region50: #{tpu_custom_call.1} parent=43 // pred_check_branch
          %341 = sbr.rel (%p339) target = $region52
        $region51: #{tpu_custom_call.1} parent=43 // pred_region
          %p342 = scmp.lt.s32.totalorder %s23, 1
          %s343 = scalar_select %p342, %s23, 1
          %s344 = smul.addr %s343, 4
          %s345 = scalar_lea.vmem %s3, %s344
        $region52: #{tpu_custom_call.1} parent=43 // pred_fallthru
          _
        // Predicated region
        $region53: #{tpu_custom_call.1} parent=43 // pred_check
          %p346 = pneg %p137
        $region54: #{tpu_custom_call.1} parent=43 // pred_check_branch
          %348 = sbr.rel (%p346) target = $region56
        $region55: #{tpu_custom_call.1} parent=43 // pred_region
          %s349 = sand.u32 %s23, 1
          %s350 = scalar_lea.sflag [#allocation6], %s349
          %s351 = sand.u32 %s127, 1
          %s352 = smul.addr %s351, 2
          %s353 = scalar_lea.vmem [#allocation5], %s352
          %s355 = ssub.s32 32, 32
          %356 = vsyncadd %s350, %s355
          %s357 = smul.addr %s23, 32
          %s358 = scalar_lea.hbm %s4, %s357
          %s360 = sshll.u32 %s353, 4
          %s361 = int_to_ptr.vmem [resolvable:$true] %s360
          %363 = dma.hbm_to_vmem [thread:$0]  %s358, 32, %s361, %s350
        $region56: #{tpu_custom_call.1} parent=43 // pred_fallthru
          _
      $region44: #{tpu_custom_call.1} parent=5 // pred_fallthru
        _
      %p364 = scmp.le.s32.totalorder 1, %s23
      %p365 = scmp.lt.s32.totalorder %s23, 3
      %p366 = pnand %p364, %p365
      %p367 = pneg %p366
      // Predicated region
      $region57: #{tpu_custom_call.1} parent=5 // pred_check
        _
      $region58: #{tpu_custom_call.1} parent=5 // pred_check_branch
        %369 = sbr.rel (%p366) target = $region60
      $region59: #{tpu_custom_call.1} parent=5 // pred_region
        %s370 = ssub.s32 %s23, 1
        // Predicated region
        $region61: #{tpu_custom_call.1} parent=59 // pred_check
          %p371 = pneg %p44
        $region62: #{tpu_custom_call.1} parent=59 // pred_check_branch
          %373 = sbr.rel (%p371) target = $region64
        $region63: #{tpu_custom_call.1} parent=59 // pred_region
          %374 = dma.done [#allocation3], 64
        $region64: #{tpu_custom_call.1} parent=59 // pred_fallthru
          _
        %s375 = sand.u32 %s28, 1
        %s376 = scalar_lea.sflag [#allocation6], %s375
        %s377 = sand.u32 %s130, 1
        %s378 = smul.addr %s377, 2
        %s379 = scalar_lea.vmem [#allocation5], %s378
        // Predicated region
        $region65: #{tpu_custom_call.1} parent=59 // pred_check
          %p380 = pneg %p143
        $region66: #{tpu_custom_call.1} parent=59 // pred_check_branch
          %382 = sbr.rel (%p380) target = $region68
        $region67: #{tpu_custom_call.1} parent=59 // pred_region
          %383 = dma.done %s376, 32
        $region68: #{tpu_custom_call.1} parent=59 // pred_fallthru
          _
        // Predicated region
        $region69: #{tpu_custom_call.1} parent=59 // pred_check
          %p384 = pneg %p164
        $region70: #{tpu_custom_call.1} parent=59 // pred_check_branch
          %386 = sbr.rel (%p384) target = $region72
        $region71: #{tpu_custom_call.1} parent=59 // pred_region
          %387 = dma.done [#allocation6], 73728
        $region72: #{tpu_custom_call.1} parent=59 // pred_fallthru
          _
        %p388 = pneg %p44
        %p389 = pneg %p41
        %p390 = pneg %p65
        %p391 = pneg %p62
        %p392 = scmp.lt.s32.totalorder %s28, 1
        %s393 = scalar_select %p392, %s28, 1
        %s394 = smul.addr %s393, 8
        %s395 = scalar_lea.vmem %s2, %s394
        %p396 = pneg %p91
        %p397 = pneg %p88
        %p398 = scmp.lt.s32.totalorder %s28, 1
        %s399 = scalar_select %p398, %s28, 1
        %s400 = smul.addr %s399, 4
        %s401 = scalar_lea.vmem %s3, %s400
        %p402 = pneg %p117
        %p403 = pneg %p114
        %s404 = sand.u32 %s28, 1
        %s405 = scalar_lea.sflag [#allocation6], %s404
        %s406 = sand.u32 %s130, 1
        %s407 = smul.addr %s406, 2
        %s408 = scalar_lea.vmem [#allocation5], %s407
        %p409 = pneg %p143
        %p410 = pneg %p140
        %p411 = pneg %p164
        %p412 = pneg %p161
        %p413 = pneg %p185
        %p414 = pneg %p182
        %p415 = pneg %p206
        %p416 = pneg %p203
        %p417 = pneg %p227
        %p418 = pneg %p224
        %p419 = pneg %p248
        %p420 = pneg %p245
        %p421 = pneg %p274
        %p422 = pneg %p271
        %s423 = sand.u32 %s261, 1
        %s424 = scalar_lea.sflag [#allocation4], %s423
        %s425 = sand.u32 %s261, 1
        %s426 = smul.addr %s425, 4
        %s427 = scalar_lea.vmem [#allocation8], %s426
        %p428 = scmp.lt.s32.totalorder %s28, 1
        %s429 = scalar_select %p428, %s28, 1
        %s430 = smul.addr %s429, 8
        %s431 = scalar_lea.vmem %s2, %s430
        %p432 = scmp.lt.s32.totalorder %s28, 1
        %s433 = scalar_select %p432, %s28, 1
        %s434 = smul.addr %s433, 4
        %s435 = scalar_lea.vmem %s3, %s434
        %v436 = vld [vmem:[#allocation2] sm:$0xf]
        %v437 = vld [vmem:[%s431] sm:$0xff]
        %439 = vset.pattern.permute.xlu0 0
        %440 = vperm.xlu0 %439, %v437
        %v441 = vpop.permute.xlu0 %440
        %v444 = vlaneseq
        %v445 = vshrl.u32 %v444, 7
        %v446 = vsub.s32 0, %v445
        %v447 = vrot.slane %v436, %v446
        %v448 = vlaneseq
        %v449 = vshrl.u32 %v448, 7
        %v450 = vsub.s32 2, %v449
        %v451 = vrot.slane %v436, %v450
        %v454 = vlaneseq
        %v455 = vshrl.u32 %v454, 7
        %v456 = vsub.s32 0, %v455
        %v457 = vrot.slane %v447, %v456
        %v458 = vlaneseq
        %v459 = vshrl.u32 %v458, 7
        %v460 = vsub.s32 0, %v459
        %v461 = vrot.slane %v451, %v460
        %v462 = vsub.f32 %v441, %v457
        %v463 = vsub.f32 %v441, %v461
        %v464 = vmul.f32 %v462, %v462
        %v465 = vmul.f32 %v463, %v463
        %v466 = vadd.f32 %v464, 0.0
        %v467 = vadd.f32 %v465, 0.0
        %468 = vset.pattern.permute.xlu0 1
        %469 = vperm.xlu0 %468, %v437
        %v470 = vpop.permute.xlu0 %469
        %v472 = vlaneseq
        %v473 = vshrl.u32 %v472, 7
        %v474 = vsub.s32 1, %v473
        %v475 = vrot.slane %v436, %v474
        %v476 = vlaneseq
        %v477 = vshrl.u32 %v476, 7
        %v478 = vsub.s32 3, %v477
        %v479 = vrot.slane %v436, %v478
        %v482 = vlaneseq
        %v483 = vshrl.u32 %v482, 7
        %v484 = vsub.s32 1, %v483
        %v485 = vrot.slane %v475, %v484
        %v486 = vlaneseq
        %v487 = vshrl.u32 %v486, 7
        %v488 = vsub.s32 1, %v487
        %v489 = vrot.slane %v479, %v488
        %v490 = vsub.f32 %v470, %v485
        %v491 = vsub.f32 %v470, %v489
        %v492 = vmul.f32 %v490, %v490
        %v493 = vmul.f32 %v491, %v491
        %v494 = vadd.f32 %v466, %v492
        %v495 = vadd.f32 %v467, %v493
        %v496 = vsub.f32 0.0, %v494
        %v497 = vsub.f32 0.0, %v495
        %v498 = vmul.f32 %v496, 2.0
        %v499 = vmul.f32 %v497, 2.0
        %v500 = vmul.f32 %v498, 1.442695
        %v501 = vpow.pop %v500
        %v502 = vmul.f32 %v499, 1.442695
        %v503 = vpow.pop %v502
        %v504 = vld [vmem:[%s435] sm:$0x7]
        %vm505 = vcmask 64512
        %v507 = vsel %vm505, %v504, 0
        %509 = vmatprep.subr.mxu0 %v503
        %510 = vmatpush1.msra.mxu0 %v501
        %511 = vmatprep.subr.mxu0 0.0
        %512 = vmatpush1.msra.mxu0 0.0
        %513 = vmatprep.subr.mxu0 0.0
        %514 = vmatpush1.msra.mxu0 0.0
        %515 = vmatprep.subr.mxu0 0.0
        %516 = vmatpush1.msra.mxu0 0.0
        %517 = vmatprep.subr.mxu0 0.0
        %518 = vmatpush1.msra.mxu0 0.0
        %519 = vmatprep.subr.mxu0 0.0
        %520 = vmatpush1.msra.mxu0 0.0
        %521 = vmatprep.subr.mxu0 0.0
        %522 = vmatpush1.msra.mxu0 0.0
        %523 = vmatprep.subr.mxu0 0.0
        %524 = vmatpush1.msra.mxu0 0.0
        %525 = vmatprep.subr.mxu0 0.0
        %526 = vmatpush1.msra.mxu0 0.0
        %527 = vmatprep.subr.mxu0 0.0
        %528 = vmatpush1.msra.mxu0 0.0
        %529 = vmatprep.subr.mxu0 0.0
        %530 = vmatpush1.msra.mxu0 0.0
        %531 = vmatprep.subr.mxu0 0.0
        %532 = vmatpush1.msra.mxu0 0.0
        %533 = vmatprep.subr.mxu0 0.0
        %534 = vmatpush1.msra.mxu0 0.0
        %535 = vmatprep.subr.mxu0 0.0
        %536 = vmatpush1.msra.mxu0 0.0
        %537 = vmatprep.subr.mxu0 0.0
        %538 = vmatpush1.msra.mxu0 0.0
        %539 = vmatprep.subr.mxu0 0.0
        %540 = vmatpush1.msra.mxu0 0.0
        %541 = vmatprep.subr.mxu0 0.0
        %542 = vmatpush1.msra.mxu0 0.0
        %543 = vmatprep.subr.mxu0 0.0
        %544 = vmatpush1.msra.mxu0 0.0
        %545 = vmatprep.subr.mxu0 0.0
        %546 = vmatpush1.msra.mxu0 0.0
        %547 = vmatprep.subr.mxu0 0.0
        %548 = vmatpush1.msra.mxu0 0.0
        %549 = vmatprep.subr.mxu0 0.0
        %550 = vmatpush1.msra.mxu0 0.0
        %551 = vmatprep.subr.mxu0 0.0
        %552 = vmatpush1.msra.mxu0 0.0
        %553 = vmatprep.subr.mxu0 0.0
        %554 = vmatpush1.msra.mxu0 0.0
        %555 = vmatprep.subr.mxu0 0.0
        %556 = vmatpush1.msra.mxu0 0.0
        %557 = vmatprep.subr.mxu0 0.0
        %558 = vmatpush1.msra.mxu0 0.0
        %559 = vmatprep.subr.mxu0 0.0
        %560 = vmatpush1.msra.mxu0 0.0
        %561 = vmatprep.subr.mxu0 0.0
        %562 = vmatpush1.msra.mxu0 0.0
        %563 = vmatprep.subr.mxu0 0.0
        %564 = vmatpush1.msra.mxu0 0.0
        %565 = vmatprep.subr.mxu0 0.0
        %566 = vmatpush1.msra.mxu0 0.0
        %567 = vmatprep.subr.mxu0 0.0
        %568 = vmatpush1.msra.mxu0 0.0
        %569 = vmatprep.subr.mxu0 0.0
        %570 = vmatpush1.msra.mxu0 0.0
        %571 = vmatprep.subr.mxu0 0.0
        %572 = vmatpush1.msra.mxu0 0.0
        %573 = vmatprep.mubr.f32.mxu0 0.0
        %574 = vmatmul.mubr.f32.gmra.mrb[0].mxu0 %v507
        %v575 = vpop.f32.mrb[0].mxu0
        %v576 = vadd.f32 0.0, %v575
        %v577 = vpop.f32.mrb[0].mxu0
        %v578 = vadd.f32 0.0, %v577
        %579 = vdwg.mxu0
        %v580 = vadd.f32 %v576, 1e-08
        %v581 = vadd.f32 %v578, 1e-08
        %v582 = vrcp.pop %v580
        %v583 = vrcp.pop %v581
        %v584 = vlaneseq
        %v585 = vshrl.u32 %v584, 7
        %vm586 = vcmp.eq.s32.totalorder %v585, 0
        %v587 = vlaneseq
        %v588 = vshrl.u32 %v587, 7
        %v589 = vsub.s32 0, %v588
        %v590 = vrot.slane %v582, %v589
        %v591 = vlaneseq
        %v592 = vshrl.u32 %v591, 7
        %v593 = vsub.s32 0, %v592
        %v594 = vrot.slane %v583, %v593
        %v595 = vmul.f32 %v576, %v590
        %v596 = vmul.f32 %v578, %v594
        %v597 = vsel %vm586, %v576, %v595
        %v598 = vsel %vm586, %v578, %v596
        %v599 = vld [vmem:[#allocation7] sm:$0xff]
        %v600 = vld [vmem:[#allocation7 + $0x8] sm:$0xff]
        %v601 = vld [vmem:[#allocation7 + $0x10] sm:$0xff]
        %v602 = vld [vmem:[#allocation7 + $0x18] sm:$0xff]
        %v603 = vld [vmem:[#allocation7 + $0x20] sm:$0xff]
        %v604 = vld [vmem:[#allocation7 + $0x28] sm:$0xff]
        %v605 = vld [vmem:[#allocation7 + $0x30] sm:$0xff]
        %v606 = vld [vmem:[#allocation7 + $0x38] sm:$0xff]
        %v607 = vld [vmem:[#allocation7 + $0x40] sm:$0xff]
        %v608 = vld [vmem:[#allocation7 + $0x48] sm:$0xff]
        %v609 = vld [vmem:[#allocation7 + $0x50] sm:$0xff]
        %v610 = vld [vmem:[#allocation7 + $0x58] sm:$0xff]
        %v611 = vld [vmem:[#allocation7 + $0x60] sm:$0xff]
        %v612 = vld [vmem:[#allocation7 + $0x68] sm:$0xff]
        %v613 = vld [vmem:[#allocation7 + $0x70] sm:$0xff]
        %v614 = vld [vmem:[#allocation7 + $0x78] sm:$0xff]
        %v615 = vld [vmem:[#allocation7 + $0x80] sm:$0xff]
        %v616 = vld [vmem:[#allocation7 + $0x88] sm:$0xff]
        %v617 = vld [vmem:[#allocation7 + $0x90] sm:$0xff]
        %v618 = vld [vmem:[#allocation7 + $0x98] sm:$0xff]
        %v619 = vld [vmem:[#allocation7 + $0xa0] sm:$0xff]
        %v620 = vld [vmem:[#allocation7 + $0xa8] sm:$0xff]
        %v621 = vld [vmem:[#allocation7 + $0xb0] sm:$0xff]
        %v622 = vld [vmem:[#allocation7 + $0xb8] sm:$0xff]
        %v623 = vld [vmem:[#allocation7 + $0xc0] sm:$0xff]
        %v624 = vld [vmem:[#allocation7 + $0xc8] sm:$0xff]
        %v625 = vld [vmem:[#allocation7 + $0xd0] sm:$0xff]
        %v626 = vld [vmem:[#allocation7 + $0xd8] sm:$0xff]
        %v627 = vld [vmem:[#allocation7 + $0xe0] sm:$0xff]
        %v628 = vld [vmem:[#allocation7 + $0xe8] sm:$0xff]
        %v629 = vld [vmem:[#allocation7 + $0xf0] sm:$0xff]
        %v630 = vld [vmem:[#allocation7 + $0xf8] sm:$0xff]
        %v631 = vld [vmem:[#allocation7 + $0x100] sm:$0xff]
        %v632 = vld [vmem:[#allocation7 + $0x108] sm:$0xff]
        %v633 = vld [vmem:[#allocation7 + $0x110] sm:$0xff]
        %v634 = vld [vmem:[#allocation7 + $0x118] sm:$0xff]
        %v635 = vld [vmem:[#allocation7 + $0x120] sm:$0xff]
        %v636 = vld [vmem:[#allocation7 + $0x128] sm:$0xff]
        %v637 = vld [vmem:[#allocation7 + $0x130] sm:$0xff]
        %v638 = vld [vmem:[#allocation7 + $0x138] sm:$0xff]
        %v639 = vld [vmem:[#allocation7 + $0x140] sm:$0xff]
        %v640 = vld [vmem:[#allocation7 + $0x148] sm:$0xff]
        %v641 = vld [vmem:[#allocation7 + $0x150] sm:$0xff]
        %v642 = vld [vmem:[#allocation7 + $0x158] sm:$0xff]
        %v643 = vld [vmem:[#allocation7 + $0x160] sm:$0xff]
        %v644 = vld [vmem:[#allocation7 + $0x168] sm:$0xff]
        %v645 = vld [vmem:[#allocation7 + $0x170] sm:$0xff]
        %v646 = vld [vmem:[#allocation7 + $0x178] sm:$0xff]
        %v647 = vld [vmem:[#allocation7 + $0x180] sm:$0xff]
        %v648 = vld [vmem:[#allocation7 + $0x188] sm:$0xff]
        %v649 = vld [vmem:[#allocation7 + $0x190] sm:$0xff]
        %v650 = vld [vmem:[#allocation7 + $0x198] sm:$0xff]
        %v651 = vld [vmem:[#allocation7 + $0x1a0] sm:$0xff]
        %v652 = vld [vmem:[#allocation7 + $0x1a8] sm:$0xff]
        %v653 = vld [vmem:[#allocation7 + $0x1b0] sm:$0xff]
        %v654 = vld [vmem:[#allocation7 + $0x1b8] sm:$0xff]
        %v655 = vld [vmem:[#allocation7 + $0x1c0] sm:$0xff]
        %v656 = vld [vmem:[#allocation7 + $0x1c8] sm:$0xff]
        %v657 = vld [vmem:[#allocation7 + $0x1d0] sm:$0xff]
        %v658 = vld [vmem:[#allocation7 + $0x1d8] sm:$0xff]
        %v659 = vld [vmem:[#allocation7 + $0x1e0] sm:$0xff]
        %v660 = vld [vmem:[#allocation7 + $0x1e8] sm:$0xff]
        %v661 = vld [vmem:[#allocation7 + $0x1f0] sm:$0xff]
        %v662 = vld [vmem:[#allocation7 + $0x1f8] sm:$0xff]
        %663 = vmatprep.subr.mxu0 %v600
        %664 = vmatpush1.msra.mxu0 %v599
        %665 = vmatprep.subr.mxu0 %v602
        %666 = vmatpush1.msra.mxu0 %v601
        %667 = vmatprep.subr.mxu0 %v604
        %668 = vmatpush1.msra.mxu0 %v603
        %669 = vmatprep.subr.mxu0 %v606
        %670 = vmatpush1.msra.mxu0 %v605
        %671 = vmatprep.subr.mxu0 %v608
        %672 = vmatpush1.msra.mxu0 %v607
        %673 = vmatprep.subr.mxu0 %v610
        %674 = vmatpush1.msra.mxu0 %v609
        %675 = vmatprep.subr.mxu0 %v612
        %676 = vmatpush1.msra.mxu0 %v611
        %677 = vmatprep.subr.mxu0 %v614
        %678 = vmatpush1.msra.mxu0 %v613
        %679 = vmatprep.subr.mxu0 %v616
        %680 = vmatpush1.msra.mxu0 %v615
        %681 = vmatprep.subr.mxu0 %v618
        %682 = vmatpush1.msra.mxu0 %v617
        %683 = vmatprep.subr.mxu0 %v620
        %684 = vmatpush1.msra.mxu0 %v619
        %685 = vmatprep.subr.mxu0 %v622
        %686 = vmatpush1.msra.mxu0 %v621
        %687 = vmatprep.subr.mxu0 %v624
        %688 = vmatpush1.msra.mxu0 %v623
        %689 = vmatprep.subr.mxu0 %v626
        %690 = vmatpush1.msra.mxu0 %v625
        %691 = vmatprep.subr.mxu0 %v628
        %692 = vmatpush1.msra.mxu0 %v627
        %693 = vmatprep.subr.mxu0 %v630
        %694 = vmatpush1.msra.mxu0 %v629
        %695 = vmatprep.subr.mxu0 %v632
        %696 = vmatpush1.msra.mxu0 %v631
        %697 = vmatprep.subr.mxu0 %v634
        %698 = vmatpush1.msra.mxu0 %v633
        %699 = vmatprep.subr.mxu0 %v636
        %700 = vmatpush1.msra.mxu0 %v635
        %701 = vmatprep.subr.mxu0 %v638
        %702 = vmatpush1.msra.mxu0 %v637
        %703 = vmatprep.subr.mxu0 %v640
        %704 = vmatpush1.msra.mxu0 %v639
        %705 = vmatprep.subr.mxu0 %v642
        %706 = vmatpush1.msra.mxu0 %v641
        %707 = vmatprep.subr.mxu0 %v644
        %708 = vmatpush1.msra.mxu0 %v643
        %709 = vmatprep.subr.mxu0 %v646
        %710 = vmatpush1.msra.mxu0 %v645
        %711 = vmatprep.subr.mxu0 %v648
        %712 = vmatpush1.msra.mxu0 %v647
        %713 = vmatprep.subr.mxu0 %v650
        %714 = vmatpush1.msra.mxu0 %v649
        %715 = vmatprep.subr.mxu0 %v652
        %716 = vmatpush1.msra.mxu0 %v651
        %717 = vmatprep.subr.mxu0 %v654
        %718 = vmatpush1.msra.mxu0 %v653
        %719 = vmatprep.subr.mxu0 %v656
        %720 = vmatpush1.msra.mxu0 %v655
        %721 = vmatprep.subr.mxu0 %v658
        %722 = vmatpush1.msra.mxu0 %v657
        %723 = vmatprep.subr.mxu0 %v660
        %724 = vmatpush1.msra.mxu0 %v659
        %725 = vmatprep.subr.mxu0 %v662
        %726 = vmatpush1.msra.mxu0 %v661
        %727 = vmatprep.mubr.f32.mxu0 %v598
        %728 = vmatmul.mubr.f32.gmra.mrb[0].mxu0 %v597
        %v729 = vpop.f32.mrb[0].mxu0
        %v730 = vadd.f32 0.0, %v729
        %v731 = vpop.f32.mrb[0].mxu0
        %v732 = vadd.f32 0.0, %v731
        %733 = vdwg.mxu0
        %v734 = vld [vmem:[%s6] sm:$0xff]
        %s735 = scalar_lea.vmem [#allocation7], 512
        %v736 = vld [vmem:[%s735] sm:$0xff]
        %v737 = vld [vmem:[%s735 + $0x8] sm:$0xff]
        %v738 = vld [vmem:[%s735 + $0x10] sm:$0xff]
        %v739 = vld [vmem:[%s735 + $0x18] sm:$0xff]
        %v740 = vld [vmem:[%s735 + $0x20] sm:$0xff]
        %v741 = vld [vmem:[%s735 + $0x28] sm:$0xff]
        %v742 = vld [vmem:[%s735 + $0x30] sm:$0xff]
        %v743 = vld [vmem:[%s735 + $0x38] sm:$0xff]
        %v744 = vld [vmem:[%s735 + $0x40] sm:$0xff]
        %v745 = vld [vmem:[%s735 + $0x48] sm:$0xff]
        %v746 = vld [vmem:[%s735 + $0x50] sm:$0xff]
        %v747 = vld [vmem:[%s735 + $0x58] sm:$0xff]
        %v748 = vld [vmem:[%s735 + $0x60] sm:$0xff]
        %v749 = vld [vmem:[%s735 + $0x68] sm:$0xff]
        %v750 = vld [vmem:[%s735 + $0x70] sm:$0xff]
        %v751 = vld [vmem:[%s735 + $0x78] sm:$0xff]
        %v752 = vld [vmem:[%s735 + $0x80] sm:$0xff]
        %v753 = vld [vmem:[%s735 + $0x88] sm:$0xff]
        %v754 = vld [vmem:[%s735 + $0x90] sm:$0xff]
        %v755 = vld [vmem:[%s735 + $0x98] sm:$0xff]
        %v756 = vld [vmem:[%s735 + $0xa0] sm:$0xff]
        %v757 = vld [vmem:[%s735 + $0xa8] sm:$0xff]
        %v758 = vld [vmem:[%s735 + $0xb0] sm:$0xff]
        %v759 = vld [vmem:[%s735 + $0xb8] sm:$0xff]
        %v760 = vld [vmem:[%s735 + $0xc0] sm:$0xff]
        %v761 = vld [vmem:[%s735 + $0xc8] sm:$0xff]
        %v762 = vld [vmem:[%s735 + $0xd0] sm:$0xff]
        %v763 = vld [vmem:[%s735 + $0xd8] sm:$0xff]
        %v764 = vld [vmem:[%s735 + $0xe0] sm:$0xff]
        %v765 = vld [vmem:[%s735 + $0xe8] sm:$0xff]
        %v766 = vld [vmem:[%s735 + $0xf0] sm:$0xff]
        %v767 = vld [vmem:[%s735 + $0xf8] sm:$0xff]
        %v768 = vld [vmem:[%s735 + $0x100] sm:$0xff]
        %v769 = vld [vmem:[%s735 + $0x108] sm:$0xff]
        %v770 = vld [vmem:[%s735 + $0x110] sm:$0xff]
        %v771 = vld [vmem:[%s735 + $0x118] sm:$0xff]
        %v772 = vld [vmem:[%s735 + $0x120] sm:$0xff]
        %v773 = vld [vmem:[%s735 + $0x128] sm:$0xff]
        %v774 = vld [vmem:[%s735 + $0x130] sm:$0xff]
        %v775 = vld [vmem:[%s735 + $0x138] sm:$0xff]
        %v776 = vld [vmem:[%s735 + $0x140] sm:$0xff]
        %v777 = vld [vmem:[%s735 + $0x148] sm:$0xff]
        %v778 = vld [vmem:[%s735 + $0x150] sm:$0xff]
        %v779 = vld [vmem:[%s735 + $0x158] sm:$0xff]
        %v780 = vld [vmem:[%s735 + $0x160] sm:$0xff]
        %v781 = vld [vmem:[%s735 + $0x168] sm:$0xff]
        %v782 = vld [vmem:[%s735 + $0x170] sm:$0xff]
        %v783 = vld [vmem:[%s735 + $0x178] sm:$0xff]
        %v784 = vld [vmem:[%s735 + $0x180] sm:$0xff]
        %v785 = vld [vmem:[%s735 + $0x188] sm:$0xff]
        %v786 = vld [vmem:[%s735 + $0x190] sm:$0xff]
        %v787 = vld [vmem:[%s735 + $0x198] sm:$0xff]
        %v788 = vld [vmem:[%s735 + $0x1a0] sm:$0xff]
        %v789 = vld [vmem:[%s735 + $0x1a8] sm:$0xff]
        %v790 = vld [vmem:[%s735 + $0x1b0] sm:$0xff]
        %v791 = vld [vmem:[%s735 + $0x1b8] sm:$0xff]
        %v792 = vld [vmem:[%s735 + $0x1c0] sm:$0xff]
        %v793 = vld [vmem:[%s735 + $0x1c8] sm:$0xff]
        %v794 = vld [vmem:[%s735 + $0x1d0] sm:$0xff]
        %v795 = vld [vmem:[%s735 + $0x1d8] sm:$0xff]
        %v796 = vld [vmem:[%s735 + $0x1e0] sm:$0xff]
        %v797 = vld [vmem:[%s735 + $0x1e8] sm:$0xff]
        %v798 = vld [vmem:[%s735 + $0x1f0] sm:$0xff]
        %v799 = vld [vmem:[%s735 + $0x1f8] sm:$0xff]
        %800 = vmatprep.subr.mxu0 %v737
        %801 = vmatpush1.msra.mxu0 %v736
        %802 = vmatprep.subr.mxu0 %v739
        %803 = vmatpush1.msra.mxu0 %v738
        %804 = vmatprep.subr.mxu0 %v741
        %805 = vmatpush1.msra.mxu0 %v740
        %806 = vmatprep.subr.mxu0 %v743
        %807 = vmatpush1.msra.mxu0 %v742
        %808 = vmatprep.subr.mxu0 %v745
        %809 = vmatpush1.msra.mxu0 %v744
        %810 = vmatprep.subr.mxu0 %v747
        %811 = vmatpush1.msra.mxu0 %v746
        %812 = vmatprep.subr.mxu0 %v749
        %813 = vmatpush1.msra.mxu0 %v748
        %814 = vmatprep.subr.mxu0 %v751
        %815 = vmatpush1.msra.mxu0 %v750
        %816 = vmatprep.subr.mxu0 %v753
        %817 = vmatpush1.msra.mxu0 %v752
        %818 = vmatprep.subr.mxu0 %v755
        %819 = vmatpush1.msra.mxu0 %v754
        %820 = vmatprep.subr.mxu0 %v757
        %821 = vmatpush1.msra.mxu0 %v756
        %822 = vmatprep.subr.mxu0 %v759
        %823 = vmatpush1.msra.mxu0 %v758
        %824 = vmatprep.subr.mxu0 %v761
        %825 = vmatpush1.msra.mxu0 %v760
        %826 = vmatprep.subr.mxu0 %v763
        %827 = vmatpush1.msra.mxu0 %v762
        %828 = vmatprep.subr.mxu0 %v765
        %829 = vmatpush1.msra.mxu0 %v764
        %830 = vmatprep.subr.mxu0 %v767
        %831 = vmatpush1.msra.mxu0 %v766
        %832 = vmatprep.subr.mxu0 %v769
        %833 = vmatpush1.msra.mxu0 %v768
        %834 = vmatprep.subr.mxu0 %v771
        %835 = vmatpush1.msra.mxu0 %v770
        %836 = vmatprep.subr.mxu0 %v773
        %837 = vmatpush1.msra.mxu0 %v772
        %838 = vmatprep.subr.mxu0 %v775
        %839 = vmatpush1.msra.mxu0 %v774
        %840 = vmatprep.subr.mxu0 %v777
        %841 = vmatpush1.msra.mxu0 %v776
        %842 = vmatprep.subr.mxu0 %v779
        %843 = vmatpush1.msra.mxu0 %v778
        %844 = vmatprep.subr.mxu0 %v781
        %845 = vmatpush1.msra.mxu0 %v780
        %846 = vmatprep.subr.mxu0 %v783
        %847 = vmatpush1.msra.mxu0 %v782
        %848 = vmatprep.subr.mxu0 %v785
        %849 = vmatpush1.msra.mxu0 %v784
        %850 = vmatprep.subr.mxu0 %v787
        %851 = vmatpush1.msra.mxu0 %v786
        %852 = vmatprep.subr.mxu0 %v789
        %853 = vmatpush1.msra.mxu0 %v788
        %854 = vmatprep.subr.mxu0 %v791
        %855 = vmatpush1.msra.mxu0 %v790
        %856 = vmatprep.subr.mxu0 %v793
        %857 = vmatpush1.msra.mxu0 %v792
        %858 = vmatprep.subr.mxu0 %v795
        %859 = vmatpush1.msra.mxu0 %v794
        %860 = vmatprep.subr.mxu0 %v797
        %861 = vmatpush1.msra.mxu0 %v796
        %862 = vmatprep.subr.mxu0 %v799
        %863 = vmatpush1.msra.mxu0 %v798
        %864 = vmatprep.mubr.f32.mxu0 %v598
        %865 = vmatmul.mubr.f32.gmra.mrb[0].mxu0 %v597
        %v866 = vpop.f32.mrb[0].mxu0
        %v867 = vadd.f32 0.0, %v866
        %v868 = vpop.f32.mrb[0].mxu0
        %v869 = vadd.f32 0.0, %v868
        %870 = vdwg.mxu0
        %s871 = scalar_lea.vmem %s6, 8
        %v872 = vld [vmem:[%s871] sm:$0xff]
        %vm873 = vcmask 23552
        %v875 = vsel %vm873, %v872, 0
        %vm877 = vcmask 1042432
        %v879 = vsel %vm877, %v867, 0
        %v882 = vsel %vm877, %v869, 0
        %884 = vmatprep.subr.mxu0 %v882
        %885 = vmatpush1.msra.mxu0 %v879
        %886 = vmatprep.subr.mxu0 0.0
        %887 = vmatpush1.msra.mxu0 0.0
        %888 = vmatprep.subr.mxu0 0.0
        %889 = vmatpush1.msra.mxu0 0.0
        %890 = vmatprep.subr.mxu0 0.0
        %891 = vmatpush1.msra.mxu0 0.0
        %892 = vmatprep.subr.mxu0 0.0
        %893 = vmatpush1.msra.mxu0 0.0
        %894 = vmatprep.subr.mxu0 0.0
        %895 = vmatpush1.msra.mxu0 0.0
        %896 = vmatprep.subr.mxu0 0.0
        %897 = vmatpush1.msra.mxu0 0.0
        %898 = vmatprep.subr.mxu0 0.0
        %899 = vmatpush1.msra.mxu0 0.0
        %900 = vmatprep.subr.mxu0 0.0
        %901 = vmatpush1.msra.mxu0 0.0
        %902 = vmatprep.subr.mxu0 0.0
        %903 = vmatpush1.msra.mxu0 0.0
        %904 = vmatprep.subr.mxu0 0.0
        %905 = vmatpush1.msra.mxu0 0.0
        %906 = vmatprep.subr.mxu0 0.0
        %907 = vmatpush1.msra.mxu0 0.0
        %908 = vmatprep.subr.mxu0 0.0
        %909 = vmatpush1.msra.mxu0 0.0
        %910 = vmatprep.subr.mxu0 0.0
        %911 = vmatpush1.msra.mxu0 0.0
        %912 = vmatprep.subr.mxu0 0.0
        %913 = vmatpush1.msra.mxu0 0.0
        %914 = vmatprep.subr.mxu0 0.0
        %915 = vmatpush1.msra.mxu0 0.0
        %916 = vmatprep.subr.mxu0 0.0
        %917 = vmatpush1.msra.mxu0 0.0
        %918 = vmatprep.subr.mxu0 0.0
        %919 = vmatpush1.msra.mxu0 0.0
        %920 = vmatprep.subr.mxu0 0.0
        %921 = vmatpush1.msra.mxu0 0.0
        %922 = vmatprep.subr.mxu0 0.0
        %923 = vmatpush1.msra.mxu0 0.0
        %924 = vmatprep.subr.mxu0 0.0
        %925 = vmatpush1.msra.mxu0 0.0
        %926 = vmatprep.subr.mxu0 0.0
        %927 = vmatpush1.msra.mxu0 0.0
        %928 = vmatprep.subr.mxu0 0.0
        %929 = vmatpush1.msra.mxu0 0.0
        %930 = vmatprep.subr.mxu0 0.0
        %931 = vmatpush1.msra.mxu0 0.0
        %932 = vmatprep.subr.mxu0 0.0
        %933 = vmatpush1.msra.mxu0 0.0
        %934 = vmatprep.subr.mxu0 0.0
        %935 = vmatpush1.msra.mxu0 0.0
        %936 = vmatprep.subr.mxu0 0.0
        %937 = vmatpush1.msra.mxu0 0.0
        %938 = vmatprep.subr.mxu0 0.0
        %939 = vmatpush1.msra.mxu0 0.0
        %940 = vmatprep.subr.mxu0 0.0
        %941 = vmatpush1.msra.mxu0 0.0
        %942 = vmatprep.subr.mxu0 0.0
        %943 = vmatpush1.msra.mxu0 0.0
        %944 = vmatprep.subr.mxu0 0.0
        %945 = vmatpush1.msra.mxu0 0.0
        %946 = vmatprep.subr.mxu0 0.0
        %947 = vmatpush1.msra.mxu0 0.0
        %948 = vmatprep.mubr.f32.mxu0 0.0
        %949 = vmatmul.mubr.f32.gmra.mrb[0].mxu0 %v875
        %v950 = vpop.f32.mrb[0].mxu0
        %v951 = vadd.f32 0.0, %v950
        %v952 = vpop.f32.mrb[0].mxu0
        %v953 = vadd.f32 0.0, %v952
        %954 = vdwg.mxu0
        %v956 = vsel %vm873, %v734, 0
        %v959 = vsel %vm877, %v730, 0
        %v962 = vsel %vm877, %v732, 0
        %964 = vmatprep.subr.mxu0 %v962
        %965 = vmatpush1.msra.mxu0 %v959
        %966 = vmatprep.subr.mxu0 0.0
        %967 = vmatpush1.msra.mxu0 0.0
        %968 = vmatprep.subr.mxu0 0.0
        %969 = vmatpush1.msra.mxu0 0.0
        %970 = vmatprep.subr.mxu0 0.0
        %971 = vmatpush1.msra.mxu0 0.0
        %972 = vmatprep.subr.mxu0 0.0
        %973 = vmatpush1.msra.mxu0 0.0
        %974 = vmatprep.subr.mxu0 0.0
        %975 = vmatpush1.msra.mxu0 0.0
        %976 = vmatprep.subr.mxu0 0.0
        %977 = vmatpush1.msra.mxu0 0.0
        %978 = vmatprep.subr.mxu0 0.0
        %979 = vmatpush1.msra.mxu0 0.0
        %980 = vmatprep.subr.mxu0 0.0
        %981 = vmatpush1.msra.mxu0 0.0
        %982 = vmatprep.subr.mxu0 0.0
        %983 = vmatpush1.msra.mxu0 0.0
        %984 = vmatprep.subr.mxu0 0.0
        %985 = vmatpush1.msra.mxu0 0.0
        %986 = vmatprep.subr.mxu0 0.0
        %987 = vmatpush1.msra.mxu0 0.0
        %988 = vmatprep.subr.mxu0 0.0
        %989 = vmatpush1.msra.mxu0 0.0
        %990 = vmatprep.subr.mxu0 0.0
        %991 = vmatpush1.msra.mxu0 0.0
        %992 = vmatprep.subr.mxu0 0.0
        %993 = vmatpush1.msra.mxu0 0.0
        %994 = vmatprep.subr.mxu0 0.0
        %995 = vmatpush1.msra.mxu0 0.0
        %996 = vmatprep.subr.mxu0 0.0
        %997 = vmatpush1.msra.mxu0 0.0
        %998 = vmatprep.subr.mxu0 0.0
        %999 = vmatpush1.msra.mxu0 0.0
        %1000 = vmatprep.subr.mxu0 0.0
        %1001 = vmatpush1.msra.mxu0 0.0
        %1002 = vmatprep.subr.mxu0 0.0
        %1003 = vmatpush1.msra.mxu0 0.0
        %1004 = vmatprep.subr.mxu0 0.0
        %1005 = vmatpush1.msra.mxu0 0.0
        %1006 = vmatprep.subr.mxu0 0.0
        %1007 = vmatpush1.msra.mxu0 0.0
        %1008 = vmatprep.subr.mxu0 0.0
        %1009 = vmatpush1.msra.mxu0 0.0
        %1010 = vmatprep.subr.mxu0 0.0
        %1011 = vmatpush1.msra.mxu0 0.0
        %1012 = vmatprep.subr.mxu0 0.0
        %1013 = vmatpush1.msra.mxu0 0.0
        %1014 = vmatprep.subr.mxu0 0.0
        %1015 = vmatpush1.msra.mxu0 0.0
        %1016 = vmatprep.subr.mxu0 0.0
        %1017 = vmatpush1.msra.mxu0 0.0
        %1018 = vmatprep.subr.mxu0 0.0
        %1019 = vmatpush1.msra.mxu0 0.0
        %1020 = vmatprep.subr.mxu0 0.0
        %1021 = vmatpush1.msra.mxu0 0.0
        %1022 = vmatprep.subr.mxu0 0.0
        %1023 = vmatpush1.msra.mxu0 0.0
        %1024 = vmatprep.subr.mxu0 0.0
        %1025 = vmatpush1.msra.mxu0 0.0
        %1026 = vmatprep.subr.mxu0 0.0
        %1027 = vmatpush1.msra.mxu0 0.0
        %1028 = vmatprep.mubr.f32.mxu0 0.0
        %1029 = vmatmul.mubr.f32.gmra.mrb[0].mxu0 %v956
        %v1030 = vpop.f32.mrb[0].mxu0
        %v1031 = vadd.f32 %v951, %v1030
        %v1032 = vpop.f32.mrb[0].mxu0
        %v1033 = vadd.f32 %v953, %v1032
        %1034 = vdwg.mxu0
        %s1035 = scalar_lea.vmem [#allocation7], 1024
        %v1036 = vld [vmem:[%s1035] sm:$0xff]
        %v1037 = vld [vmem:[%s1035 + $0x8] sm:$0xff]
        %v1038 = vld [vmem:[%s1035 + $0x10] sm:$0xff]
        %v1039 = vld [vmem:[%s1035 + $0x18] sm:$0xff]
        %v1040 = vld [vmem:[%s1035 + $0x20] sm:$0xff]
        %v1041 = vld [vmem:[%s1035 + $0x28] sm:$0xff]
        %v1042 = vld [vmem:[%s1035 + $0x30] sm:$0xff]
        %v1043 = vld [vmem:[%s1035 + $0x38] sm:$0xff]
        %v1044 = vld [vmem:[%s1035 + $0x40] sm:$0xff]
        %v1045 = vld [vmem:[%s1035 + $0x48] sm:$0xff]
        %v1046 = vld [vmem:[%s1035 + $0x50] sm:$0xff]
        %v1047 = vld [vmem:[%s1035 + $0x58] sm:$0xff]
        %v1048 = vld [vmem:[%s1035 + $0x60] sm:$0xff]
        %v1049 = vld [vmem:[%s1035 + $0x68] sm:$0xff]
        %v1050 = vld [vmem:[%s1035 + $0x70] sm:$0xff]
        %v1051 = vld [vmem:[%s1035 + $0x78] sm:$0xff]
        %v1052 = vld [vmem:[%s1035 + $0x80] sm:$0xff]
        %v1053 = vld [vmem:[%s1035 + $0x88] sm:$0xff]
        %v1054 = vld [vmem:[%s1035 + $0x90] sm:$0xff]
        %v1055 = vld [vmem:[%s1035 + $0x98] sm:$0xff]
        %v1056 = vld [vmem:[%s1035 + $0xa0] sm:$0xff]
        %v1057 = vld [vmem:[%s1035 + $0xa8] sm:$0xff]
        %v1058 = vld [vmem:[%s1035 + $0xb0] sm:$0xff]
        %v1059 = vld [vmem:[%s1035 + $0xb8] sm:$0xff]
        %v1060 = vld [vmem:[%s1035 + $0xc0] sm:$0xff]
        %v1061 = vld [vmem:[%s1035 + $0xc8] sm:$0xff]
        %v1062 = vld [vmem:[%s1035 + $0xd0] sm:$0xff]
        %v1063 = vld [vmem:[%s1035 + $0xd8] sm:$0xff]
        %v1064 = vld [vmem:[%s1035 + $0xe0] sm:$0xff]
        %v1065 = vld [vmem:[%s1035 + $0xe8] sm:$0xff]
        %v1066 = vld [vmem:[%s1035 + $0xf0] sm:$0xff]
        %v1067 = vld [vmem:[%s1035 + $0xf8] sm:$0xff]
        %v1068 = vld [vmem:[%s1035 + $0x100] sm:$0xff]
        %v1069 = vld [vmem:[%s1035 + $0x108] sm:$0xff]
        %v1070 = vld [vmem:[%s1035 + $0x110] sm:$0xff]
        %v1071 = vld [vmem:[%s1035 + $0x118] sm:$0xff]
        %v1072 = vld [vmem:[%s1035 + $0x120] sm:$0xff]
        %v1073 = vld [vmem:[%s1035 + $0x128] sm:$0xff]
        %v1074 = vld [vmem:[%s1035 + $0x130] sm:$0xff]
        %v1075 = vld [vmem:[%s1035 + $0x138] sm:$0xff]
        %v1076 = vld [vmem:[%s1035 + $0x140] sm:$0xff]
        %v1077 = vld [vmem:[%s1035 + $0x148] sm:$0xff]
        %v1078 = vld [vmem:[%s1035 + $0x150] sm:$0xff]
        %v1079 = vld [vmem:[%s1035 + $0x158] sm:$0xff]
        %v1080 = vld [vmem:[%s1035 + $0x160] sm:$0xff]
        %v1081 = vld [vmem:[%s1035 + $0x168] sm:$0xff]
        %v1082 = vld [vmem:[%s1035 + $0x170] sm:$0xff]
        %v1083 = vld [vmem:[%s1035 + $0x178] sm:$0xff]
        %v1084 = vld [vmem:[%s1035 + $0x180] sm:$0xff]
        %v1085 = vld [vmem:[%s1035 + $0x188] sm:$0xff]
        %v1086 = vld [vmem:[%s1035 + $0x190] sm:$0xff]
        %v1087 = vld [vmem:[%s1035 + $0x198] sm:$0xff]
        %v1088 = vld [vmem:[%s1035 + $0x1a0] sm:$0xff]
        %v1089 = vld [vmem:[%s1035 + $0x1a8] sm:$0xff]
        %v1090 = vld [vmem:[%s1035 + $0x1b0] sm:$0xff]
        %v1091 = vld [vmem:[%s1035 + $0x1b8] sm:$0xff]
        %v1092 = vld [vmem:[%s1035 + $0x1c0] sm:$0xff]
        %v1093 = vld [vmem:[%s1035 + $0x1c8] sm:$0xff]
        %v1094 = vld [vmem:[%s1035 + $0x1d0] sm:$0xff]
        %v1095 = vld [vmem:[%s1035 + $0x1d8] sm:$0xff]
        %v1096 = vld [vmem:[%s1035 + $0x1e0] sm:$0xff]
        %v1097 = vld [vmem:[%s1035 + $0x1e8] sm:$0xff]
        %v1098 = vld [vmem:[%s1035 + $0x1f0] sm:$0xff]
        %v1099 = vld [vmem:[%s1035 + $0x1f8] sm:$0xff]
        %1100 = vmatprep.subr.mxu0 %v1037
        %1101 = vmatpush1.msra.mxu0 %v1036
        %1102 = vmatprep.subr.mxu0 %v1039
        %1103 = vmatpush1.msra.mxu0 %v1038
        %1104 = vmatprep.subr.mxu0 %v1041
        %1105 = vmatpush1.msra.mxu0 %v1040
        %1106 = vmatprep.subr.mxu0 %v1043
        %1107 = vmatpush1.msra.mxu0 %v1042
        %1108 = vmatprep.subr.mxu0 %v1045
        %1109 = vmatpush1.msra.mxu0 %v1044
        %1110 = vmatprep.subr.mxu0 %v1047
        %1111 = vmatpush1.msra.mxu0 %v1046
        %1112 = vmatprep.subr.mxu0 %v1049
        %1113 = vmatpush1.msra.mxu0 %v1048
        %1114 = vmatprep.subr.mxu0 %v1051
        %1115 = vmatpush1.msra.mxu0 %v1050
        %1116 = vmatprep.subr.mxu0 %v1053
        %1117 = vmatpush1.msra.mxu0 %v1052
        %1118 = vmatprep.subr.mxu0 %v1055
        %1119 = vmatpush1.msra.mxu0 %v1054
        %1120 = vmatprep.subr.mxu0 %v1057
        %1121 = vmatpush1.msra.mxu0 %v1056
        %1122 = vmatprep.subr.mxu0 %v1059
        %1123 = vmatpush1.msra.mxu0 %v1058
        %1124 = vmatprep.subr.mxu0 %v1061
        %1125 = vmatpush1.msra.mxu0 %v1060
        %1126 = vmatprep.subr.mxu0 %v1063
        %1127 = vmatpush1.msra.mxu0 %v1062
        %1128 = vmatprep.subr.mxu0 %v1065
        %1129 = vmatpush1.msra.mxu0 %v1064
        %1130 = vmatprep.subr.mxu0 %v1067
        %1131 = vmatpush1.msra.mxu0 %v1066
        %1132 = vmatprep.subr.mxu0 %v1069
        %1133 = vmatpush1.msra.mxu0 %v1068
        %1134 = vmatprep.subr.mxu0 %v1071
        %1135 = vmatpush1.msra.mxu0 %v1070
        %1136 = vmatprep.subr.mxu0 %v1073
        %1137 = vmatpush1.msra.mxu0 %v1072
        %1138 = vmatprep.subr.mxu0 %v1075
        %1139 = vmatpush1.msra.mxu0 %v1074
        %1140 = vmatprep.subr.mxu0 %v1077
        %1141 = vmatpush1.msra.mxu0 %v1076
        %1142 = vmatprep.subr.mxu0 %v1079
        %1143 = vmatpush1.msra.mxu0 %v1078
        %1144 = vmatprep.subr.mxu0 %v1081
        %1145 = vmatpush1.msra.mxu0 %v1080
        %1146 = vmatprep.subr.mxu0 %v1083
        %1147 = vmatpush1.msra.mxu0 %v1082
        %1148 = vmatprep.subr.mxu0 %v1085
        %1149 = vmatpush1.msra.mxu0 %v1084
        %1150 = vmatprep.subr.mxu0 %v1087
        %1151 = vmatpush1.msra.mxu0 %v1086
        %1152 = vmatprep.subr.mxu0 %v1089
        %1153 = vmatpush1.msra.mxu0 %v1088
        %1154 = vmatprep.subr.mxu0 %v1091
        %1155 = vmatpush1.msra.mxu0 %v1090
        %1156 = vmatprep.subr.mxu0 %v1093
        %1157 = vmatpush1.msra.mxu0 %v1092
        %1158 = vmatprep.subr.mxu0 %v1095
        %1159 = vmatpush1.msra.mxu0 %v1094
        %1160 = vmatprep.subr.mxu0 %v1097
        %1161 = vmatpush1.msra.mxu0 %v1096
        %1162 = vmatprep.subr.mxu0 %v1099
        %1163 = vmatpush1.msra.mxu0 %v1098
        %1164 = vmatprep.mubr.f32.mxu0 %v598
        %1165 = vmatmul.mubr.f32.gmra.mrb[0].mxu0 %v597
        %v1166 = vpop.f32.mrb[0].mxu0
        %v1167 = vadd.f32 0.0, %v1166
        %v1168 = vpop.f32.mrb[0].mxu0
        %v1169 = vadd.f32 0.0, %v1168
        %1170 = vdwg.mxu0
        %s1171 = scalar_lea.vmem %s6, 16
        %v1172 = vld [vmem:[%s1171] sm:$0xff]
        %v1174 = vsel %vm873, %v1172, 0
        %v1177 = vsel %vm877, %v1167, 0
        %v1180 = vsel %vm877, %v1169, 0
        %1182 = vmatprep.subr.mxu0 %v1180
        %1183 = vmatpush1.msra.mxu0 %v1177
        %1184 = vmatprep.subr.mxu0 0.0
        %1185 = vmatpush1.msra.mxu0 0.0
        %1186 = vmatprep.subr.mxu0 0.0
        %1187 = vmatpush1.msra.mxu0 0.0
        %1188 = vmatprep.subr.mxu0 0.0
        %1189 = vmatpush1.msra.mxu0 0.0
        %1190 = vmatprep.subr.mxu0 0.0
        %1191 = vmatpush1.msra.mxu0 0.0
        %1192 = vmatprep.subr.mxu0 0.0
        %1193 = vmatpush1.msra.mxu0 0.0
        %1194 = vmatprep.subr.mxu0 0.0
        %1195 = vmatpush1.msra.mxu0 0.0
        %1196 = vmatprep.subr.mxu0 0.0
        %1197 = vmatpush1.msra.mxu0 0.0
        %1198 = vmatprep.subr.mxu0 0.0
        %1199 = vmatpush1.msra.mxu0 0.0
        %1200 = vmatprep.subr.mxu0 0.0
        %1201 = vmatpush1.msra.mxu0 0.0
        %1202 = vmatprep.subr.mxu0 0.0
        %1203 = vmatpush1.msra.mxu0 0.0
        %1204 = vmatprep.subr.mxu0 0.0
        %1205 = vmatpush1.msra.mxu0 0.0
        %1206 = vmatprep.subr.mxu0 0.0
        %1207 = vmatpush1.msra.mxu0 0.0
        %1208 = vmatprep.subr.mxu0 0.0
        %1209 = vmatpush1.msra.mxu0 0.0
        %1210 = vmatprep.subr.mxu0 0.0
        %1211 = vmatpush1.msra.mxu0 0.0
        %1212 = vmatprep.subr.mxu0 0.0
        %1213 = vmatpush1.msra.mxu0 0.0
        %1214 = vmatprep.subr.mxu0 0.0
        %1215 = vmatpush1.msra.mxu0 0.0
        %1216 = vmatprep.subr.mxu0 0.0
        %1217 = vmatpush1.msra.mxu0 0.0
        %1218 = vmatprep.subr.mxu0 0.0
        %1219 = vmatpush1.msra.mxu0 0.0
        %1220 = vmatprep.subr.mxu0 0.0
        %1221 = vmatpush1.msra.mxu0 0.0
        %1222 = vmatprep.subr.mxu0 0.0
        %1223 = vmatpush1.msra.mxu0 0.0
        %1224 = vmatprep.subr.mxu0 0.0
        %1225 = vmatpush1.msra.mxu0 0.0
        %1226 = vmatprep.subr.mxu0 0.0
        %1227 = vmatpush1.msra.mxu0 0.0
        %1228 = vmatprep.subr.mxu0 0.0
        %1229 = vmatpush1.msra.mxu0 0.0
        %1230 = vmatprep.subr.mxu0 0.0
        %1231 = vmatpush1.msra.mxu0 0.0
        %1232 = vmatprep.subr.mxu0 0.0
        %1233 = vmatpush1.msra.mxu0 0.0
        %1234 = vmatprep.subr.mxu0 0.0
        %1235 = vmatpush1.msra.mxu0 0.0
        %1236 = vmatprep.subr.mxu0 0.0
        %1237 = vmatpush1.msra.mxu0 0.0
        %1238 = vmatprep.subr.mxu0 0.0
        %1239 = vmatpush1.msra.mxu0 0.0
        %1240 = vmatprep.subr.mxu0 0.0
        %1241 = vmatpush1.msra.mxu0 0.0
        %1242 = vmatprep.subr.mxu0 0.0
        %1243 = vmatpush1.msra.mxu0 0.0
        %1244 = vmatprep.subr.mxu0 0.0
        %1245 = vmatpush1.msra.mxu0 0.0
        %1246 = vmatprep.mubr.f32.mxu0 0.0
        %1247 = vmatmul.mubr.f32.gmra.mrb[0].mxu0 %v1174
        %v1248 = vpop.f32.mrb[0].mxu0
        %v1249 = vadd.f32 0.0, %v1248
        %v1250 = vpop.f32.mrb[0].mxu0
        %v1251 = vadd.f32 0.0, %v1250
        %1252 = vdwg.mxu0
        %v1253 = vadd.f32 %v1031, %v1249
        %v1254 = vadd.f32 %v1033, %v1251
        %s1255 = scalar_lea.vmem [#allocation7], 1536
        %v1256 = vld [vmem:[%s1255] sm:$0xff]
        %v1257 = vld [vmem:[%s1255 + $0x8] sm:$0xff]
        %v1258 = vld [vmem:[%s1255 + $0x10] sm:$0xff]
        %v1259 = vld [vmem:[%s1255 + $0x18] sm:$0xff]
        %v1260 = vld [vmem:[%s1255 + $0x20] sm:$0xff]
        %v1261 = vld [vmem:[%s1255 + $0x28] sm:$0xff]
        %v1262 = vld [vmem:[%s1255 + $0x30] sm:$0xff]
        %v1263 = vld [vmem:[%s1255 + $0x38] sm:$0xff]
        %v1264 = vld [vmem:[%s1255 + $0x40] sm:$0xff]
        %v1265 = vld [vmem:[%s1255 + $0x48] sm:$0xff]
        %v1266 = vld [vmem:[%s1255 + $0x50] sm:$0xff]
        %v1267 = vld [vmem:[%s1255 + $0x58] sm:$0xff]
        %v1268 = vld [vmem:[%s1255 + $0x60] sm:$0xff]
        %v1269 = vld [vmem:[%s1255 + $0x68] sm:$0xff]
        %v1270 = vld [vmem:[%s1255 + $0x70] sm:$0xff]
        %v1271 = vld [vmem:[%s1255 + $0x78] sm:$0xff]
        %v1272 = vld [vmem:[%s1255 + $0x80] sm:$0xff]
        %v1273 = vld [vmem:[%s1255 + $0x88] sm:$0xff]
        %v1274 = vld [vmem:[%s1255 + $0x90] sm:$0xff]
        %v1275 = vld [vmem:[%s1255 + $0x98] sm:$0xff]
        %v1276 = vld [vmem:[%s1255 + $0xa0] sm:$0xff]
        %v1277 = vld [vmem:[%s1255 + $0xa8] sm:$0xff]
        %v1278 = vld [vmem:[%s1255 + $0xb0] sm:$0xff]
        %v1279 = vld [vmem:[%s1255 + $0xb8] sm:$0xff]
        %v1280 = vld [vmem:[%s1255 + $0xc0] sm:$0xff]
        %v1281 = vld [vmem:[%s1255 + $0xc8] sm:$0xff]
        %v1282 = vld [vmem:[%s1255 + $0xd0] sm:$0xff]
        %v1283 = vld [vmem:[%s1255 + $0xd8] sm:$0xff]
        %v1284 = vld [vmem:[%s1255 + $0xe0] sm:$0xff]
        %v1285 = vld [vmem:[%s1255 + $0xe8] sm:$0xff]
        %v1286 = vld [vmem:[%s1255 + $0xf0] sm:$0xff]
        %v1287 = vld [vmem:[%s1255 + $0xf8] sm:$0xff]
        %v1288 = vld [vmem:[%s1255 + $0x100] sm:$0xff]
        %v1289 = vld [vmem:[%s1255 + $0x108] sm:$0xff]
        %v1290 = vld [vmem:[%s1255 + $0x110] sm:$0xff]
        %v1291 = vld [vmem:[%s1255 + $0x118] sm:$0xff]
        %v1292 = vld [vmem:[%s1255 + $0x120] sm:$0xff]
        %v1293 = vld [vmem:[%s1255 + $0x128] sm:$0xff]
        %v1294 = vld [vmem:[%s1255 + $0x130] sm:$0xff]
        %v1295 = vld [vmem:[%s1255 + $0x138] sm:$0xff]
        %v1296 = vld [vmem:[%s1255 + $0x140] sm:$0xff]
        %v1297 = vld [vmem:[%s1255 + $0x148] sm:$0xff]
        %v1298 = vld [vmem:[%s1255 + $0x150] sm:$0xff]
        %v1299 = vld [vmem:[%s1255 + $0x158] sm:$0xff]
        %v1300 = vld [vmem:[%s1255 + $0x160] sm:$0xff]
        %v1301 = vld [vmem:[%s1255 + $0x168] sm:$0xff]
        %v1302 = vld [vmem:[%s1255 + $0x170] sm:$0xff]
        %v1303 = vld [vmem:[%s1255 + $0x178] sm:$0xff]
        %v1304 = vld [vmem:[%s1255 + $0x180] sm:$0xff]
        %v1305 = vld [vmem:[%s1255 + $0x188] sm:$0xff]
        %v1306 = vld [vmem:[%s1255 + $0x190] sm:$0xff]
        %v1307 = vld [vmem:[%s1255 + $0x198] sm:$0xff]
        %v1308 = vld [vmem:[%s1255 + $0x1a0] sm:$0xff]
        %v1309 = vld [vmem:[%s1255 + $0x1a8] sm:$0xff]
        %v1310 = vld [vmem:[%s1255 + $0x1b0] sm:$0xff]
        %v1311 = vld [vmem:[%s1255 + $0x1b8] sm:$0xff]
        %v1312 = vld [vmem:[%s1255 + $0x1c0] sm:$0xff]
        %v1313 = vld [vmem:[%s1255 + $0x1c8] sm:$0xff]
        %v1314 = vld [vmem:[%s1255 + $0x1d0] sm:$0xff]
        %v1315 = vld [vmem:[%s1255 + $0x1d8] sm:$0xff]
        %v1316 = vld [vmem:[%s1255 + $0x1e0] sm:$0xff]
        %v1317 = vld [vmem:[%s1255 + $0x1e8] sm:$0xff]
        %v1318 = vld [vmem:[%s1255 + $0x1f0] sm:$0xff]
        %v1319 = vld [vmem:[%s1255 + $0x1f8] sm:$0xff]
        %1320 = vmatprep.subr.mxu0 %v1257
        %1321 = vmatpush1.msra.mxu0 %v1256
        %1322 = vmatprep.subr.mxu0 %v1259
        %1323 = vmatpush1.msra.mxu0 %v1258
        %1324 = vmatprep.subr.mxu0 %v1261
        %1325 = vmatpush1.msra.mxu0 %v1260
        %1326 = vmatprep.subr.mxu0 %v1263
        %1327 = vmatpush1.msra.mxu0 %v1262
        %1328 = vmatprep.subr.mxu0 %v1265
        %1329 = vmatpush1.msra.mxu0 %v1264
        %1330 = vmatprep.subr.mxu0 %v1267
        %1331 = vmatpush1.msra.mxu0 %v1266
        %1332 = vmatprep.subr.mxu0 %v1269
        %1333 = vmatpush1.msra.mxu0 %v1268
        %1334 = vmatprep.subr.mxu0 %v1271
        %1335 = vmatpush1.msra.mxu0 %v1270
        %1336 = vmatprep.subr.mxu0 %v1273
        %1337 = vmatpush1.msra.mxu0 %v1272
        %1338 = vmatprep.subr.mxu0 %v1275
        %1339 = vmatpush1.msra.mxu0 %v1274
        %1340 = vmatprep.subr.mxu0 %v1277
        %1341 = vmatpush1.msra.mxu0 %v1276
        %1342 = vmatprep.subr.mxu0 %v1279
        %1343 = vmatpush1.msra.mxu0 %v1278
        %1344 = vmatprep.subr.mxu0 %v1281
        %1345 = vmatpush1.msra.mxu0 %v1280
        %1346 = vmatprep.subr.mxu0 %v1283
        %1347 = vmatpush1.msra.mxu0 %v1282
        %1348 = vmatprep.subr.mxu0 %v1285
        %1349 = vmatpush1.msra.mxu0 %v1284
        %1350 = vmatprep.subr.mxu0 %v1287
        %1351 = vmatpush1.msra.mxu0 %v1286
        %1352 = vmatprep.subr.mxu0 %v1289
        %1353 = vmatpush1.msra.mxu0 %v1288
        %1354 = vmatprep.subr.mxu0 %v1291
        %1355 = vmatpush1.msra.mxu0 %v1290
        %1356 = vmatprep.subr.mxu0 %v1293
        %1357 = vmatpush1.msra.mxu0 %v1292
        %1358 = vmatprep.subr.mxu0 %v1295
        %1359 = vmatpush1.msra.mxu0 %v1294
        %1360 = vmatprep.subr.mxu0 %v1297
        %1361 = vmatpush1.msra.mxu0 %v1296
        %1362 = vmatprep.subr.mxu0 %v1299
        %1363 = vmatpush1.msra.mxu0 %v1298
        %1364 = vmatprep.subr.mxu0 %v1301
        %1365 = vmatpush1.msra.mxu0 %v1300
        %1366 = vmatprep.subr.mxu0 %v1303
        %1367 = vmatpush1.msra.mxu0 %v1302
        %1368 = vmatprep.subr.mxu0 %v1305
        %1369 = vmatpush1.msra.mxu0 %v1304
        %1370 = vmatprep.subr.mxu0 %v1307
        %1371 = vmatpush1.msra.mxu0 %v1306
        %1372 = vmatprep.subr.mxu0 %v1309
        %1373 = vmatpush1.msra.mxu0 %v1308
        %1374 = vmatprep.subr.mxu0 %v1311
        %1375 = vmatpush1.msra.mxu0 %v1310
        %1376 = vmatprep.subr.mxu0 %v1313
        %1377 = vmatpush1.msra.mxu0 %v1312
        %1378 = vmatprep.subr.mxu0 %v1315
        %1379 = vmatpush1.msra.mxu0 %v1314
        %1380 = vmatprep.subr.mxu0 %v1317
        %1381 = vmatpush1.msra.mxu0 %v1316
        %1382 = vmatprep.subr.mxu0 %v1319
        %1383 = vmatpush1.msra.mxu0 %v1318
        %1384 = vmatprep.mubr.f32.mxu0 %v598
        %1385 = vmatmul.mubr.f32.gmra.mrb[0].mxu0 %v597
        %v1386 = vpop.f32.mrb[0].mxu0
        %v1387 = vadd.f32 0.0, %v1386
        %v1388 = vpop.f32.mrb[0].mxu0
        %v1389 = vadd.f32 0.0, %v1388
        %1390 = vdwg.mxu0
        %s1391 = scalar_lea.vmem %s6, 24
        %v1392 = vld [vmem:[%s1391] sm:$0xff]
        %v1394 = vsel %vm873, %v1392, 0
        %v1397 = vsel %vm877, %v1387, 0
        %v1400 = vsel %vm877, %v1389, 0
        %1402 = vmatprep.subr.mxu0 %v1400
        %1403 = vmatpush1.msra.mxu0 %v1397
        %1404 = vmatprep.subr.mxu0 0.0
        %1405 = vmatpush1.msra.mxu0 0.0
        %1406 = vmatprep.subr.mxu0 0.0
        %1407 = vmatpush1.msra.mxu0 0.0
        %1408 = vmatprep.subr.mxu0 0.0
        %1409 = vmatpush1.msra.mxu0 0.0
        %1410 = vmatprep.subr.mxu0 0.0
        %1411 = vmatpush1.msra.mxu0 0.0
        %1412 = vmatprep.subr.mxu0 0.0
        %1413 = vmatpush1.msra.mxu0 0.0
        %1414 = vmatprep.subr.mxu0 0.0
        %1415 = vmatpush1.msra.mxu0 0.0
        %1416 = vmatprep.subr.mxu0 0.0
        %1417 = vmatpush1.msra.mxu0 0.0
        %1418 = vmatprep.subr.mxu0 0.0
        %1419 = vmatpush1.msra.mxu0 0.0
        %1420 = vmatprep.subr.mxu0 0.0
        %1421 = vmatpush1.msra.mxu0 0.0
        %1422 = vmatprep.subr.mxu0 0.0
        %1423 = vmatpush1.msra.mxu0 0.0
        %1424 = vmatprep.subr.mxu0 0.0
        %1425 = vmatpush1.msra.mxu0 0.0
        %1426 = vmatprep.subr.mxu0 0.0
        %1427 = vmatpush1.msra.mxu0 0.0
        %1428 = vmatprep.subr.mxu0 0.0
        %1429 = vmatpush1.msra.mxu0 0.0
        %1430 = vmatprep.subr.mxu0 0.0
        %1431 = vmatpush1.msra.mxu0 0.0
        %1432 = vmatprep.subr.mxu0 0.0
        %1433 = vmatpush1.msra.mxu0 0.0
        %1434 = vmatprep.subr.mxu0 0.0
        %1435 = vmatpush1.msra.mxu0 0.0
        %1436 = vmatprep.subr.mxu0 0.0
        %1437 = vmatpush1.msra.mxu0 0.0
        %1438 = vmatprep.subr.mxu0 0.0
        %1439 = vmatpush1.msra.mxu0 0.0
        %1440 = vmatprep.subr.mxu0 0.0
        %1441 = vmatpush1.msra.mxu0 0.0
        %1442 = vmatprep.subr.mxu0 0.0
        %1443 = vmatpush1.msra.mxu0 0.0
        %1444 = vmatprep.subr.mxu0 0.0
        %1445 = vmatpush1.msra.mxu0 0.0
        %1446 = vmatprep.subr.mxu0 0.0
        %1447 = vmatpush1.msra.mxu0 0.0
        %1448 = vmatprep.subr.mxu0 0.0
        %1449 = vmatpush1.msra.mxu0 0.0
        %1450 = vmatprep.subr.mxu0 0.0
        %1451 = vmatpush1.msra.mxu0 0.0
        %1452 = vmatprep.subr.mxu0 0.0
        %1453 = vmatpush1.msra.mxu0 0.0
        %1454 = vmatprep.subr.mxu0 0.0
        %1455 = vmatpush1.msra.mxu0 0.0
        %1456 = vmatprep.subr.mxu0 0.0
        %1457 = vmatpush1.msra.mxu0 0.0
        %1458 = vmatprep.subr.mxu0 0.0
        %1459 = vmatpush1.msra.mxu0 0.0
        %1460 = vmatprep.subr.mxu0 0.0
        %1461 = vmatpush1.msra.mxu0 0.0
        %1462 = vmatprep.subr.mxu0 0.0
        %1463 = vmatpush1.msra.mxu0 0.0
        %1464 = vmatprep.subr.mxu0 0.0
        %1465 = vmatpush1.msra.mxu0 0.0
        %1466 = vmatprep.mubr.f32.mxu0 0.0
        %1467 = vmatmul.mubr.f32.gmra.mrb[0].mxu0 %v1394
        %v1468 = vpop.f32.mrb[0].mxu0
        %v1469 = vadd.f32 0.0, %v1468
        %v1470 = vpop.f32.mrb[0].mxu0
        %v1471 = vadd.f32 0.0, %v1470
        %1472 = vdwg.mxu0
        %v1473 = vadd.f32 %v1253, %v1469
        %v1474 = vadd.f32 %v1254, %v1471
        %s1475 = scalar_lea.vmem [#allocation7], 2048
        %v1476 = vld [vmem:[%s1475] sm:$0xff]
        %v1477 = vld [vmem:[%s1475 + $0x8] sm:$0xff]
        %v1478 = vld [vmem:[%s1475 + $0x10] sm:$0xff]
        %v1479 = vld [vmem:[%s1475 + $0x18] sm:$0xff]
        %v1480 = vld [vmem:[%s1475 + $0x20] sm:$0xff]
        %v1481 = vld [vmem:[%s1475 + $0x28] sm:$0xff]
        %v1482 = vld [vmem:[%s1475 + $0x30] sm:$0xff]
        %v1483 = vld [vmem:[%s1475 + $0x38] sm:$0xff]
        %v1484 = vld [vmem:[%s1475 + $0x40] sm:$0xff]
        %v1485 = vld [vmem:[%s1475 + $0x48] sm:$0xff]
        %v1486 = vld [vmem:[%s1475 + $0x50] sm:$0xff]
        %v1487 = vld [vmem:[%s1475 + $0x58] sm:$0xff]
        %v1488 = vld [vmem:[%s1475 + $0x60] sm:$0xff]
        %v1489 = vld [vmem:[%s1475 + $0x68] sm:$0xff]
        %v1490 = vld [vmem:[%s1475 + $0x70] sm:$0xff]
        %v1491 = vld [vmem:[%s1475 + $0x78] sm:$0xff]
        %v1492 = vld [vmem:[%s1475 + $0x80] sm:$0xff]
        %v1493 = vld [vmem:[%s1475 + $0x88] sm:$0xff]
        %v1494 = vld [vmem:[%s1475 + $0x90] sm:$0xff]
        %v1495 = vld [vmem:[%s1475 + $0x98] sm:$0xff]
        %v1496 = vld [vmem:[%s1475 + $0xa0] sm:$0xff]
        %v1497 = vld [vmem:[%s1475 + $0xa8] sm:$0xff]
        %v1498 = vld [vmem:[%s1475 + $0xb0] sm:$0xff]
        %v1499 = vld [vmem:[%s1475 + $0xb8] sm:$0xff]
        %v1500 = vld [vmem:[%s1475 + $0xc0] sm:$0xff]
        %v1501 = vld [vmem:[%s1475 + $0xc8] sm:$0xff]
        %v1502 = vld [vmem:[%s1475 + $0xd0] sm:$0xff]
        %v1503 = vld [vmem:[%s1475 + $0xd8] sm:$0xff]
        %v1504 = vld [vmem:[%s1475 + $0xe0] sm:$0xff]
        %v1505 = vld [vmem:[%s1475 + $0xe8] sm:$0xff]
        %v1506 = vld [vmem:[%s1475 + $0xf0] sm:$0xff]
        %v1507 = vld [vmem:[%s1475 + $0xf8] sm:$0xff]
        %v1508 = vld [vmem:[%s1475 + $0x100] sm:$0xff]
        %v1509 = vld [vmem:[%s1475 + $0x108] sm:$0xff]
        %v1510 = vld [vmem:[%s1475 + $0x110] sm:$0xff]
        %v1511 = vld [vmem:[%s1475 + $0x118] sm:$0xff]
        %v1512 = vld [vmem:[%s1475 + $0x120] sm:$0xff]
        %v1513 = vld [vmem:[%s1475 + $0x128] sm:$0xff]
        %v1514 = vld [vmem:[%s1475 + $0x130] sm:$0xff]
        %v1515 = vld [vmem:[%s1475 + $0x138] sm:$0xff]
        %v1516 = vld [vmem:[%s1475 + $0x140] sm:$0xff]
        %v1517 = vld [vmem:[%s1475 + $0x148] sm:$0xff]
        %v1518 = vld [vmem:[%s1475 + $0x150] sm:$0xff]
        %v1519 = vld [vmem:[%s1475 + $0x158] sm:$0xff]
        %v1520 = vld [vmem:[%s1475 + $0x160] sm:$0xff]
        %v1521 = vld [vmem:[%s1475 + $0x168] sm:$0xff]
        %v1522 = vld [vmem:[%s1475 + $0x170] sm:$0xff]
        %v1523 = vld [vmem:[%s1475 + $0x178] sm:$0xff]
        %v1524 = vld [vmem:[%s1475 + $0x180] sm:$0xff]
        %v1525 = vld [vmem:[%s1475 + $0x188] sm:$0xff]
        %v1526 = vld [vmem:[%s1475 + $0x190] sm:$0xff]
        %v1527 = vld [vmem:[%s1475 + $0x198] sm:$0xff]
        %v1528 = vld [vmem:[%s1475 + $0x1a0] sm:$0xff]
        %v1529 = vld [vmem:[%s1475 + $0x1a8] sm:$0xff]
        %v1530 = vld [vmem:[%s1475 + $0x1b0] sm:$0xff]
        %v1531 = vld [vmem:[%s1475 + $0x1b8] sm:$0xff]
        %v1532 = vld [vmem:[%s1475 + $0x1c0] sm:$0xff]
        %v1533 = vld [vmem:[%s1475 + $0x1c8] sm:$0xff]
        %v1534 = vld [vmem:[%s1475 + $0x1d0] sm:$0xff]
        %v1535 = vld [vmem:[%s1475 + $0x1d8] sm:$0xff]
        %v1536 = vld [vmem:[%s1475 + $0x1e0] sm:$0xff]
        %v1537 = vld [vmem:[%s1475 + $0x1e8] sm:$0xff]
        %v1538 = vld [vmem:[%s1475 + $0x1f0] sm:$0xff]
        %v1539 = vld [vmem:[%s1475 + $0x1f8] sm:$0xff]
        %1540 = vmatprep.subr.mxu0 %v1477
        %1541 = vmatpush1.msra.mxu0 %v1476
        %1542 = vmatprep.subr.mxu0 %v1479
        %1543 = vmatpush1.msra.mxu0 %v1478
        %1544 = vmatprep.subr.mxu0 %v1481
        %1545 = vmatpush1.msra.mxu0 %v1480
        %1546 = vmatprep.subr.mxu0 %v1483
        %1547 = vmatpush1.msra.mxu0 %v1482
        %1548 = vmatprep.subr.mxu0 %v1485
        %1549 = vmatpush1.msra.mxu0 %v1484
        %1550 = vmatprep.subr.mxu0 %v1487
        %1551 = vmatpush1.msra.mxu0 %v1486
        %1552 = vmatprep.subr.mxu0 %v1489
        %1553 = vmatpush1.msra.mxu0 %v1488
        %1554 = vmatprep.subr.mxu0 %v1491
        %1555 = vmatpush1.msra.mxu0 %v1490
        %1556 = vmatprep.subr.mxu0 %v1493
        %1557 = vmatpush1.msra.mxu0 %v1492
        %1558 = vmatprep.subr.mxu0 %v1495
        %1559 = vmatpush1.msra.mxu0 %v1494
        %1560 = vmatprep.subr.mxu0 %v1497
        %1561 = vmatpush1.msra.mxu0 %v1496
        %1562 = vmatprep.subr.mxu0 %v1499
        %1563 = vmatpush1.msra.mxu0 %v1498
        %1564 = vmatprep.subr.mxu0 %v1501
        %1565 = vmatpush1.msra.mxu0 %v1500
        %1566 = vmatprep.subr.mxu0 %v1503
        %1567 = vmatpush1.msra.mxu0 %v1502
        %1568 = vmatprep.subr.mxu0 %v1505
        %1569 = vmatpush1.msra.mxu0 %v1504
        %1570 = vmatprep.subr.mxu0 %v1507
        %1571 = vmatpush1.msra.mxu0 %v1506
        %1572 = vmatprep.subr.mxu0 %v1509
        %1573 = vmatpush1.msra.mxu0 %v1508
        %1574 = vmatprep.subr.mxu0 %v1511
        %1575 = vmatpush1.msra.mxu0 %v1510
        %1576 = vmatprep.subr.mxu0 %v1513
        %1577 = vmatpush1.msra.mxu0 %v1512
        %1578 = vmatprep.subr.mxu0 %v1515
        %1579 = vmatpush1.msra.mxu0 %v1514
        %1580 = vmatprep.subr.mxu0 %v1517
        %1581 = vmatpush1.msra.mxu0 %v1516
        %1582 = vmatprep.subr.mxu0 %v1519
        %1583 = vmatpush1.msra.mxu0 %v1518
        %1584 = vmatprep.subr.mxu0 %v1521
        %1585 = vmatpush1.msra.mxu0 %v1520
        %1586 = vmatprep.subr.mxu0 %v1523
        %1587 = vmatpush1.msra.mxu0 %v1522
        %1588 = vmatprep.subr.mxu0 %v1525
        %1589 = vmatpush1.msra.mxu0 %v1524
        %1590 = vmatprep.subr.mxu0 %v1527
        %1591 = vmatpush1.msra.mxu0 %v1526
        %1592 = vmatprep.subr.mxu0 %v1529
        %1593 = vmatpush1.msra.mxu0 %v1528
        %1594 = vmatprep.subr.mxu0 %v1531
        %1595 = vmatpush1.msra.mxu0 %v1530
        %1596 = vmatprep.subr.mxu0 %v1533
        %1597 = vmatpush1.msra.mxu0 %v1532
        %1598 = vmatprep.subr.mxu0 %v1535
        %1599 = vmatpush1.msra.mxu0 %v1534
        %1600 = vmatprep.subr.mxu0 %v1537
        %1601 = vmatpush1.msra.mxu0 %v1536
        %1602 = vmatprep.subr.mxu0 %v1539
        %1603 = vmatpush1.msra.mxu0 %v1538
        %1604 = vmatprep.mubr.f32.mxu0 %v598
        %1605 = vmatmul.mubr.f32.gmra.mrb[0].mxu0 %v597
        %v1606 = vpop.f32.mrb[0].mxu0
        %v1607 = vadd.f32 0.0, %v1606
        %v1608 = vpop.f32.mrb[0].mxu0
        %v1609 = vadd.f32 0.0, %v1608
        %1610 = vdwg.mxu0
        %s1611 = scalar_lea.vmem %s6, 32
        %v1612 = vld [vmem:[%s1611] sm:$0xff]
        %v1614 = vsel %vm873, %v1612, 0
        %v1617 = vsel %vm877, %v1607, 0
        %v1620 = vsel %vm877, %v1609, 0
        %1622 = vmatprep.subr.mxu0 %v1620
        %1623 = vmatpush1.msra.mxu0 %v1617
        %1624 = vmatprep.subr.mxu0 0.0
        %1625 = vmatpush1.msra.mxu0 0.0
        %1626 = vmatprep.subr.mxu0 0.0
        %1627 = vmatpush1.msra.mxu0 0.0
        %1628 = vmatprep.subr.mxu0 0.0
        %1629 = vmatpush1.msra.mxu0 0.0
        %1630 = vmatprep.subr.mxu0 0.0
        %1631 = vmatpush1.msra.mxu0 0.0
        %1632 = vmatprep.subr.mxu0 0.0
        %1633 = vmatpush1.msra.mxu0 0.0
        %1634 = vmatprep.subr.mxu0 0.0
        %1635 = vmatpush1.msra.mxu0 0.0
        %1636 = vmatprep.subr.mxu0 0.0
        %1637 = vmatpush1.msra.mxu0 0.0
        %1638 = vmatprep.subr.mxu0 0.0
        %1639 = vmatpush1.msra.mxu0 0.0
        %1640 = vmatprep.subr.mxu0 0.0
        %1641 = vmatpush1.msra.mxu0 0.0
        %1642 = vmatprep.subr.mxu0 0.0
        %1643 = vmatpush1.msra.mxu0 0.0
        %1644 = vmatprep.subr.mxu0 0.0
        %1645 = vmatpush1.msra.mxu0 0.0
        %1646 = vmatprep.subr.mxu0 0.0
        %1647 = vmatpush1.msra.mxu0 0.0
        %1648 = vmatprep.subr.mxu0 0.0
        %1649 = vmatpush1.msra.mxu0 0.0
        %1650 = vmatprep.subr.mxu0 0.0
        %1651 = vmatpush1.msra.mxu0 0.0
        %1652 = vmatprep.subr.mxu0 0.0
        %1653 = vmatpush1.msra.mxu0 0.0
        %1654 = vmatprep.subr.mxu0 0.0
        %1655 = vmatpush1.msra.mxu0 0.0
        %1656 = vmatprep.subr.mxu0 0.0
        %1657 = vmatpush1.msra.mxu0 0.0
        %1658 = vmatprep.subr.mxu0 0.0
        %1659 = vmatpush1.msra.mxu0 0.0
        %1660 = vmatprep.subr.mxu0 0.0
        %1661 = vmatpush1.msra.mxu0 0.0
        %1662 = vmatprep.subr.mxu0 0.0
        %1663 = vmatpush1.msra.mxu0 0.0
        %1664 = vmatprep.subr.mxu0 0.0
        %1665 = vmatpush1.msra.mxu0 0.0
        %1666 = vmatprep.subr.mxu0 0.0
        %1667 = vmatpush1.msra.mxu0 0.0
        %1668 = vmatprep.subr.mxu0 0.0
        %1669 = vmatpush1.msra.mxu0 0.0
        %1670 = vmatprep.subr.mxu0 0.0
        %1671 = vmatpush1.msra.mxu0 0.0
        %1672 = vmatprep.subr.mxu0 0.0
        %1673 = vmatpush1.msra.mxu0 0.0
        %1674 = vmatprep.subr.mxu0 0.0
        %1675 = vmatpush1.msra.mxu0 0.0
        %1676 = vmatprep.subr.mxu0 0.0
        %1677 = vmatpush1.msra.mxu0 0.0
        %1678 = vmatprep.subr.mxu0 0.0
        %1679 = vmatpush1.msra.mxu0 0.0
        %1680 = vmatprep.subr.mxu0 0.0
        %1681 = vmatpush1.msra.mxu0 0.0
        %1682 = vmatprep.subr.mxu0 0.0
        %1683 = vmatpush1.msra.mxu0 0.0
        %1684 = vmatprep.subr.mxu0 0.0
        %1685 = vmatpush1.msra.mxu0 0.0
        %1686 = vmatprep.mubr.f32.mxu0 0.0
        %1687 = vmatmul.mubr.f32.gmra.mrb[0].mxu0 %v1614
        %v1688 = vpop.f32.mrb[0].mxu0
        %v1689 = vadd.f32 0.0, %v1688
        %v1690 = vpop.f32.mrb[0].mxu0
        %v1691 = vadd.f32 0.0, %v1690
        %1692 = vdwg.mxu0
        %v1693 = vadd.f32 %v1473, %v1689
        %v1694 = vadd.f32 %v1474, %v1691
        %s1695 = scalar_lea.vmem [#allocation7], 2560
        %v1696 = vld [vmem:[%s1695] sm:$0xff]
        %v1697 = vld [vmem:[%s1695 + $0x8] sm:$0xff]
        %v1698 = vld [vmem:[%s1695 + $0x10] sm:$0xff]
        %v1699 = vld [vmem:[%s1695 + $0x18] sm:$0xff]
        %v1700 = vld [vmem:[%s1695 + $0x20] sm:$0xff]
        %v1701 = vld [vmem:[%s1695 + $0x28] sm:$0xff]
        %v1702 = vld [vmem:[%s1695 + $0x30] sm:$0xff]
        %v1703 = vld [vmem:[%s1695 + $0x38] sm:$0xff]
        %v1704 = vld [vmem:[%s1695 + $0x40] sm:$0xff]
        %v1705 = vld [vmem:[%s1695 + $0x48] sm:$0xff]
        %v1706 = vld [vmem:[%s1695 + $0x50] sm:$0xff]
        %v1707 = vld [vmem:[%s1695 + $0x58] sm:$0xff]
        %v1708 = vld [vmem:[%s1695 + $0x60] sm:$0xff]
        %v1709 = vld [vmem:[%s1695 + $0x68] sm:$0xff]
        %v1710 = vld [vmem:[%s1695 + $0x70] sm:$0xff]
        %v1711 = vld [vmem:[%s1695 + $0x78] sm:$0xff]
        %v1712 = vld [vmem:[%s1695 + $0x80] sm:$0xff]
        %v1713 = vld [vmem:[%s1695 + $0x88] sm:$0xff]
        %v1714 = vld [vmem:[%s1695 + $0x90] sm:$0xff]
        %v1715 = vld [vmem:[%s1695 + $0x98] sm:$0xff]
        %v1716 = vld [vmem:[%s1695 + $0xa0] sm:$0xff]
        %v1717 = vld [vmem:[%s1695 + $0xa8] sm:$0xff]
        %v1718 = vld [vmem:[%s1695 + $0xb0] sm:$0xff]
        %v1719 = vld [vmem:[%s1695 + $0xb8] sm:$0xff]
        %v1720 = vld [vmem:[%s1695 + $0xc0] sm:$0xff]
        %v1721 = vld [vmem:[%s1695 + $0xc8] sm:$0xff]
        %v1722 = vld [vmem:[%s1695 + $0xd0] sm:$0xff]
        %v1723 = vld [vmem:[%s1695 + $0xd8] sm:$0xff]
        %v1724 = vld [vmem:[%s1695 + $0xe0] sm:$0xff]
        %v1725 = vld [vmem:[%s1695 + $0xe8] sm:$0xff]
        %v1726 = vld [vmem:[%s1695 + $0xf0] sm:$0xff]
        %v1727 = vld [vmem:[%s1695 + $0xf8] sm:$0xff]
        %v1728 = vld [vmem:[%s1695 + $0x100] sm:$0xff]
        %v1729 = vld [vmem:[%s1695 + $0x108] sm:$0xff]
        %v1730 = vld [vmem:[%s1695 + $0x110] sm:$0xff]
        %v1731 = vld [vmem:[%s1695 + $0x118] sm:$0xff]
        %v1732 = vld [vmem:[%s1695 + $0x120] sm:$0xff]
        %v1733 = vld [vmem:[%s1695 + $0x128] sm:$0xff]
        %v1734 = vld [vmem:[%s1695 + $0x130] sm:$0xff]
        %v1735 = vld [vmem:[%s1695 + $0x138] sm:$0xff]
        %v1736 = vld [vmem:[%s1695 + $0x140] sm:$0xff]
        %v1737 = vld [vmem:[%s1695 + $0x148] sm:$0xff]
        %v1738 = vld [vmem:[%s1695 + $0x150] sm:$0xff]
        %v1739 = vld [vmem:[%s1695 + $0x158] sm:$0xff]
        %v1740 = vld [vmem:[%s1695 + $0x160] sm:$0xff]
        %v1741 = vld [vmem:[%s1695 + $0x168] sm:$0xff]
        %v1742 = vld [vmem:[%s1695 + $0x170] sm:$0xff]
        %v1743 = vld [vmem:[%s1695 + $0x178] sm:$0xff]
        %v1744 = vld [vmem:[%s1695 + $0x180] sm:$0xff]
        %v1745 = vld [vmem:[%s1695 + $0x188] sm:$0xff]
        %v1746 = vld [vmem:[%s1695 + $0x190] sm:$0xff]
        %v1747 = vld [vmem:[%s1695 + $0x198] sm:$0xff]
        %v1748 = vld [vmem:[%s1695 + $0x1a0] sm:$0xff]
        %v1749 = vld [vmem:[%s1695 + $0x1a8] sm:$0xff]
        %v1750 = vld [vmem:[%s1695 + $0x1b0] sm:$0xff]
        %v1751 = vld [vmem:[%s1695 + $0x1b8] sm:$0xff]
        %v1752 = vld [vmem:[%s1695 + $0x1c0] sm:$0xff]
        %v1753 = vld [vmem:[%s1695 + $0x1c8] sm:$0xff]
        %v1754 = vld [vmem:[%s1695 + $0x1d0] sm:$0xff]
        %v1755 = vld [vmem:[%s1695 + $0x1d8] sm:$0xff]
        %v1756 = vld [vmem:[%s1695 + $0x1e0] sm:$0xff]
        %v1757 = vld [vmem:[%s1695 + $0x1e8] sm:$0xff]
        %v1758 = vld [vmem:[%s1695 + $0x1f0] sm:$0xff]
        %v1759 = vld [vmem:[%s1695 + $0x1f8] sm:$0xff]
        %1760 = vmatprep.subr.mxu0 %v1697
        %1761 = vmatpush1.msra.mxu0 %v1696
        %1762 = vmatprep.subr.mxu0 %v1699
        %1763 = vmatpush1.msra.mxu0 %v1698
        %1764 = vmatprep.subr.mxu0 %v1701
        %1765 = vmatpush1.msra.mxu0 %v1700
        %1766 = vmatprep.subr.mxu0 %v1703
        %1767 = vmatpush1.msra.mxu0 %v1702
        %1768 = vmatprep.subr.mxu0 %v1705
        %1769 = vmatpush1.msra.mxu0 %v1704
        %1770 = vmatprep.subr.mxu0 %v1707
        %1771 = vmatpush1.msra.mxu0 %v1706
        %1772 = vmatprep.subr.mxu0 %v1709
        %1773 = vmatpush1.msra.mxu0 %v1708
        %1774 = vmatprep.subr.mxu0 %v1711
        %1775 = vmatpush1.msra.mxu0 %v1710
        %1776 = vmatprep.subr.mxu0 %v1713
        %1777 = vmatpush1.msra.mxu0 %v1712
        %1778 = vmatprep.subr.mxu0 %v1715
        %1779 = vmatpush1.msra.mxu0 %v1714
        %1780 = vmatprep.subr.mxu0 %v1717
        %1781 = vmatpush1.msra.mxu0 %v1716
        %1782 = vmatprep.subr.mxu0 %v1719
        %1783 = vmatpush1.msra.mxu0 %v1718
        %1784 = vmatprep.subr.mxu0 %v1721
        %1785 = vmatpush1.msra.mxu0 %v1720
        %1786 = vmatprep.subr.mxu0 %v1723
        %1787 = vmatpush1.msra.mxu0 %v1722
        %1788 = vmatprep.subr.mxu0 %v1725
        %1789 = vmatpush1.msra.mxu0 %v1724
        %1790 = vmatprep.subr.mxu0 %v1727
        %1791 = vmatpush1.msra.mxu0 %v1726
        %1792 = vmatprep.subr.mxu0 %v1729
        %1793 = vmatpush1.msra.mxu0 %v1728
        %1794 = vmatprep.subr.mxu0 %v1731
        %1795 = vmatpush1.msra.mxu0 %v1730
        %1796 = vmatprep.subr.mxu0 %v1733
        %1797 = vmatpush1.msra.mxu0 %v1732
        %1798 = vmatprep.subr.mxu0 %v1735
        %1799 = vmatpush1.msra.mxu0 %v1734
        %1800 = vmatprep.subr.mxu0 %v1737
        %1801 = vmatpush1.msra.mxu0 %v1736
        %1802 = vmatprep.subr.mxu0 %v1739
        %1803 = vmatpush1.msra.mxu0 %v1738
        %1804 = vmatprep.subr.mxu0 %v1741
        %1805 = vmatpush1.msra.mxu0 %v1740
        %1806 = vmatprep.subr.mxu0 %v1743
        %1807 = vmatpush1.msra.mxu0 %v1742
        %1808 = vmatprep.subr.mxu0 %v1745
        %1809 = vmatpush1.msra.mxu0 %v1744
        %1810 = vmatprep.subr.mxu0 %v1747
        %1811 = vmatpush1.msra.mxu0 %v1746
        %1812 = vmatprep.subr.mxu0 %v1749
        %1813 = vmatpush1.msra.mxu0 %v1748
        %1814 = vmatprep.subr.mxu0 %v1751
        %1815 = vmatpush1.msra.mxu0 %v1750
        %1816 = vmatprep.subr.mxu0 %v1753
        %1817 = vmatpush1.msra.mxu0 %v1752
        %1818 = vmatprep.subr.mxu0 %v1755
        %1819 = vmatpush1.msra.mxu0 %v1754
        %1820 = vmatprep.subr.mxu0 %v1757
        %1821 = vmatpush1.msra.mxu0 %v1756
        %1822 = vmatprep.subr.mxu0 %v1759
        %1823 = vmatpush1.msra.mxu0 %v1758
        %1824 = vmatprep.mubr.f32.mxu0 %v598
        %1825 = vmatmul.mubr.f32.gmra.mrb[0].mxu0 %v597
        %v1826 = vpop.f32.mrb[0].mxu0
        %v1827 = vadd.f32 0.0, %v1826
        %v1828 = vpop.f32.mrb[0].mxu0
        %v1829 = vadd.f32 0.0, %v1828
        %1830 = vdwg.mxu0
        %s1831 = scalar_lea.vmem %s6, 40
        %v1832 = vld [vmem:[%s1831] sm:$0xff]
        %v1834 = vsel %vm873, %v1832, 0
        %v1837 = vsel %vm877, %v1827, 0
        %v1840 = vsel %vm877, %v1829, 0
        %1842 = vmatprep.subr.mxu0 %v1840
        %1843 = vmatpush1.msra.mxu0 %v1837
        %1844 = vmatprep.subr.mxu0 0.0
        %1845 = vmatpush1.msra.mxu0 0.0
        %1846 = vmatprep.subr.mxu0 0.0
        %1847 = vmatpush1.msra.mxu0 0.0
        %1848 = vmatprep.subr.mxu0 0.0
        %1849 = vmatpush1.msra.mxu0 0.0
        %1850 = vmatprep.subr.mxu0 0.0
        %1851 = vmatpush1.msra.mxu0 0.0
        %1852 = vmatprep.subr.mxu0 0.0
        %1853 = vmatpush1.msra.mxu0 0.0
        %1854 = vmatprep.subr.mxu0 0.0
        %1855 = vmatpush1.msra.mxu0 0.0
        %1856 = vmatprep.subr.mxu0 0.0
        %1857 = vmatpush1.msra.mxu0 0.0
        %1858 = vmatprep.subr.mxu0 0.0
        %1859 = vmatpush1.msra.mxu0 0.0
        %1860 = vmatprep.subr.mxu0 0.0
        %1861 = vmatpush1.msra.mxu0 0.0
        %1862 = vmatprep.subr.mxu0 0.0
        %1863 = vmatpush1.msra.mxu0 0.0
        %1864 = vmatprep.subr.mxu0 0.0
        %1865 = vmatpush1.msra.mxu0 0.0
        %1866 = vmatprep.subr.mxu0 0.0
        %1867 = vmatpush1.msra.mxu0 0.0
        %1868 = vmatprep.subr.mxu0 0.0
        %1869 = vmatpush1.msra.mxu0 0.0
        %1870 = vmatprep.subr.mxu0 0.0
        %1871 = vmatpush1.msra.mxu0 0.0
        %1872 = vmatprep.subr.mxu0 0.0
        %1873 = vmatpush1.msra.mxu0 0.0
        %1874 = vmatprep.subr.mxu0 0.0
        %1875 = vmatpush1.msra.mxu0 0.0
        %1876 = vmatprep.subr.mxu0 0.0
        %1877 = vmatpush1.msra.mxu0 0.0
        %1878 = vmatprep.subr.mxu0 0.0
        %1879 = vmatpush1.msra.mxu0 0.0
        %1880 = vmatprep.subr.mxu0 0.0
        %1881 = vmatpush1.msra.mxu0 0.0
        %1882 = vmatprep.subr.mxu0 0.0
        %1883 = vmatpush1.msra.mxu0 0.0
        %1884 = vmatprep.subr.mxu0 0.0
        %1885 = vmatpush1.msra.mxu0 0.0
        %1886 = vmatprep.subr.mxu0 0.0
        %1887 = vmatpush1.msra.mxu0 0.0
        %1888 = vmatprep.subr.mxu0 0.0
        %1889 = vmatpush1.msra.mxu0 0.0
        %1890 = vmatprep.subr.mxu0 0.0
        %1891 = vmatpush1.msra.mxu0 0.0
        %1892 = vmatprep.subr.mxu0 0.0
        %1893 = vmatpush1.msra.mxu0 0.0
        %1894 = vmatprep.subr.mxu0 0.0
        %1895 = vmatpush1.msra.mxu0 0.0
        %1896 = vmatprep.subr.mxu0 0.0
        %1897 = vmatpush1.msra.mxu0 0.0
        %1898 = vmatprep.subr.mxu0 0.0
        %1899 = vmatpush1.msra.mxu0 0.0
        %1900 = vmatprep.subr.mxu0 0.0
        %1901 = vmatpush1.msra.mxu0 0.0
        %1902 = vmatprep.subr.mxu0 0.0
        %1903 = vmatpush1.msra.mxu0 0.0
        %1904 = vmatprep.subr.mxu0 0.0
        %1905 = vmatpush1.msra.mxu0 0.0
        %1906 = vmatprep.mubr.f32.mxu0 0.0
        %1907 = vmatmul.mubr.f32.gmra.mrb[0].mxu0 %v1834
        %v1908 = vpop.f32.mrb[0].mxu0
        %v1909 = vadd.f32 0.0, %v1908
        %v1910 = vpop.f32.mrb[0].mxu0
        %v1911 = vadd.f32 0.0, %v1910
        %1912 = vdwg.mxu0
        %v1913 = vadd.f32 %v1693, %v1909
        %v1914 = vadd.f32 %v1694, %v1911
        %s1915 = scalar_lea.vmem [#allocation7], 3072
        %v1916 = vld [vmem:[%s1915] sm:$0xff]
        %v1917 = vld [vmem:[%s1915 + $0x8] sm:$0xff]
        %v1918 = vld [vmem:[%s1915 + $0x10] sm:$0xff]
        %v1919 = vld [vmem:[%s1915 + $0x18] sm:$0xff]
        %v1920 = vld [vmem:[%s1915 + $0x20] sm:$0xff]
        %v1921 = vld [vmem:[%s1915 + $0x28] sm:$0xff]
        %v1922 = vld [vmem:[%s1915 + $0x30] sm:$0xff]
        %v1923 = vld [vmem:[%s1915 + $0x38] sm:$0xff]
        %v1924 = vld [vmem:[%s1915 + $0x40] sm:$0xff]
        %v1925 = vld [vmem:[%s1915 + $0x48] sm:$0xff]
        %v1926 = vld [vmem:[%s1915 + $0x50] sm:$0xff]
        %v1927 = vld [vmem:[%s1915 + $0x58] sm:$0xff]
        %v1928 = vld [vmem:[%s1915 + $0x60] sm:$0xff]
        %v1929 = vld [vmem:[%s1915 + $0x68] sm:$0xff]
        %v1930 = vld [vmem:[%s1915 + $0x70] sm:$0xff]
        %v1931 = vld [vmem:[%s1915 + $0x78] sm:$0xff]
        %v1932 = vld [vmem:[%s1915 + $0x80] sm:$0xff]
        %v1933 = vld [vmem:[%s1915 + $0x88] sm:$0xff]
        %v1934 = vld [vmem:[%s1915 + $0x90] sm:$0xff]
        %v1935 = vld [vmem:[%s1915 + $0x98] sm:$0xff]
        %v1936 = vld [vmem:[%s1915 + $0xa0] sm:$0xff]
        %v1937 = vld [vmem:[%s1915 + $0xa8] sm:$0xff]
        %v1938 = vld [vmem:[%s1915 + $0xb0] sm:$0xff]
        %v1939 = vld [vmem:[%s1915 + $0xb8] sm:$0xff]
        %v1940 = vld [vmem:[%s1915 + $0xc0] sm:$0xff]
        %v1941 = vld [vmem:[%s1915 + $0xc8] sm:$0xff]
        %v1942 = vld [vmem:[%s1915 + $0xd0] sm:$0xff]
        %v1943 = vld [vmem:[%s1915 + $0xd8] sm:$0xff]
        %v1944 = vld [vmem:[%s1915 + $0xe0] sm:$0xff]
        %v1945 = vld [vmem:[%s1915 + $0xe8] sm:$0xff]
        %v1946 = vld [vmem:[%s1915 + $0xf0] sm:$0xff]
        %v1947 = vld [vmem:[%s1915 + $0xf8] sm:$0xff]
        %v1948 = vld [vmem:[%s1915 + $0x100] sm:$0xff]
        %v1949 = vld [vmem:[%s1915 + $0x108] sm:$0xff]
        %v1950 = vld [vmem:[%s1915 + $0x110] sm:$0xff]
        %v1951 = vld [vmem:[%s1915 + $0x118] sm:$0xff]
        %v1952 = vld [vmem:[%s1915 + $0x120] sm:$0xff]
        %v1953 = vld [vmem:[%s1915 + $0x128] sm:$0xff]
        %v1954 = vld [vmem:[%s1915 + $0x130] sm:$0xff]
        %v1955 = vld [vmem:[%s1915 + $0x138] sm:$0xff]
        %v1956 = vld [vmem:[%s1915 + $0x140] sm:$0xff]
        %v1957 = vld [vmem:[%s1915 + $0x148] sm:$0xff]
        %v1958 = vld [vmem:[%s1915 + $0x150] sm:$0xff]
        %v1959 = vld [vmem:[%s1915 + $0x158] sm:$0xff]
        %v1960 = vld [vmem:[%s1915 + $0x160] sm:$0xff]
        %v1961 = vld [vmem:[%s1915 + $0x168] sm:$0xff]
        %v1962 = vld [vmem:[%s1915 + $0x170] sm:$0xff]
        %v1963 = vld [vmem:[%s1915 + $0x178] sm:$0xff]
        %v1964 = vld [vmem:[%s1915 + $0x180] sm:$0xff]
        %v1965 = vld [vmem:[%s1915 + $0x188] sm:$0xff]
        %v1966 = vld [vmem:[%s1915 + $0x190] sm:$0xff]
        %v1967 = vld [vmem:[%s1915 + $0x198] sm:$0xff]
        %v1968 = vld [vmem:[%s1915 + $0x1a0] sm:$0xff]
        %v1969 = vld [vmem:[%s1915 + $0x1a8] sm:$0xff]
        %v1970 = vld [vmem:[%s1915 + $0x1b0] sm:$0xff]
        %v1971 = vld [vmem:[%s1915 + $0x1b8] sm:$0xff]
        %v1972 = vld [vmem:[%s1915 + $0x1c0] sm:$0xff]
        %v1973 = vld [vmem:[%s1915 + $0x1c8] sm:$0xff]
        %v1974 = vld [vmem:[%s1915 + $0x1d0] sm:$0xff]
        %v1975 = vld [vmem:[%s1915 + $0x1d8] sm:$0xff]
        %v1976 = vld [vmem:[%s1915 + $0x1e0] sm:$0xff]
        %v1977 = vld [vmem:[%s1915 + $0x1e8] sm:$0xff]
        %v1978 = vld [vmem:[%s1915 + $0x1f0] sm:$0xff]
        %v1979 = vld [vmem:[%s1915 + $0x1f8] sm:$0xff]
        %1980 = vmatprep.subr.mxu0 %v1917
        %1981 = vmatpush1.msra.mxu0 %v1916
        %1982 = vmatprep.subr.mxu0 %v1919
        %1983 = vmatpush1.msra.mxu0 %v1918
        %1984 = vmatprep.subr.mxu0 %v1921
        %1985 = vmatpush1.msra.mxu0 %v1920
        %1986 = vmatprep.subr.mxu0 %v1923
        %1987 = vmatpush1.msra.mxu0 %v1922
        %1988 = vmatprep.subr.mxu0 %v1925
        %1989 = vmatpush1.msra.mxu0 %v1924
        %1990 = vmatprep.subr.mxu0 %v1927
        %1991 = vmatpush1.msra.mxu0 %v1926
        %1992 = vmatprep.subr.mxu0 %v1929
        %1993 = vmatpush1.msra.mxu0 %v1928
        %1994 = vmatprep.subr.mxu0 %v1931
        %1995 = vmatpush1.msra.mxu0 %v1930
        %1996 = vmatprep.subr.mxu0 %v1933
        %1997 = vmatpush1.msra.mxu0 %v1932
        %1998 = vmatprep.subr.mxu0 %v1935
        %1999 = vmatpush1.msra.mxu0 %v1934
        %2000 = vmatprep.subr.mxu0 %v1937
        %2001 = vmatpush1.msra.mxu0 %v1936
        %2002 = vmatprep.subr.mxu0 %v1939
        %2003 = vmatpush1.msra.mxu0 %v1938
        %2004 = vmatprep.subr.mxu0 %v1941
        %2005 = vmatpush1.msra.mxu0 %v1940
        %2006 = vmatprep.subr.mxu0 %v1943
        %2007 = vmatpush1.msra.mxu0 %v1942
        %2008 = vmatprep.subr.mxu0 %v1945
        %2009 = vmatpush1.msra.mxu0 %v1944
        %2010 = vmatprep.subr.mxu0 %v1947
        %2011 = vmatpush1.msra.mxu0 %v1946
        %2012 = vmatprep.subr.mxu0 %v1949
        %2013 = vmatpush1.msra.mxu0 %v1948
        %2014 = vmatprep.subr.mxu0 %v1951
        %2015 = vmatpush1.msra.mxu0 %v1950
        %2016 = vmatprep.subr.mxu0 %v1953
        %2017 = vmatpush1.msra.mxu0 %v1952
        %2018 = vmatprep.subr.mxu0 %v1955
        %2019 = vmatpush1.msra.mxu0 %v1954
        %2020 = vmatprep.subr.mxu0 %v1957
        %2021 = vmatpush1.msra.mxu0 %v1956
        %2022 = vmatprep.subr.mxu0 %v1959
        %2023 = vmatpush1.msra.mxu0 %v1958
        %2024 = vmatprep.subr.mxu0 %v1961
        %2025 = vmatpush1.msra.mxu0 %v1960
        %2026 = vmatprep.subr.mxu0 %v1963
        %2027 = vmatpush1.msra.mxu0 %v1962
        %2028 = vmatprep.subr.mxu0 %v1965
        %2029 = vmatpush1.msra.mxu0 %v1964
        %2030 = vmatprep.subr.mxu0 %v1967
        %2031 = vmatpush1.msra.mxu0 %v1966
        %2032 = vmatprep.subr.mxu0 %v1969
        %2033 = vmatpush1.msra.mxu0 %v1968
        %2034 = vmatprep.subr.mxu0 %v1971
        %2035 = vmatpush1.msra.mxu0 %v1970
        %2036 = vmatprep.subr.mxu0 %v1973
        %2037 = vmatpush1.msra.mxu0 %v1972
        %2038 = vmatprep.subr.mxu0 %v1975
        %2039 = vmatpush1.msra.mxu0 %v1974
        %2040 = vmatprep.subr.mxu0 %v1977
        %2041 = vmatpush1.msra.mxu0 %v1976
        %2042 = vmatprep.subr.mxu0 %v1979
        %2043 = vmatpush1.msra.mxu0 %v1978
        %2044 = vmatprep.mubr.f32.mxu0 %v598
        %2045 = vmatmul.mubr.f32.gmra.mrb[0].mxu0 %v597
        %v2046 = vpop.f32.mrb[0].mxu0
        %v2047 = vadd.f32 0.0, %v2046
        %v2048 = vpop.f32.mrb[0].mxu0
        %v2049 = vadd.f32 0.0, %v2048
        %2050 = vdwg.mxu0
        %s2051 = scalar_lea.vmem %s6, 48
        %v2052 = vld [vmem:[%s2051] sm:$0xff]
        %v2054 = vsel %vm873, %v2052, 0
        %v2057 = vsel %vm877, %v2047, 0
        %v2060 = vsel %vm877, %v2049, 0
        %2062 = vmatprep.subr.mxu0 %v2060
        %2063 = vmatpush1.msra.mxu0 %v2057
        %2064 = vmatprep.subr.mxu0 0.0
        %2065 = vmatpush1.msra.mxu0 0.0
        %2066 = vmatprep.subr.mxu0 0.0
        %2067 = vmatpush1.msra.mxu0 0.0
        %2068 = vmatprep.subr.mxu0 0.0
        %2069 = vmatpush1.msra.mxu0 0.0
        %2070 = vmatprep.subr.mxu0 0.0
        %2071 = vmatpush1.msra.mxu0 0.0
        %2072 = vmatprep.subr.mxu0 0.0
        %2073 = vmatpush1.msra.mxu0 0.0
        %2074 = vmatprep.subr.mxu0 0.0
        %2075 = vmatpush1.msra.mxu0 0.0
        %2076 = vmatprep.subr.mxu0 0.0
        %2077 = vmatpush1.msra.mxu0 0.0
        %2078 = vmatprep.subr.mxu0 0.0
        %2079 = vmatpush1.msra.mxu0 0.0
        %2080 = vmatprep.subr.mxu0 0.0
        %2081 = vmatpush1.msra.mxu0 0.0
        %2082 = vmatprep.subr.mxu0 0.0
        %2083 = vmatpush1.msra.mxu0 0.0
        %2084 = vmatprep.subr.mxu0 0.0
        %2085 = vmatpush1.msra.mxu0 0.0
        %2086 = vmatprep.subr.mxu0 0.0
        %2087 = vmatpush1.msra.mxu0 0.0
        %2088 = vmatprep.subr.mxu0 0.0
        %2089 = vmatpush1.msra.mxu0 0.0
        %2090 = vmatprep.subr.mxu0 0.0
        %2091 = vmatpush1.msra.mxu0 0.0
        %2092 = vmatprep.subr.mxu0 0.0
        %2093 = vmatpush1.msra.mxu0 0.0
        %2094 = vmatprep.subr.mxu0 0.0
        %2095 = vmatpush1.msra.mxu0 0.0
        %2096 = vmatprep.subr.mxu0 0.0
        %2097 = vmatpush1.msra.mxu0 0.0
        %2098 = vmatprep.subr.mxu0 0.0
        %2099 = vmatpush1.msra.mxu0 0.0
        %2100 = vmatprep.subr.mxu0 0.0
        %2101 = vmatpush1.msra.mxu0 0.0
        %2102 = vmatprep.subr.mxu0 0.0
        %2103 = vmatpush1.msra.mxu0 0.0
        %2104 = vmatprep.subr.mxu0 0.0
        %2105 = vmatpush1.msra.mxu0 0.0
        %2106 = vmatprep.subr.mxu0 0.0
        %2107 = vmatpush1.msra.mxu0 0.0
        %2108 = vmatprep.subr.mxu0 0.0
        %2109 = vmatpush1.msra.mxu0 0.0
        %2110 = vmatprep.subr.mxu0 0.0
        %2111 = vmatpush1.msra.mxu0 0.0
        %2112 = vmatprep.subr.mxu0 0.0
        %2113 = vmatpush1.msra.mxu0 0.0
        %2114 = vmatprep.subr.mxu0 0.0
        %2115 = vmatpush1.msra.mxu0 0.0
        %2116 = vmatprep.subr.mxu0 0.0
        %2117 = vmatpush1.msra.mxu0 0.0
        %2118 = vmatprep.subr.mxu0 0.0
        %2119 = vmatpush1.msra.mxu0 0.0
        %2120 = vmatprep.subr.mxu0 0.0
        %2121 = vmatpush1.msra.mxu0 0.0
        %2122 = vmatprep.subr.mxu0 0.0
        %2123 = vmatpush1.msra.mxu0 0.0
        %2124 = vmatprep.subr.mxu0 0.0
        %2125 = vmatpush1.msra.mxu0 0.0
        %2126 = vmatprep.mubr.f32.mxu0 0.0
        %2127 = vmatmul.mubr.f32.gmra.mrb[0].mxu0 %v2054
        %v2128 = vpop.f32.mrb[0].mxu0
        %v2129 = vadd.f32 0.0, %v2128
        %v2130 = vpop.f32.mrb[0].mxu0
        %v2131 = vadd.f32 0.0, %v2130
        %2132 = vdwg.mxu0
        %v2133 = vadd.f32 %v1913, %v2129
        %v2134 = vadd.f32 %v1914, %v2131
        %s2135 = scalar_lea.vmem [#allocation7], 3584
        %v2136 = vld [vmem:[%s2135] sm:$0xff]
        %v2137 = vld [vmem:[%s2135 + $0x8] sm:$0xff]
        %v2138 = vld [vmem:[%s2135 + $0x10] sm:$0xff]
        %v2139 = vld [vmem:[%s2135 + $0x18] sm:$0xff]
        %v2140 = vld [vmem:[%s2135 + $0x20] sm:$0xff]
        %v2141 = vld [vmem:[%s2135 + $0x28] sm:$0xff]
        %v2142 = vld [vmem:[%s2135 + $0x30] sm:$0xff]
        %v2143 = vld [vmem:[%s2135 + $0x38] sm:$0xff]
        %v2144 = vld [vmem:[%s2135 + $0x40] sm:$0xff]
        %v2145 = vld [vmem:[%s2135 + $0x48] sm:$0xff]
        %v2146 = vld [vmem:[%s2135 + $0x50] sm:$0xff]
        %v2147 = vld [vmem:[%s2135 + $0x58] sm:$0xff]
        %v2148 = vld [vmem:[%s2135 + $0x60] sm:$0xff]
        %v2149 = vld [vmem:[%s2135 + $0x68] sm:$0xff]
        %v2150 = vld [vmem:[%s2135 + $0x70] sm:$0xff]
        %v2151 = vld [vmem:[%s2135 + $0x78] sm:$0xff]
        %v2152 = vld [vmem:[%s2135 + $0x80] sm:$0xff]
        %v2153 = vld [vmem:[%s2135 + $0x88] sm:$0xff]
        %v2154 = vld [vmem:[%s2135 + $0x90] sm:$0xff]
        %v2155 = vld [vmem:[%s2135 + $0x98] sm:$0xff]
        %v2156 = vld [vmem:[%s2135 + $0xa0] sm:$0xff]
        %v2157 = vld [vmem:[%s2135 + $0xa8] sm:$0xff]
        %v2158 = vld [vmem:[%s2135 + $0xb0] sm:$0xff]
        %v2159 = vld [vmem:[%s2135 + $0xb8] sm:$0xff]
        %v2160 = vld [vmem:[%s2135 + $0xc0] sm:$0xff]
        %v2161 = vld [vmem:[%s2135 + $0xc8] sm:$0xff]
        %v2162 = vld [vmem:[%s2135 + $0xd0] sm:$0xff]
        %v2163 = vld [vmem:[%s2135 + $0xd8] sm:$0xff]
        %v2164 = vld [vmem:[%s2135 + $0xe0] sm:$0xff]
        %v2165 = vld [vmem:[%s2135 + $0xe8] sm:$0xff]
        %v2166 = vld [vmem:[%s2135 + $0xf0] sm:$0xff]
        %v2167 = vld [vmem:[%s2135 + $0xf8] sm:$0xff]
        %v2168 = vld [vmem:[%s2135 + $0x100] sm:$0xff]
        %v2169 = vld [vmem:[%s2135 + $0x108] sm:$0xff]
        %v2170 = vld [vmem:[%s2135 + $0x110] sm:$0xff]
        %v2171 = vld [vmem:[%s2135 + $0x118] sm:$0xff]
        %v2172 = vld [vmem:[%s2135 + $0x120] sm:$0xff]
        %v2173 = vld [vmem:[%s2135 + $0x128] sm:$0xff]
        %v2174 = vld [vmem:[%s2135 + $0x130] sm:$0xff]
        %v2175 = vld [vmem:[%s2135 + $0x138] sm:$0xff]
        %v2176 = vld [vmem:[%s2135 + $0x140] sm:$0xff]
        %v2177 = vld [vmem:[%s2135 + $0x148] sm:$0xff]
        %v2178 = vld [vmem:[%s2135 + $0x150] sm:$0xff]
        %v2179 = vld [vmem:[%s2135 + $0x158] sm:$0xff]
        %v2180 = vld [vmem:[%s2135 + $0x160] sm:$0xff]
        %v2181 = vld [vmem:[%s2135 + $0x168] sm:$0xff]
        %v2182 = vld [vmem:[%s2135 + $0x170] sm:$0xff]
        %v2183 = vld [vmem:[%s2135 + $0x178] sm:$0xff]
        %v2184 = vld [vmem:[%s2135 + $0x180] sm:$0xff]
        %v2185 = vld [vmem:[%s2135 + $0x188] sm:$0xff]
        %v2186 = vld [vmem:[%s2135 + $0x190] sm:$0xff]
        %v2187 = vld [vmem:[%s2135 + $0x198] sm:$0xff]
        %v2188 = vld [vmem:[%s2135 + $0x1a0] sm:$0xff]
        %v2189 = vld [vmem:[%s2135 + $0x1a8] sm:$0xff]
        %v2190 = vld [vmem:[%s2135 + $0x1b0] sm:$0xff]
        %v2191 = vld [vmem:[%s2135 + $0x1b8] sm:$0xff]
        %v2192 = vld [vmem:[%s2135 + $0x1c0] sm:$0xff]
        %v2193 = vld [vmem:[%s2135 + $0x1c8] sm:$0xff]
        %v2194 = vld [vmem:[%s2135 + $0x1d0] sm:$0xff]
        %v2195 = vld [vmem:[%s2135 + $0x1d8] sm:$0xff]
        %v2196 = vld [vmem:[%s2135 + $0x1e0] sm:$0xff]
        %v2197 = vld [vmem:[%s2135 + $0x1e8] sm:$0xff]
        %v2198 = vld [vmem:[%s2135 + $0x1f0] sm:$0xff]
        %v2199 = vld [vmem:[%s2135 + $0x1f8] sm:$0xff]
        %2200 = vmatprep.subr.mxu0 %v2137
        %2201 = vmatpush1.msra.mxu0 %v2136
        %2202 = vmatprep.subr.mxu0 %v2139
        %2203 = vmatpush1.msra.mxu0 %v2138
        %2204 = vmatprep.subr.mxu0 %v2141
        %2205 = vmatpush1.msra.mxu0 %v2140
        %2206 = vmatprep.subr.mxu0 %v2143
        %2207 = vmatpush1.msra.mxu0 %v2142
        %2208 = vmatprep.subr.mxu0 %v2145
        %2209 = vmatpush1.msra.mxu0 %v2144
        %2210 = vmatprep.subr.mxu0 %v2147
        %2211 = vmatpush1.msra.mxu0 %v2146
        %2212 = vmatprep.subr.mxu0 %v2149
        %2213 = vmatpush1.msra.mxu0 %v2148
        %2214 = vmatprep.subr.mxu0 %v2151
        %2215 = vmatpush1.msra.mxu0 %v2150
        %2216 = vmatprep.subr.mxu0 %v2153
        %2217 = vmatpush1.msra.mxu0 %v2152
        %2218 = vmatprep.subr.mxu0 %v2155
        %2219 = vmatpush1.msra.mxu0 %v2154
        %2220 = vmatprep.subr.mxu0 %v2157
        %2221 = vmatpush1.msra.mxu0 %v2156
        %2222 = vmatprep.subr.mxu0 %v2159
        %2223 = vmatpush1.msra.mxu0 %v2158
        %2224 = vmatprep.subr.mxu0 %v2161
        %2225 = vmatpush1.msra.mxu0 %v2160
        %2226 = vmatprep.subr.mxu0 %v2163
        %2227 = vmatpush1.msra.mxu0 %v2162
        %2228 = vmatprep.subr.mxu0 %v2165
        %2229 = vmatpush1.msra.mxu0 %v2164
        %2230 = vmatprep.subr.mxu0 %v2167
        %2231 = vmatpush1.msra.mxu0 %v2166
        %2232 = vmatprep.subr.mxu0 %v2169
        %2233 = vmatpush1.msra.mxu0 %v2168
        %2234 = vmatprep.subr.mxu0 %v2171
        %2235 = vmatpush1.msra.mxu0 %v2170
        %2236 = vmatprep.subr.mxu0 %v2173
        %2237 = vmatpush1.msra.mxu0 %v2172
        %2238 = vmatprep.subr.mxu0 %v2175
        %2239 = vmatpush1.msra.mxu0 %v2174
        %2240 = vmatprep.subr.mxu0 %v2177
        %2241 = vmatpush1.msra.mxu0 %v2176
        %2242 = vmatprep.subr.mxu0 %v2179
        %2243 = vmatpush1.msra.mxu0 %v2178
        %2244 = vmatprep.subr.mxu0 %v2181
        %2245 = vmatpush1.msra.mxu0 %v2180
        %2246 = vmatprep.subr.mxu0 %v2183
        %2247 = vmatpush1.msra.mxu0 %v2182
        %2248 = vmatprep.subr.mxu0 %v2185
        %2249 = vmatpush1.msra.mxu0 %v2184
        %2250 = vmatprep.subr.mxu0 %v2187
        %2251 = vmatpush1.msra.mxu0 %v2186
        %2252 = vmatprep.subr.mxu0 %v2189
        %2253 = vmatpush1.msra.mxu0 %v2188
        %2254 = vmatprep.subr.mxu0 %v2191
        %2255 = vmatpush1.msra.mxu0 %v2190
        %2256 = vmatprep.subr.mxu0 %v2193
        %2257 = vmatpush1.msra.mxu0 %v2192
        %2258 = vmatprep.subr.mxu0 %v2195
        %2259 = vmatpush1.msra.mxu0 %v2194
        %2260 = vmatprep.subr.mxu0 %v2197
        %2261 = vmatpush1.msra.mxu0 %v2196
        %2262 = vmatprep.subr.mxu0 %v2199
        %2263 = vmatpush1.msra.mxu0 %v2198
        %2264 = vmatprep.mubr.f32.mxu0 %v598
        %2265 = vmatmul.mubr.f32.gmra.mrb[0].mxu0 %v597
        %v2266 = vpop.f32.mrb[0].mxu0
        %v2267 = vadd.f32 0.0, %v2266
        %v2268 = vpop.f32.mrb[0].mxu0
        %v2269 = vadd.f32 0.0, %v2268
        %2270 = vdwg.mxu0
        %s2271 = scalar_lea.vmem %s6, 56
        %v2272 = vld [vmem:[%s2271] sm:$0xff]
        %v2274 = vsel %vm873, %v2272, 0
        %v2277 = vsel %vm877, %v2267, 0
        %v2280 = vsel %vm877, %v2269, 0
        %2282 = vmatprep.subr.mxu0 %v2280
        %2283 = vmatpush1.msra.mxu0 %v2277
        %2284 = vmatprep.subr.mxu0 0.0
        %2285 = vmatpush1.msra.mxu0 0.0
        %2286 = vmatprep.subr.mxu0 0.0
        %2287 = vmatpush1.msra.mxu0 0.0
        %2288 = vmatprep.subr.mxu0 0.0
        %2289 = vmatpush1.msra.mxu0 0.0
        %2290 = vmatprep.subr.mxu0 0.0
        %2291 = vmatpush1.msra.mxu0 0.0
        %2292 = vmatprep.subr.mxu0 0.0
        %2293 = vmatpush1.msra.mxu0 0.0
        %2294 = vmatprep.subr.mxu0 0.0
        %2295 = vmatpush1.msra.mxu0 0.0
        %2296 = vmatprep.subr.mxu0 0.0
        %2297 = vmatpush1.msra.mxu0 0.0
        %2298 = vmatprep.subr.mxu0 0.0
        %2299 = vmatpush1.msra.mxu0 0.0
        %2300 = vmatprep.subr.mxu0 0.0
        %2301 = vmatpush1.msra.mxu0 0.0
        %2302 = vmatprep.subr.mxu0 0.0
        %2303 = vmatpush1.msra.mxu0 0.0
        %2304 = vmatprep.subr.mxu0 0.0
        %2305 = vmatpush1.msra.mxu0 0.0
        %2306 = vmatprep.subr.mxu0 0.0
        %2307 = vmatpush1.msra.mxu0 0.0
        %2308 = vmatprep.subr.mxu0 0.0
        %2309 = vmatpush1.msra.mxu0 0.0
        %2310 = vmatprep.subr.mxu0 0.0
        %2311 = vmatpush1.msra.mxu0 0.0
        %2312 = vmatprep.subr.mxu0 0.0
        %2313 = vmatpush1.msra.mxu0 0.0
        %2314 = vmatprep.subr.mxu0 0.0
        %2315 = vmatpush1.msra.mxu0 0.0
        %2316 = vmatprep.subr.mxu0 0.0
        %2317 = vmatpush1.msra.mxu0 0.0
        %2318 = vmatprep.subr.mxu0 0.0
        %2319 = vmatpush1.msra.mxu0 0.0
        %2320 = vmatprep.subr.mxu0 0.0
        %2321 = vmatpush1.msra.mxu0 0.0
        %2322 = vmatprep.subr.mxu0 0.0
        %2323 = vmatpush1.msra.mxu0 0.0
        %2324 = vmatprep.subr.mxu0 0.0
        %2325 = vmatpush1.msra.mxu0 0.0
        %2326 = vmatprep.subr.mxu0 0.0
        %2327 = vmatpush1.msra.mxu0 0.0
        %2328 = vmatprep.subr.mxu0 0.0
        %2329 = vmatpush1.msra.mxu0 0.0
        %2330 = vmatprep.subr.mxu0 0.0
        %2331 = vmatpush1.msra.mxu0 0.0
        %2332 = vmatprep.subr.mxu0 0.0
        %2333 = vmatpush1.msra.mxu0 0.0
        %2334 = vmatprep.subr.mxu0 0.0
        %2335 = vmatpush1.msra.mxu0 0.0
        %2336 = vmatprep.subr.mxu0 0.0
        %2337 = vmatpush1.msra.mxu0 0.0
        %2338 = vmatprep.subr.mxu0 0.0
        %2339 = vmatpush1.msra.mxu0 0.0
        %2340 = vmatprep.subr.mxu0 0.0
        %2341 = vmatpush1.msra.mxu0 0.0
        %2342 = vmatprep.subr.mxu0 0.0
        %2343 = vmatpush1.msra.mxu0 0.0
        %2344 = vmatprep.subr.mxu0 0.0
        %2345 = vmatpush1.msra.mxu0 0.0
        %2346 = vmatprep.mubr.f32.mxu0 0.0
        %2347 = vmatmul.mubr.f32.gmra.mrb[0].mxu0 %v2274
        %v2348 = vpop.f32.mrb[0].mxu0
        %v2349 = vadd.f32 0.0, %v2348
        %v2350 = vpop.f32.mrb[0].mxu0
        %v2351 = vadd.f32 0.0, %v2350
        %2352 = vdwg.mxu0
        %v2353 = vadd.f32 %v2133, %v2349
        %v2354 = vadd.f32 %v2134, %v2351
        %s2355 = scalar_lea.vmem [#allocation7], 4096
        %v2356 = vld [vmem:[%s2355] sm:$0xff]
        %v2357 = vld [vmem:[%s2355 + $0x8] sm:$0xff]
        %v2358 = vld [vmem:[%s2355 + $0x10] sm:$0xff]
        %v2359 = vld [vmem:[%s2355 + $0x18] sm:$0xff]
        %v2360 = vld [vmem:[%s2355 + $0x20] sm:$0xff]
        %v2361 = vld [vmem:[%s2355 + $0x28] sm:$0xff]
        %v2362 = vld [vmem:[%s2355 + $0x30] sm:$0xff]
        %v2363 = vld [vmem:[%s2355 + $0x38] sm:$0xff]
        %v2364 = vld [vmem:[%s2355 + $0x40] sm:$0xff]
        %v2365 = vld [vmem:[%s2355 + $0x48] sm:$0xff]
        %v2366 = vld [vmem:[%s2355 + $0x50] sm:$0xff]
        %v2367 = vld [vmem:[%s2355 + $0x58] sm:$0xff]
        %v2368 = vld [vmem:[%s2355 + $0x60] sm:$0xff]
        %v2369 = vld [vmem:[%s2355 + $0x68] sm:$0xff]
        %v2370 = vld [vmem:[%s2355 + $0x70] sm:$0xff]
        %v2371 = vld [vmem:[%s2355 + $0x78] sm:$0xff]
        %v2372 = vld [vmem:[%s2355 + $0x80] sm:$0xff]
        %v2373 = vld [vmem:[%s2355 + $0x88] sm:$0xff]
        %v2374 = vld [vmem:[%s2355 + $0x90] sm:$0xff]
        %v2375 = vld [vmem:[%s2355 + $0x98] sm:$0xff]
        %v2376 = vld [vmem:[%s2355 + $0xa0] sm:$0xff]
        %v2377 = vld [vmem:[%s2355 + $0xa8] sm:$0xff]
        %v2378 = vld [vmem:[%s2355 + $0xb0] sm:$0xff]
        %v2379 = vld [vmem:[%s2355 + $0xb8] sm:$0xff]
        %v2380 = vld [vmem:[%s2355 + $0xc0] sm:$0xff]
        %v2381 = vld [vmem:[%s2355 + $0xc8] sm:$0xff]
        %v2382 = vld [vmem:[%s2355 + $0xd0] sm:$0xff]
        %v2383 = vld [vmem:[%s2355 + $0xd8] sm:$0xff]
        %v2384 = vld [vmem:[%s2355 + $0xe0] sm:$0xff]
        %v2385 = vld [vmem:[%s2355 + $0xe8] sm:$0xff]
        %v2386 = vld [vmem:[%s2355 + $0xf0] sm:$0xff]
        %v2387 = vld [vmem:[%s2355 + $0xf8] sm:$0xff]
        %v2388 = vld [vmem:[%s2355 + $0x100] sm:$0xff]
        %v2389 = vld [vmem:[%s2355 + $0x108] sm:$0xff]
        %v2390 = vld [vmem:[%s2355 + $0x110] sm:$0xff]
        %v2391 = vld [vmem:[%s2355 + $0x118] sm:$0xff]
        %v2392 = vld [vmem:[%s2355 + $0x120] sm:$0xff]
        %v2393 = vld [vmem:[%s2355 + $0x128] sm:$0xff]
        %v2394 = vld [vmem:[%s2355 + $0x130] sm:$0xff]
        %v2395 = vld [vmem:[%s2355 + $0x138] sm:$0xff]
        %v2396 = vld [vmem:[%s2355 + $0x140] sm:$0xff]
        %v2397 = vld [vmem:[%s2355 + $0x148] sm:$0xff]
        %v2398 = vld [vmem:[%s2355 + $0x150] sm:$0xff]
        %v2399 = vld [vmem:[%s2355 + $0x158] sm:$0xff]
        %v2400 = vld [vmem:[%s2355 + $0x160] sm:$0xff]
        %v2401 = vld [vmem:[%s2355 + $0x168] sm:$0xff]
        %v2402 = vld [vmem:[%s2355 + $0x170] sm:$0xff]
        %v2403 = vld [vmem:[%s2355 + $0x178] sm:$0xff]
        %v2404 = vld [vmem:[%s2355 + $0x180] sm:$0xff]
        %v2405 = vld [vmem:[%s2355 + $0x188] sm:$0xff]
        %v2406 = vld [vmem:[%s2355 + $0x190] sm:$0xff]
        %v2407 = vld [vmem:[%s2355 + $0x198] sm:$0xff]
        %v2408 = vld [vmem:[%s2355 + $0x1a0] sm:$0xff]
        %v2409 = vld [vmem:[%s2355 + $0x1a8] sm:$0xff]
        %v2410 = vld [vmem:[%s2355 + $0x1b0] sm:$0xff]
        %v2411 = vld [vmem:[%s2355 + $0x1b8] sm:$0xff]
        %v2412 = vld [vmem:[%s2355 + $0x1c0] sm:$0xff]
        %v2413 = vld [vmem:[%s2355 + $0x1c8] sm:$0xff]
        %v2414 = vld [vmem:[%s2355 + $0x1d0] sm:$0xff]
        %v2415 = vld [vmem:[%s2355 + $0x1d8] sm:$0xff]
        %v2416 = vld [vmem:[%s2355 + $0x1e0] sm:$0xff]
        %v2417 = vld [vmem:[%s2355 + $0x1e8] sm:$0xff]
        %v2418 = vld [vmem:[%s2355 + $0x1f0] sm:$0xff]
        %v2419 = vld [vmem:[%s2355 + $0x1f8] sm:$0xff]
        %2420 = vmatprep.subr.mxu0 %v2357
        %2421 = vmatpush1.msra.mxu0 %v2356
        %2422 = vmatprep.subr.mxu0 %v2359
        %2423 = vmatpush1.msra.mxu0 %v2358
        %2424 = vmatprep.subr.mxu0 %v2361
        %2425 = vmatpush1.msra.mxu0 %v2360
        %2426 = vmatprep.subr.mxu0 %v2363
        %2427 = vmatpush1.msra.mxu0 %v2362
        %2428 = vmatprep.subr.mxu0 %v2365
        %2429 = vmatpush1.msra.mxu0 %v2364
        %2430 = vmatprep.subr.mxu0 %v2367
        %2431 = vmatpush1.msra.mxu0 %v2366
        %2432 = vmatprep.subr.mxu0 %v2369
        %2433 = vmatpush1.msra.mxu0 %v2368
        %2434 = vmatprep.subr.mxu0 %v2371
        %2435 = vmatpush1.msra.mxu0 %v2370
        %2436 = vmatprep.subr.mxu0 %v2373
        %2437 = vmatpush1.msra.mxu0 %v2372
        %2438 = vmatprep.subr.mxu0 %v2375
        %2439 = vmatpush1.msra.mxu0 %v2374
        %2440 = vmatprep.subr.mxu0 %v2377
        %2441 = vmatpush1.msra.mxu0 %v2376
        %2442 = vmatprep.subr.mxu0 %v2379
        %2443 = vmatpush1.msra.mxu0 %v2378
        %2444 = vmatprep.subr.mxu0 %v2381
        %2445 = vmatpush1.msra.mxu0 %v2380
        %2446 = vmatprep.subr.mxu0 %v2383
        %2447 = vmatpush1.msra.mxu0 %v2382
        %2448 = vmatprep.subr.mxu0 %v2385
        %2449 = vmatpush1.msra.mxu0 %v2384
        %2450 = vmatprep.subr.mxu0 %v2387
        %2451 = vmatpush1.msra.mxu0 %v2386
        %2452 = vmatprep.subr.mxu0 %v2389
        %2453 = vmatpush1.msra.mxu0 %v2388
        %2454 = vmatprep.subr.mxu0 %v2391
        %2455 = vmatpush1.msra.mxu0 %v2390
        %2456 = vmatprep.subr.mxu0 %v2393
        %2457 = vmatpush1.msra.mxu0 %v2392
        %2458 = vmatprep.subr.mxu0 %v2395
        %2459 = vmatpush1.msra.mxu0 %v2394
        %2460 = vmatprep.subr.mxu0 %v2397
        %2461 = vmatpush1.msra.mxu0 %v2396
        %2462 = vmatprep.subr.mxu0 %v2399
        %2463 = vmatpush1.msra.mxu0 %v2398
        %2464 = vmatprep.subr.mxu0 %v2401
        %2465 = vmatpush1.msra.mxu0 %v2400
        %2466 = vmatprep.subr.mxu0 %v2403
        %2467 = vmatpush1.msra.mxu0 %v2402
        %2468 = vmatprep.subr.mxu0 %v2405
        %2469 = vmatpush1.msra.mxu0 %v2404
        %2470 = vmatprep.subr.mxu0 %v2407
        %2471 = vmatpush1.msra.mxu0 %v2406
        %2472 = vmatprep.subr.mxu0 %v2409
        %2473 = vmatpush1.msra.mxu0 %v2408
        %2474 = vmatprep.subr.mxu0 %v2411
        %2475 = vmatpush1.msra.mxu0 %v2410
        %2476 = vmatprep.subr.mxu0 %v2413
        %2477 = vmatpush1.msra.mxu0 %v2412
        %2478 = vmatprep.subr.mxu0 %v2415
        %2479 = vmatpush1.msra.mxu0 %v2414
        %2480 = vmatprep.subr.mxu0 %v2417
        %2481 = vmatpush1.msra.mxu0 %v2416
        %2482 = vmatprep.subr.mxu0 %v2419
        %2483 = vmatpush1.msra.mxu0 %v2418
        %2484 = vmatprep.mubr.f32.mxu0 %v598
        %2485 = vmatmul.mubr.f32.gmra.mrb[0].mxu0 %v597
        %v2486 = vpop.f32.mrb[0].mxu0
        %v2487 = vadd.f32 0.0, %v2486
        %v2488 = vpop.f32.mrb[0].mxu0
        %v2489 = vadd.f32 0.0, %v2488
        %2490 = vdwg.mxu0
        %s2491 = scalar_lea.vmem %s6, 64
        %v2492 = vld [vmem:[%s2491] sm:$0xff]
        %v2494 = vsel %vm873, %v2492, 0
        %v2497 = vsel %vm877, %v2487, 0
        %v2500 = vsel %vm877, %v2489, 0
        %2502 = vmatprep.subr.mxu0 %v2500
        %2503 = vmatpush1.msra.mxu0 %v2497
        %2504 = vmatprep.subr.mxu0 0.0
        %2505 = vmatpush1.msra.mxu0 0.0
        %2506 = vmatprep.subr.mxu0 0.0
        %2507 = vmatpush1.msra.mxu0 0.0
        %2508 = vmatprep.subr.mxu0 0.0
        %2509 = vmatpush1.msra.mxu0 0.0
        %2510 = vmatprep.subr.mxu0 0.0
        %2511 = vmatpush1.msra.mxu0 0.0
        %2512 = vmatprep.subr.mxu0 0.0
        %2513 = vmatpush1.msra.mxu0 0.0
        %2514 = vmatprep.subr.mxu0 0.0
        %2515 = vmatpush1.msra.mxu0 0.0
        %2516 = vmatprep.subr.mxu0 0.0
        %2517 = vmatpush1.msra.mxu0 0.0
        %2518 = vmatprep.subr.mxu0 0.0
        %2519 = vmatpush1.msra.mxu0 0.0
        %2520 = vmatprep.subr.mxu0 0.0
        %2521 = vmatpush1.msra.mxu0 0.0
        %2522 = vmatprep.subr.mxu0 0.0
        %2523 = vmatpush1.msra.mxu0 0.0
        %2524 = vmatprep.subr.mxu0 0.0
        %2525 = vmatpush1.msra.mxu0 0.0
        %2526 = vmatprep.subr.mxu0 0.0
        %2527 = vmatpush1.msra.mxu0 0.0
        %2528 = vmatprep.subr.mxu0 0.0
        %2529 = vmatpush1.msra.mxu0 0.0
        %2530 = vmatprep.subr.mxu0 0.0
        %2531 = vmatpush1.msra.mxu0 0.0
        %2532 = vmatprep.subr.mxu0 0.0
        %2533 = vmatpush1.msra.mxu0 0.0
        %2534 = vmatprep.subr.mxu0 0.0
        %2535 = vmatpush1.msra.mxu0 0.0
        %2536 = vmatprep.subr.mxu0 0.0
        %2537 = vmatpush1.msra.mxu0 0.0
        %2538 = vmatprep.subr.mxu0 0.0
        %2539 = vmatpush1.msra.mxu0 0.0
        %2540 = vmatprep.subr.mxu0 0.0
        %2541 = vmatpush1.msra.mxu0 0.0
        %2542 = vmatprep.subr.mxu0 0.0
        %2543 = vmatpush1.msra.mxu0 0.0
        %2544 = vmatprep.subr.mxu0 0.0
        %2545 = vmatpush1.msra.mxu0 0.0
        %2546 = vmatprep.subr.mxu0 0.0
        %2547 = vmatpush1.msra.mxu0 0.0
        %2548 = vmatprep.subr.mxu0 0.0
        %2549 = vmatpush1.msra.mxu0 0.0
        %2550 = vmatprep.subr.mxu0 0.0
        %2551 = vmatpush1.msra.mxu0 0.0
        %2552 = vmatprep.subr.mxu0 0.0
        %2553 = vmatpush1.msra.mxu0 0.0
        %2554 = vmatprep.subr.mxu0 0.0
        %2555 = vmatpush1.msra.mxu0 0.0
        %2556 = vmatprep.subr.mxu0 0.0
        %2557 = vmatpush1.msra.mxu0 0.0
        %2558 = vmatprep.subr.mxu0 0.0
        %2559 = vmatpush1.msra.mxu0 0.0
        %2560 = vmatprep.subr.mxu0 0.0
        %2561 = vmatpush1.msra.mxu0 0.0
        %2562 = vmatprep.subr.mxu0 0.0
        %2563 = vmatpush1.msra.mxu0 0.0
        %2564 = vmatprep.subr.mxu0 0.0
        %2565 = vmatpush1.msra.mxu0 0.0
        %2566 = vmatprep.mubr.f32.mxu0 0.0
        %2567 = vmatmul.mubr.f32.gmra.mrb[0].mxu0 %v2494
        %v2568 = vpop.f32.mrb[0].mxu0
        %v2569 = vadd.f32 0.0, %v2568
        %v2570 = vpop.f32.mrb[0].mxu0
        %v2571 = vadd.f32 0.0, %v2570
        %2572 = vdwg.mxu0
        %v2573 = vadd.f32 %v2353, %v2569
        %v2574 = vadd.f32 %v2354, %v2571
        %v2575 = vld [vmem:[%s7] sm:$0xff]
        %2577 = vset.pattern.permute.xlu0 0
        %2578 = vperm.xlu0 %2577, %v2575
        %v2579 = vpop.permute.xlu0 %2578
        %v2581 = vadd.f32 %v2573, %v2579
        %v2582 = vadd.f32 %v2574, %v2579
        %v2583 = vmax.f32 %v2581, 0.0
        %v2584 = vmax.f32 %v2582, 0.0
        %2585 = vmatprep.subr.mxu0 %v600
        %2586 = vmatpush1.msra.mxu0 %v599
        %2587 = vmatprep.subr.mxu0 %v602
        %2588 = vmatpush1.msra.mxu0 %v601
        %2589 = vmatprep.subr.mxu0 %v604
        %2590 = vmatpush1.msra.mxu0 %v603
        %2591 = vmatprep.subr.mxu0 %v606
        %2592 = vmatpush1.msra.mxu0 %v605
        %2593 = vmatprep.subr.mxu0 %v608
        %2594 = vmatpush1.msra.mxu0 %v607
        %2595 = vmatprep.subr.mxu0 %v610
        %2596 = vmatpush1.msra.mxu0 %v609
        %2597 = vmatprep.subr.mxu0 %v612
        %2598 = vmatpush1.msra.mxu0 %v611
        %2599 = vmatprep.subr.mxu0 %v614
        %2600 = vmatpush1.msra.mxu0 %v613
        %2601 = vmatprep.subr.mxu0 %v616
        %2602 = vmatpush1.msra.mxu0 %v615
        %2603 = vmatprep.subr.mxu0 %v618
        %2604 = vmatpush1.msra.mxu0 %v617
        %2605 = vmatprep.subr.mxu0 %v620
        %2606 = vmatpush1.msra.mxu0 %v619
        %2607 = vmatprep.subr.mxu0 %v622
        %2608 = vmatpush1.msra.mxu0 %v621
        %2609 = vmatprep.subr.mxu0 %v624
        %2610 = vmatpush1.msra.mxu0 %v623
        %2611 = vmatprep.subr.mxu0 %v626
        %2612 = vmatpush1.msra.mxu0 %v625
        %2613 = vmatprep.subr.mxu0 %v628
        %2614 = vmatpush1.msra.mxu0 %v627
        %2615 = vmatprep.subr.mxu0 %v630
        %2616 = vmatpush1.msra.mxu0 %v629
        %2617 = vmatprep.subr.mxu0 %v632
        %2618 = vmatpush1.msra.mxu0 %v631
        %2619 = vmatprep.subr.mxu0 %v634
        %2620 = vmatpush1.msra.mxu0 %v633
        %2621 = vmatprep.subr.mxu0 %v636
        %2622 = vmatpush1.msra.mxu0 %v635
        %2623 = vmatprep.subr.mxu0 %v638
        %2624 = vmatpush1.msra.mxu0 %v637
        %2625 = vmatprep.subr.mxu0 %v640
        %2626 = vmatpush1.msra.mxu0 %v639
        %2627 = vmatprep.subr.mxu0 %v642
        %2628 = vmatpush1.msra.mxu0 %v641
        %2629 = vmatprep.subr.mxu0 %v644
        %2630 = vmatpush1.msra.mxu0 %v643
        %2631 = vmatprep.subr.mxu0 %v646
        %2632 = vmatpush1.msra.mxu0 %v645
        %2633 = vmatprep.subr.mxu0 %v648
        %2634 = vmatpush1.msra.mxu0 %v647
        %2635 = vmatprep.subr.mxu0 %v650
        %2636 = vmatpush1.msra.mxu0 %v649
        %2637 = vmatprep.subr.mxu0 %v652
        %2638 = vmatpush1.msra.mxu0 %v651
        %2639 = vmatprep.subr.mxu0 %v654
        %2640 = vmatpush1.msra.mxu0 %v653
        %2641 = vmatprep.subr.mxu0 %v656
        %2642 = vmatpush1.msra.mxu0 %v655
        %2643 = vmatprep.subr.mxu0 %v658
        %2644 = vmatpush1.msra.mxu0 %v657
        %2645 = vmatprep.subr.mxu0 %v660
        %2646 = vmatpush1.msra.mxu0 %v659
        %2647 = vmatprep.subr.mxu0 %v662
        %2648 = vmatpush1.msra.mxu0 %v661
        %2649 = vmatprep.mubr.f32.mxu0 %v2584
        %2650 = vmatmul.mubr.f32.gmra.mrb[0].mxu0 %v2583
        %v2651 = vpop.f32.mrb[0].mxu0
        %v2652 = vadd.f32 0.0, %v2651
        %v2653 = vpop.f32.mrb[0].mxu0
        %v2654 = vadd.f32 0.0, %v2653
        %2655 = vdwg.mxu0
        %v2656 = vld [vmem:[%s8] sm:$0xf]
        %2657 = vmatprep.subr.mxu0 %v737
        %2658 = vmatpush1.msra.mxu0 %v736
        %2659 = vmatprep.subr.mxu0 %v739
        %2660 = vmatpush1.msra.mxu0 %v738
        %2661 = vmatprep.subr.mxu0 %v741
        %2662 = vmatpush1.msra.mxu0 %v740
        %2663 = vmatprep.subr.mxu0 %v743
        %2664 = vmatpush1.msra.mxu0 %v742
        %2665 = vmatprep.subr.mxu0 %v745
        %2666 = vmatpush1.msra.mxu0 %v744
        %2667 = vmatprep.subr.mxu0 %v747
        %2668 = vmatpush1.msra.mxu0 %v746
        %2669 = vmatprep.subr.mxu0 %v749
        %2670 = vmatpush1.msra.mxu0 %v748
        %2671 = vmatprep.subr.mxu0 %v751
        %2672 = vmatpush1.msra.mxu0 %v750
        %2673 = vmatprep.subr.mxu0 %v753
        %2674 = vmatpush1.msra.mxu0 %v752
        %2675 = vmatprep.subr.mxu0 %v755
        %2676 = vmatpush1.msra.mxu0 %v754
        %2677 = vmatprep.subr.mxu0 %v757
        %2678 = vmatpush1.msra.mxu0 %v756
        %2679 = vmatprep.subr.mxu0 %v759
        %2680 = vmatpush1.msra.mxu0 %v758
        %2681 = vmatprep.subr.mxu0 %v761
        %2682 = vmatpush1.msra.mxu0 %v760
        %2683 = vmatprep.subr.mxu0 %v763
        %2684 = vmatpush1.msra.mxu0 %v762
        %2685 = vmatprep.subr.mxu0 %v765
        %2686 = vmatpush1.msra.mxu0 %v764
        %2687 = vmatprep.subr.mxu0 %v767
        %2688 = vmatpush1.msra.mxu0 %v766
        %2689 = vmatprep.subr.mxu0 %v769
        %2690 = vmatpush1.msra.mxu0 %v768
        %2691 = vmatprep.subr.mxu0 %v771
        %2692 = vmatpush1.msra.mxu0 %v770
        %2693 = vmatprep.subr.mxu0 %v773
        %2694 = vmatpush1.msra.mxu0 %v772
        %2695 = vmatprep.subr.mxu0 %v775
        %2696 = vmatpush1.msra.mxu0 %v774
        %2697 = vmatprep.subr.mxu0 %v777
        %2698 = vmatpush1.msra.mxu0 %v776
        %2699 = vmatprep.subr.mxu0 %v779
        %2700 = vmatpush1.msra.mxu0 %v778
        %2701 = vmatprep.subr.mxu0 %v781
        %2702 = vmatpush1.msra.mxu0 %v780
        %2703 = vmatprep.subr.mxu0 %v783
        %2704 = vmatpush1.msra.mxu0 %v782
        %2705 = vmatprep.subr.mxu0 %v785
        %2706 = vmatpush1.msra.mxu0 %v784
        %2707 = vmatprep.subr.mxu0 %v787
        %2708 = vmatpush1.msra.mxu0 %v786
        %2709 = vmatprep.subr.mxu0 %v789
        %2710 = vmatpush1.msra.mxu0 %v788
        %2711 = vmatprep.subr.mxu0 %v791
        %2712 = vmatpush1.msra.mxu0 %v790
        %2713 = vmatprep.subr.mxu0 %v793
        %2714 = vmatpush1.msra.mxu0 %v792
        %2715 = vmatprep.subr.mxu0 %v795
        %2716 = vmatpush1.msra.mxu0 %v794
        %2717 = vmatprep.subr.mxu0 %v797
        %2718 = vmatpush1.msra.mxu0 %v796
        %2719 = vmatprep.subr.mxu0 %v799
        %2720 = vmatpush1.msra.mxu0 %v798
        %2721 = vmatprep.mubr.f32.mxu0 %v2584
        %2722 = vmatmul.mubr.f32.gmra.mrb[0].mxu0 %v2583
        %v2723 = vpop.f32.mrb[0].mxu0
        %v2724 = vadd.f32 0.0, %v2723
        %v2725 = vpop.f32.mrb[0].mxu0
        %v2726 = vadd.f32 0.0, %v2725
        %2727 = vdwg.mxu0
        %s2728 = scalar_lea.vmem %s8, 4
        %v2729 = vld [vmem:[%s2728] sm:$0xf]
        %v2731 = vsel %vm505, %v2729, 0
        %2733 = vmatprep.subr.mxu0 %v2726
        %2734 = vmatpush1.msra.mxu0 %v2724
        %2735 = vmatprep.subr.mxu0 0.0
        %2736 = vmatpush1.msra.mxu0 0.0
        %2737 = vmatprep.subr.mxu0 0.0
        %2738 = vmatpush1.msra.mxu0 0.0
        %2739 = vmatprep.subr.mxu0 0.0
        %2740 = vmatpush1.msra.mxu0 0.0
        %2741 = vmatprep.subr.mxu0 0.0
        %2742 = vmatpush1.msra.mxu0 0.0
        %2743 = vmatprep.subr.mxu0 0.0
        %2744 = vmatpush1.msra.mxu0 0.0
        %2745 = vmatprep.subr.mxu0 0.0
        %2746 = vmatpush1.msra.mxu0 0.0
        %2747 = vmatprep.subr.mxu0 0.0
        %2748 = vmatpush1.msra.mxu0 0.0
        %2749 = vmatprep.subr.mxu0 0.0
        %2750 = vmatpush1.msra.mxu0 0.0
        %2751 = vmatprep.subr.mxu0 0.0
        %2752 = vmatpush1.msra.mxu0 0.0
        %2753 = vmatprep.subr.mxu0 0.0
        %2754 = vmatpush1.msra.mxu0 0.0
        %2755 = vmatprep.subr.mxu0 0.0
        %2756 = vmatpush1.msra.mxu0 0.0
        %2757 = vmatprep.subr.mxu0 0.0
        %2758 = vmatpush1.msra.mxu0 0.0
        %2759 = vmatprep.subr.mxu0 0.0
        %2760 = vmatpush1.msra.mxu0 0.0
        %2761 = vmatprep.subr.mxu0 0.0
        %2762 = vmatpush1.msra.mxu0 0.0
        %2763 = vmatprep.subr.mxu0 0.0
        %2764 = vmatpush1.msra.mxu0 0.0
        %2765 = vmatprep.subr.mxu0 0.0
        %2766 = vmatpush1.msra.mxu0 0.0
        %2767 = vmatprep.subr.mxu0 0.0
        %2768 = vmatpush1.msra.mxu0 0.0
        %2769 = vmatprep.subr.mxu0 0.0
        %2770 = vmatpush1.msra.mxu0 0.0
        %2771 = vmatprep.subr.mxu0 0.0
        %2772 = vmatpush1.msra.mxu0 0.0
        %2773 = vmatprep.subr.mxu0 0.0
        %2774 = vmatpush1.msra.mxu0 0.0
        %2775 = vmatprep.subr.mxu0 0.0
        %2776 = vmatpush1.msra.mxu0 0.0
        %2777 = vmatprep.subr.mxu0 0.0
        %2778 = vmatpush1.msra.mxu0 0.0
        %2779 = vmatprep.subr.mxu0 0.0
        %2780 = vmatpush1.msra.mxu0 0.0
        %2781 = vmatprep.subr.mxu0 0.0
        %2782 = vmatpush1.msra.mxu0 0.0
        %2783 = vmatprep.subr.mxu0 0.0
        %2784 = vmatpush1.msra.mxu0 0.0
        %2785 = vmatprep.subr.mxu0 0.0
        %2786 = vmatpush1.msra.mxu0 0.0
        %2787 = vmatprep.subr.mxu0 0.0
        %2788 = vmatpush1.msra.mxu0 0.0
        %2789 = vmatprep.subr.mxu0 0.0
        %2790 = vmatpush1.msra.mxu0 0.0
        %2791 = vmatprep.subr.mxu0 0.0
        %2792 = vmatpush1.msra.mxu0 0.0
        %2793 = vmatprep.subr.mxu0 0.0
        %2794 = vmatpush1.msra.mxu0 0.0
        %2795 = vmatprep.subr.mxu0 0.0
        %2796 = vmatpush1.msra.mxu0 0.0
        %2797 = vmatprep.mubr.f32.mxu0 0.0
        %2798 = vmatmul.mubr.f32.gmra.mrb[0].mxu0 %v2731
        %v2799 = vpop.f32.mrb[0].mxu0
        %v2800 = vadd.f32 0.0, %v2799
        %v2801 = vpop.f32.mrb[0].mxu0
        %v2802 = vadd.f32 0.0, %v2801
        %2803 = vdwg.mxu0
        %v2805 = vsel %vm505, %v2656, 0
        %2807 = vmatprep.subr.mxu0 %v2654
        %2808 = vmatpush1.msra.mxu0 %v2652
        %2809 = vmatprep.subr.mxu0 0.0
        %2810 = vmatpush1.msra.mxu0 0.0
        %2811 = vmatprep.subr.mxu0 0.0
        %2812 = vmatpush1.msra.mxu0 0.0
        %2813 = vmatprep.subr.mxu0 0.0
        %2814 = vmatpush1.msra.mxu0 0.0
        %2815 = vmatprep.subr.mxu0 0.0
        %2816 = vmatpush1.msra.mxu0 0.0
        %2817 = vmatprep.subr.mxu0 0.0
        %2818 = vmatpush1.msra.mxu0 0.0
        %2819 = vmatprep.subr.mxu0 0.0
        %2820 = vmatpush1.msra.mxu0 0.0
        %2821 = vmatprep.subr.mxu0 0.0
        %2822 = vmatpush1.msra.mxu0 0.0
        %2823 = vmatprep.subr.mxu0 0.0
        %2824 = vmatpush1.msra.mxu0 0.0
        %2825 = vmatprep.subr.mxu0 0.0
        %2826 = vmatpush1.msra.mxu0 0.0
        %2827 = vmatprep.subr.mxu0 0.0
        %2828 = vmatpush1.msra.mxu0 0.0
        %2829 = vmatprep.subr.mxu0 0.0
        %2830 = vmatpush1.msra.mxu0 0.0
        %2831 = vmatprep.subr.mxu0 0.0
        %2832 = vmatpush1.msra.mxu0 0.0
        %2833 = vmatprep.subr.mxu0 0.0
        %2834 = vmatpush1.msra.mxu0 0.0
        %2835 = vmatprep.subr.mxu0 0.0
        %2836 = vmatpush1.msra.mxu0 0.0
        %2837 = vmatprep.subr.mxu0 0.0
        %2838 = vmatpush1.msra.mxu0 0.0
        %2839 = vmatprep.subr.mxu0 0.0
        %2840 = vmatpush1.msra.mxu0 0.0
        %2841 = vmatprep.subr.mxu0 0.0
        %2842 = vmatpush1.msra.mxu0 0.0
        %2843 = vmatprep.subr.mxu0 0.0
        %2844 = vmatpush1.msra.mxu0 0.0
        %2845 = vmatprep.subr.mxu0 0.0
        %2846 = vmatpush1.msra.mxu0 0.0
        %2847 = vmatprep.subr.mxu0 0.0
        %2848 = vmatpush1.msra.mxu0 0.0
        %2849 = vmatprep.subr.mxu0 0.0
        %2850 = vmatpush1.msra.mxu0 0.0
        %2851 = vmatprep.subr.mxu0 0.0
        %2852 = vmatpush1.msra.mxu0 0.0
        %2853 = vmatprep.subr.mxu0 0.0
        %2854 = vmatpush1.msra.mxu0 0.0
        %2855 = vmatprep.subr.mxu0 0.0
        %2856 = vmatpush1.msra.mxu0 0.0
        %2857 = vmatprep.subr.mxu0 0.0
        %2858 = vmatpush1.msra.mxu0 0.0
        %2859 = vmatprep.subr.mxu0 0.0
        %2860 = vmatpush1.msra.mxu0 0.0
        %2861 = vmatprep.subr.mxu0 0.0
        %2862 = vmatpush1.msra.mxu0 0.0
        %2863 = vmatprep.subr.mxu0 0.0
        %2864 = vmatpush1.msra.mxu0 0.0
        %2865 = vmatprep.subr.mxu0 0.0
        %2866 = vmatpush1.msra.mxu0 0.0
        %2867 = vmatprep.subr.mxu0 0.0
        %2868 = vmatpush1.msra.mxu0 0.0
        %2869 = vmatprep.subr.mxu0 0.0
        %2870 = vmatpush1.msra.mxu0 0.0
        %2871 = vmatprep.mubr.f32.mxu0 0.0
        %2872 = vmatmul.mubr.f32.gmra.mrb[0].mxu0 %v2805
        %v2873 = vpop.f32.mrb[0].mxu0
        %v2874 = vadd.f32 %v2800, %v2873
        %v2875 = vpop.f32.mrb[0].mxu0
        %v2876 = vadd.f32 %v2802, %v2875
        %2877 = vdwg.mxu0
        %2878 = vmatprep.subr.mxu0 %v1037
        %2879 = vmatpush1.msra.mxu0 %v1036
        %2880 = vmatprep.subr.mxu0 %v1039
        %2881 = vmatpush1.msra.mxu0 %v1038
        %2882 = vmatprep.subr.mxu0 %v1041
        %2883 = vmatpush1.msra.mxu0 %v1040
        %2884 = vmatprep.subr.mxu0 %v1043
        %2885 = vmatpush1.msra.mxu0 %v1042
        %2886 = vmatprep.subr.mxu0 %v1045
        %2887 = vmatpush1.msra.mxu0 %v1044
        %2888 = vmatprep.subr.mxu0 %v1047
        %2889 = vmatpush1.msra.mxu0 %v1046
        %2890 = vmatprep.subr.mxu0 %v1049
        %2891 = vmatpush1.msra.mxu0 %v1048
        %2892 = vmatprep.subr.mxu0 %v1051
        %2893 = vmatpush1.msra.mxu0 %v1050
        %2894 = vmatprep.subr.mxu0 %v1053
        %2895 = vmatpush1.msra.mxu0 %v1052
        %2896 = vmatprep.subr.mxu0 %v1055
        %2897 = vmatpush1.msra.mxu0 %v1054
        %2898 = vmatprep.subr.mxu0 %v1057
        %2899 = vmatpush1.msra.mxu0 %v1056
        %2900 = vmatprep.subr.mxu0 %v1059
        %2901 = vmatpush1.msra.mxu0 %v1058
        %2902 = vmatprep.subr.mxu0 %v1061
        %2903 = vmatpush1.msra.mxu0 %v1060
        %2904 = vmatprep.subr.mxu0 %v1063
        %2905 = vmatpush1.msra.mxu0 %v1062
        %2906 = vmatprep.subr.mxu0 %v1065
        %2907 = vmatpush1.msra.mxu0 %v1064
        %2908 = vmatprep.subr.mxu0 %v1067
        %2909 = vmatpush1.msra.mxu0 %v1066
        %2910 = vmatprep.subr.mxu0 %v1069
        %2911 = vmatpush1.msra.mxu0 %v1068
        %2912 = vmatprep.subr.mxu0 %v1071
        %2913 = vmatpush1.msra.mxu0 %v1070
        %2914 = vmatprep.subr.mxu0 %v1073
        %2915 = vmatpush1.msra.mxu0 %v1072
        %2916 = vmatprep.subr.mxu0 %v1075
        %2917 = vmatpush1.msra.mxu0 %v1074
        %2918 = vmatprep.subr.mxu0 %v1077
        %2919 = vmatpush1.msra.mxu0 %v1076
        %2920 = vmatprep.subr.mxu0 %v1079
        %2921 = vmatpush1.msra.mxu0 %v1078
        %2922 = vmatprep.subr.mxu0 %v1081
        %2923 = vmatpush1.msra.mxu0 %v1080
        %2924 = vmatprep.subr.mxu0 %v1083
        %2925 = vmatpush1.msra.mxu0 %v1082
        %2926 = vmatprep.subr.mxu0 %v1085
        %2927 = vmatpush1.msra.mxu0 %v1084
        %2928 = vmatprep.subr.mxu0 %v1087
        %2929 = vmatpush1.msra.mxu0 %v1086
        %2930 = vmatprep.subr.mxu0 %v1089
        %2931 = vmatpush1.msra.mxu0 %v1088
        %2932 = vmatprep.subr.mxu0 %v1091
        %2933 = vmatpush1.msra.mxu0 %v1090
        %2934 = vmatprep.subr.mxu0 %v1093
        %2935 = vmatpush1.msra.mxu0 %v1092
        %2936 = vmatprep.subr.mxu0 %v1095
        %2937 = vmatpush1.msra.mxu0 %v1094
        %2938 = vmatprep.subr.mxu0 %v1097
        %2939 = vmatpush1.msra.mxu0 %v1096
        %2940 = vmatprep.subr.mxu0 %v1099
        %2941 = vmatpush1.msra.mxu0 %v1098
        %2942 = vmatprep.mubr.f32.mxu0 %v2584
        %2943 = vmatmul.mubr.f32.gmra.mrb[0].mxu0 %v2583
        %v2944 = vpop.f32.mrb[0].mxu0
        %v2945 = vadd.f32 0.0, %v2944
        %v2946 = vpop.f32.mrb[0].mxu0
        %v2947 = vadd.f32 0.0, %v2946
        %2948 = vdwg.mxu0
        %s2949 = scalar_lea.vmem %s8, 8
        %v2950 = vld [vmem:[%s2949] sm:$0xf]
        %v2952 = vsel %vm505, %v2950, 0
        %2954 = vmatprep.subr.mxu0 %v2947
        %2955 = vmatpush1.msra.mxu0 %v2945
        %2956 = vmatprep.subr.mxu0 0.0
        %2957 = vmatpush1.msra.mxu0 0.0
        %2958 = vmatprep.subr.mxu0 0.0
        %2959 = vmatpush1.msra.mxu0 0.0
        %2960 = vmatprep.subr.mxu0 0.0
        %2961 = vmatpush1.msra.mxu0 0.0
        %2962 = vmatprep.subr.mxu0 0.0
        %2963 = vmatpush1.msra.mxu0 0.0
        %2964 = vmatprep.subr.mxu0 0.0
        %2965 = vmatpush1.msra.mxu0 0.0
        %2966 = vmatprep.subr.mxu0 0.0
        %2967 = vmatpush1.msra.mxu0 0.0
        %2968 = vmatprep.subr.mxu0 0.0
        %2969 = vmatpush1.msra.mxu0 0.0
        %2970 = vmatprep.subr.mxu0 0.0
        %2971 = vmatpush1.msra.mxu0 0.0
        %2972 = vmatprep.subr.mxu0 0.0
        %2973 = vmatpush1.msra.mxu0 0.0
        %2974 = vmatprep.subr.mxu0 0.0
        %2975 = vmatpush1.msra.mxu0 0.0
        %2976 = vmatprep.subr.mxu0 0.0
        %2977 = vmatpush1.msra.mxu0 0.0
        %2978 = vmatprep.subr.mxu0 0.0
        %2979 = vmatpush1.msra.mxu0 0.0
        %2980 = vmatprep.subr.mxu0 0.0
        %2981 = vmatpush1.msra.mxu0 0.0
        %2982 = vmatprep.subr.mxu0 0.0
        %2983 = vmatpush1.msra.mxu0 0.0
        %2984 = vmatprep.subr.mxu0 0.0
        %2985 = vmatpush1.msra.mxu0 0.0
        %2986 = vmatprep.subr.mxu0 0.0
        %2987 = vmatpush1.msra.mxu0 0.0
        %2988 = vmatprep.subr.mxu0 0.0
        %2989 = vmatpush1.msra.mxu0 0.0
        %2990 = vmatprep.subr.mxu0 0.0
        %2991 = vmatpush1.msra.mxu0 0.0
        %2992 = vmatprep.subr.mxu0 0.0
        %2993 = vmatpush1.msra.mxu0 0.0
        %2994 = vmatprep.subr.mxu0 0.0
        %2995 = vmatpush1.msra.mxu0 0.0
        %2996 = vmatprep.subr.mxu0 0.0
        %2997 = vmatpush1.msra.mxu0 0.0
        %2998 = vmatprep.subr.mxu0 0.0
        %2999 = vmatpush1.msra.mxu0 0.0
        %3000 = vmatprep.subr.mxu0 0.0
        %3001 = vmatpush1.msra.mxu0 0.0
        %3002 = vmatprep.subr.mxu0 0.0
        %3003 = vmatpush1.msra.mxu0 0.0
        %3004 = vmatprep.subr.mxu0 0.0
        %3005 = vmatpush1.msra.mxu0 0.0
        %3006 = vmatprep.subr.mxu0 0.0
        %3007 = vmatpush1.msra.mxu0 0.0
        %3008 = vmatprep.subr.mxu0 0.0
        %3009 = vmatpush1.msra.mxu0 0.0
        %3010 = vmatprep.subr.mxu0 0.0
        %3011 = vmatpush1.msra.mxu0 0.0
        %3012 = vmatprep.subr.mxu0 0.0
        %3013 = vmatpush1.msra.mxu0 0.0
        %3014 = vmatprep.subr.mxu0 0.0
        %3015 = vmatpush1.msra.mxu0 0.0
        %3016 = vmatprep.subr.mxu0 0.0
        %3017 = vmatpush1.msra.mxu0 0.0
        %3018 = vmatprep.mubr.f32.mxu0 0.0
        %3019 = vmatmul.mubr.f32.gmra.mrb[0].mxu0 %v2952
        %v3020 = vpop.f32.mrb[0].mxu0
        %v3021 = vadd.f32 0.0, %v3020
        %v3022 = vpop.f32.mrb[0].mxu0
        %v3023 = vadd.f32 0.0, %v3022
        %3024 = vdwg.mxu0
        %v3025 = vadd.f32 %v2874, %v3021
        %v3026 = vadd.f32 %v2876, %v3023
        %3027 = vmatprep.subr.mxu0 %v1257
        %3028 = vmatpush1.msra.mxu0 %v1256
        %3029 = vmatprep.subr.mxu0 %v1259
        %3030 = vmatpush1.msra.mxu0 %v1258
        %3031 = vmatprep.subr.mxu0 %v1261
        %3032 = vmatpush1.msra.mxu0 %v1260
        %3033 = vmatprep.subr.mxu0 %v1263
        %3034 = vmatpush1.msra.mxu0 %v1262
        %3035 = vmatprep.subr.mxu0 %v1265
        %3036 = vmatpush1.msra.mxu0 %v1264
        %3037 = vmatprep.subr.mxu0 %v1267
        %3038 = vmatpush1.msra.mxu0 %v1266
        %3039 = vmatprep.subr.mxu0 %v1269
        %3040 = vmatpush1.msra.mxu0 %v1268
        %3041 = vmatprep.subr.mxu0 %v1271
        %3042 = vmatpush1.msra.mxu0 %v1270
        %3043 = vmatprep.subr.mxu0 %v1273
        %3044 = vmatpush1.msra.mxu0 %v1272
        %3045 = vmatprep.subr.mxu0 %v1275
        %3046 = vmatpush1.msra.mxu0 %v1274
        %3047 = vmatprep.subr.mxu0 %v1277
        %3048 = vmatpush1.msra.mxu0 %v1276
        %3049 = vmatprep.subr.mxu0 %v1279
        %3050 = vmatpush1.msra.mxu0 %v1278
        %3051 = vmatprep.subr.mxu0 %v1281
        %3052 = vmatpush1.msra.mxu0 %v1280
        %3053 = vmatprep.subr.mxu0 %v1283
        %3054 = vmatpush1.msra.mxu0 %v1282
        %3055 = vmatprep.subr.mxu0 %v1285
        %3056 = vmatpush1.msra.mxu0 %v1284
        %3057 = vmatprep.subr.mxu0 %v1287
        %3058 = vmatpush1.msra.mxu0 %v1286
        %3059 = vmatprep.subr.mxu0 %v1289
        %3060 = vmatpush1.msra.mxu0 %v1288
        %3061 = vmatprep.subr.mxu0 %v1291
        %3062 = vmatpush1.msra.mxu0 %v1290
        %3063 = vmatprep.subr.mxu0 %v1293
        %3064 = vmatpush1.msra.mxu0 %v1292
        %3065 = vmatprep.subr.mxu0 %v1295
        %3066 = vmatpush1.msra.mxu0 %v1294
        %3067 = vmatprep.subr.mxu0 %v1297
        %3068 = vmatpush1.msra.mxu0 %v1296
        %3069 = vmatprep.subr.mxu0 %v1299
        %3070 = vmatpush1.msra.mxu0 %v1298
        %3071 = vmatprep.subr.mxu0 %v1301
        %3072 = vmatpush1.msra.mxu0 %v1300
        %3073 = vmatprep.subr.mxu0 %v1303
        %3074 = vmatpush1.msra.mxu0 %v1302
        %3075 = vmatprep.subr.mxu0 %v1305
        %3076 = vmatpush1.msra.mxu0 %v1304
        %3077 = vmatprep.subr.mxu0 %v1307
        %3078 = vmatpush1.msra.mxu0 %v1306
        %3079 = vmatprep.subr.mxu0 %v1309
        %3080 = vmatpush1.msra.mxu0 %v1308
        %3081 = vmatprep.subr.mxu0 %v1311
        %3082 = vmatpush1.msra.mxu0 %v1310
        %3083 = vmatprep.subr.mxu0 %v1313
        %3084 = vmatpush1.msra.mxu0 %v1312
        %3085 = vmatprep.subr.mxu0 %v1315
        %3086 = vmatpush1.msra.mxu0 %v1314
        %3087 = vmatprep.subr.mxu0 %v1317
        %3088 = vmatpush1.msra.mxu0 %v1316
        %3089 = vmatprep.subr.mxu0 %v1319
        %3090 = vmatpush1.msra.mxu0 %v1318
        %3091 = vmatprep.mubr.f32.mxu0 %v2584
        %3092 = vmatmul.mubr.f32.gmra.mrb[0].mxu0 %v2583
        %v3093 = vpop.f32.mrb[0].mxu0
        %v3094 = vadd.f32 0.0, %v3093
        %v3095 = vpop.f32.mrb[0].mxu0
        %v3096 = vadd.f32 0.0, %v3095
        %3097 = vdwg.mxu0
        %s3098 = scalar_lea.vmem %s8, 12
        %v3099 = vld [vmem:[%s3098] sm:$0xf]
        %v3101 = vsel %vm505, %v3099, 0
        %3103 = vmatprep.subr.mxu0 %v3096
        %3104 = vmatpush1.msra.mxu0 %v3094
        %3105 = vmatprep.subr.mxu0 0.0
        %3106 = vmatpush1.msra.mxu0 0.0
        %3107 = vmatprep.subr.mxu0 0.0
        %3108 = vmatpush1.msra.mxu0 0.0
        %3109 = vmatprep.subr.mxu0 0.0
        %3110 = vmatpush1.msra.mxu0 0.0
        %3111 = vmatprep.subr.mxu0 0.0
        %3112 = vmatpush1.msra.mxu0 0.0
        %3113 = vmatprep.subr.mxu0 0.0
        %3114 = vmatpush1.msra.mxu0 0.0
        %3115 = vmatprep.subr.mxu0 0.0
        %3116 = vmatpush1.msra.mxu0 0.0
        %3117 = vmatprep.subr.mxu0 0.0
        %3118 = vmatpush1.msra.mxu0 0.0
        %3119 = vmatprep.subr.mxu0 0.0
        %3120 = vmatpush1.msra.mxu0 0.0
        %3121 = vmatprep.subr.mxu0 0.0
        %3122 = vmatpush1.msra.mxu0 0.0
        %3123 = vmatprep.subr.mxu0 0.0
        %3124 = vmatpush1.msra.mxu0 0.0
        %3125 = vmatprep.subr.mxu0 0.0
        %3126 = vmatpush1.msra.mxu0 0.0
        %3127 = vmatprep.subr.mxu0 0.0
        %3128 = vmatpush1.msra.mxu0 0.0
        %3129 = vmatprep.subr.mxu0 0.0
        %3130 = vmatpush1.msra.mxu0 0.0
        %3131 = vmatprep.subr.mxu0 0.0
        %3132 = vmatpush1.msra.mxu0 0.0
        %3133 = vmatprep.subr.mxu0 0.0
        %3134 = vmatpush1.msra.mxu0 0.0
        %3135 = vmatprep.subr.mxu0 0.0
        %3136 = vmatpush1.msra.mxu0 0.0
        %3137 = vmatprep.subr.mxu0 0.0
        %3138 = vmatpush1.msra.mxu0 0.0
        %3139 = vmatprep.subr.mxu0 0.0
        %3140 = vmatpush1.msra.mxu0 0.0
        %3141 = vmatprep.subr.mxu0 0.0
        %3142 = vmatpush1.msra.mxu0 0.0
        %3143 = vmatprep.subr.mxu0 0.0
        %3144 = vmatpush1.msra.mxu0 0.0
        %3145 = vmatprep.subr.mxu0 0.0
        %3146 = vmatpush1.msra.mxu0 0.0
        %3147 = vmatprep.subr.mxu0 0.0
        %3148 = vmatpush1.msra.mxu0 0.0
        %3149 = vmatprep.subr.mxu0 0.0
        %3150 = vmatpush1.msra.mxu0 0.0
        %3151 = vmatprep.subr.mxu0 0.0
        %3152 = vmatpush1.msra.mxu0 0.0
        %3153 = vmatprep.subr.mxu0 0.0
        %3154 = vmatpush1.msra.mxu0 0.0
        %3155 = vmatprep.subr.mxu0 0.0
        %3156 = vmatpush1.msra.mxu0 0.0
        %3157 = vmatprep.subr.mxu0 0.0
        %3158 = vmatpush1.msra.mxu0 0.0
        %3159 = vmatprep.subr.mxu0 0.0
        %3160 = vmatpush1.msra.mxu0 0.0
        %3161 = vmatprep.subr.mxu0 0.0
        %3162 = vmatpush1.msra.mxu0 0.0
        %3163 = vmatprep.subr.mxu0 0.0
        %3164 = vmatpush1.msra.mxu0 0.0
        %3165 = vmatprep.subr.mxu0 0.0
        %3166 = vmatpush1.msra.mxu0 0.0
        %3167 = vmatprep.mubr.f32.mxu0 0.0
        %3168 = vmatmul.mubr.f32.gmra.mrb[0].mxu0 %v3101
        %v3169 = vpop.f32.mrb[0].mxu0
        %v3170 = vadd.f32 0.0, %v3169
        %v3171 = vpop.f32.mrb[0].mxu0
        %v3172 = vadd.f32 0.0, %v3171
        %3173 = vdwg.mxu0
        %v3174 = vadd.f32 %v3025, %v3170
        %v3175 = vadd.f32 %v3026, %v3172
        %3176 = vmatprep.subr.mxu0 %v1477
        %3177 = vmatpush1.msra.mxu0 %v1476
        %3178 = vmatprep.subr.mxu0 %v1479
        %3179 = vmatpush1.msra.mxu0 %v1478
        %3180 = vmatprep.subr.mxu0 %v1481
        %3181 = vmatpush1.msra.mxu0 %v1480
        %3182 = vmatprep.subr.mxu0 %v1483
        %3183 = vmatpush1.msra.mxu0 %v1482
        %3184 = vmatprep.subr.mxu0 %v1485
        %3185 = vmatpush1.msra.mxu0 %v1484
        %3186 = vmatprep.subr.mxu0 %v1487
        %3187 = vmatpush1.msra.mxu0 %v1486
        %3188 = vmatprep.subr.mxu0 %v1489
        %3189 = vmatpush1.msra.mxu0 %v1488
        %3190 = vmatprep.subr.mxu0 %v1491
        %3191 = vmatpush1.msra.mxu0 %v1490
        %3192 = vmatprep.subr.mxu0 %v1493
        %3193 = vmatpush1.msra.mxu0 %v1492
        %3194 = vmatprep.subr.mxu0 %v1495
        %3195 = vmatpush1.msra.mxu0 %v1494
        %3196 = vmatprep.subr.mxu0 %v1497
        %3197 = vmatpush1.msra.mxu0 %v1496
        %3198 = vmatprep.subr.mxu0 %v1499
        %3199 = vmatpush1.msra.mxu0 %v1498
        %3200 = vmatprep.subr.mxu0 %v1501
        %3201 = vmatpush1.msra.mxu0 %v1500
        %3202 = vmatprep.subr.mxu0 %v1503
        %3203 = vmatpush1.msra.mxu0 %v1502
        %3204 = vmatprep.subr.mxu0 %v1505
        %3205 = vmatpush1.msra.mxu0 %v1504
        %3206 = vmatprep.subr.mxu0 %v1507
        %3207 = vmatpush1.msra.mxu0 %v1506
        %3208 = vmatprep.subr.mxu0 %v1509
        %3209 = vmatpush1.msra.mxu0 %v1508
        %3210 = vmatprep.subr.mxu0 %v1511
        %3211 = vmatpush1.msra.mxu0 %v1510
        %3212 = vmatprep.subr.mxu0 %v1513
        %3213 = vmatpush1.msra.mxu0 %v1512
        %3214 = vmatprep.subr.mxu0 %v1515
        %3215 = vmatpush1.msra.mxu0 %v1514
        %3216 = vmatprep.subr.mxu0 %v1517
        %3217 = vmatpush1.msra.mxu0 %v1516
        %3218 = vmatprep.subr.mxu0 %v1519
        %3219 = vmatpush1.msra.mxu0 %v1518
        %3220 = vmatprep.subr.mxu0 %v1521
        %3221 = vmatpush1.msra.mxu0 %v1520
        %3222 = vmatprep.subr.mxu0 %v1523
        %3223 = vmatpush1.msra.mxu0 %v1522
        %3224 = vmatprep.subr.mxu0 %v1525
        %3225 = vmatpush1.msra.mxu0 %v1524
        %3226 = vmatprep.subr.mxu0 %v1527
        %3227 = vmatpush1.msra.mxu0 %v1526
        %3228 = vmatprep.subr.mxu0 %v1529
        %3229 = vmatpush1.msra.mxu0 %v1528
        %3230 = vmatprep.subr.mxu0 %v1531
        %3231 = vmatpush1.msra.mxu0 %v1530
        %3232 = vmatprep.subr.mxu0 %v1533
        %3233 = vmatpush1.msra.mxu0 %v1532
        %3234 = vmatprep.subr.mxu0 %v1535
        %3235 = vmatpush1.msra.mxu0 %v1534
        %3236 = vmatprep.subr.mxu0 %v1537
        %3237 = vmatpush1.msra.mxu0 %v1536
        %3238 = vmatprep.subr.mxu0 %v1539
        %3239 = vmatpush1.msra.mxu0 %v1538
        %3240 = vmatprep.mubr.f32.mxu0 %v2584
        %3241 = vmatmul.mubr.f32.gmra.mrb[0].mxu0 %v2583
        %v3242 = vpop.f32.mrb[0].mxu0
        %v3243 = vadd.f32 0.0, %v3242
        %v3244 = vpop.f32.mrb[0].mxu0
        %v3245 = vadd.f32 0.0, %v3244
        %3246 = vdwg.mxu0
        %s3247 = scalar_lea.vmem %s8, 16
        %v3248 = vld [vmem:[%s3247] sm:$0xf]
        %v3250 = vsel %vm505, %v3248, 0
        %3252 = vmatprep.subr.mxu0 %v3245
        %3253 = vmatpush1.msra.mxu0 %v3243
        %3254 = vmatprep.subr.mxu0 0.0
        %3255 = vmatpush1.msra.mxu0 0.0
        %3256 = vmatprep.subr.mxu0 0.0
        %3257 = vmatpush1.msra.mxu0 0.0
        %3258 = vmatprep.subr.mxu0 0.0
        %3259 = vmatpush1.msra.mxu0 0.0
        %3260 = vmatprep.subr.mxu0 0.0
        %3261 = vmatpush1.msra.mxu0 0.0
        %3262 = vmatprep.subr.mxu0 0.0
        %3263 = vmatpush1.msra.mxu0 0.0
        %3264 = vmatprep.subr.mxu0 0.0
        %3265 = vmatpush1.msra.mxu0 0.0
        %3266 = vmatprep.subr.mxu0 0.0
        %3267 = vmatpush1.msra.mxu0 0.0
        %3268 = vmatprep.subr.mxu0 0.0
        %3269 = vmatpush1.msra.mxu0 0.0
        %3270 = vmatprep.subr.mxu0 0.0
        %3271 = vmatpush1.msra.mxu0 0.0
        %3272 = vmatprep.subr.mxu0 0.0
        %3273 = vmatpush1.msra.mxu0 0.0
        %3274 = vmatprep.subr.mxu0 0.0
        %3275 = vmatpush1.msra.mxu0 0.0
        %3276 = vmatprep.subr.mxu0 0.0
        %3277 = vmatpush1.msra.mxu0 0.0
        %3278 = vmatprep.subr.mxu0 0.0
        %3279 = vmatpush1.msra.mxu0 0.0
        %3280 = vmatprep.subr.mxu0 0.0
        %3281 = vmatpush1.msra.mxu0 0.0
        %3282 = vmatprep.subr.mxu0 0.0
        %3283 = vmatpush1.msra.mxu0 0.0
        %3284 = vmatprep.subr.mxu0 0.0
        %3285 = vmatpush1.msra.mxu0 0.0
        %3286 = vmatprep.subr.mxu0 0.0
        %3287 = vmatpush1.msra.mxu0 0.0
        %3288 = vmatprep.subr.mxu0 0.0
        %3289 = vmatpush1.msra.mxu0 0.0
        %3290 = vmatprep.subr.mxu0 0.0
        %3291 = vmatpush1.msra.mxu0 0.0
        %3292 = vmatprep.subr.mxu0 0.0
        %3293 = vmatpush1.msra.mxu0 0.0
        %3294 = vmatprep.subr.mxu0 0.0
        %3295 = vmatpush1.msra.mxu0 0.0
        %3296 = vmatprep.subr.mxu0 0.0
        %3297 = vmatpush1.msra.mxu0 0.0
        %3298 = vmatprep.subr.mxu0 0.0
        %3299 = vmatpush1.msra.mxu0 0.0
        %3300 = vmatprep.subr.mxu0 0.0
        %3301 = vmatpush1.msra.mxu0 0.0
        %3302 = vmatprep.subr.mxu0 0.0
        %3303 = vmatpush1.msra.mxu0 0.0
        %3304 = vmatprep.subr.mxu0 0.0
        %3305 = vmatpush1.msra.mxu0 0.0
        %3306 = vmatprep.subr.mxu0 0.0
        %3307 = vmatpush1.msra.mxu0 0.0
        %3308 = vmatprep.subr.mxu0 0.0
        %3309 = vmatpush1.msra.mxu0 0.0
        %3310 = vmatprep.subr.mxu0 0.0
        %3311 = vmatpush1.msra.mxu0 0.0
        %3312 = vmatprep.subr.mxu0 0.0
        %3313 = vmatpush1.msra.mxu0 0.0
        %3314 = vmatprep.subr.mxu0 0.0
        %3315 = vmatpush1.msra.mxu0 0.0
        %3316 = vmatprep.mubr.f32.mxu0 0.0
        %3317 = vmatmul.mubr.f32.gmra.mrb[0].mxu0 %v3250
        %v3318 = vpop.f32.mrb[0].mxu0
        %v3319 = vadd.f32 0.0, %v3318
        %v3320 = vpop.f32.mrb[0].mxu0
        %v3321 = vadd.f32 0.0, %v3320
        %3322 = vdwg.mxu0
        %v3323 = vadd.f32 %v3174, %v3319
        %v3324 = vadd.f32 %v3175, %v3321
        %3325 = vmatprep.subr.mxu0 %v1697
        %3326 = vmatpush1.msra.mxu0 %v1696
        %3327 = vmatprep.subr.mxu0 %v1699
        %3328 = vmatpush1.msra.mxu0 %v1698
        %3329 = vmatprep.subr.mxu0 %v1701
        %3330 = vmatpush1.msra.mxu0 %v1700
        %3331 = vmatprep.subr.mxu0 %v1703
        %3332 = vmatpush1.msra.mxu0 %v1702
        %3333 = vmatprep.subr.mxu0 %v1705
        %3334 = vmatpush1.msra.mxu0 %v1704
        %3335 = vmatprep.subr.mxu0 %v1707
        %3336 = vmatpush1.msra.mxu0 %v1706
        %3337 = vmatprep.subr.mxu0 %v1709
        %3338 = vmatpush1.msra.mxu0 %v1708
        %3339 = vmatprep.subr.mxu0 %v1711
        %3340 = vmatpush1.msra.mxu0 %v1710
        %3341 = vmatprep.subr.mxu0 %v1713
        %3342 = vmatpush1.msra.mxu0 %v1712
        %3343 = vmatprep.subr.mxu0 %v1715
        %3344 = vmatpush1.msra.mxu0 %v1714
        %3345 = vmatprep.subr.mxu0 %v1717
        %3346 = vmatpush1.msra.mxu0 %v1716
        %3347 = vmatprep.subr.mxu0 %v1719
        %3348 = vmatpush1.msra.mxu0 %v1718
        %3349 = vmatprep.subr.mxu0 %v1721
        %3350 = vmatpush1.msra.mxu0 %v1720
        %3351 = vmatprep.subr.mxu0 %v1723
        %3352 = vmatpush1.msra.mxu0 %v1722
        %3353 = vmatprep.subr.mxu0 %v1725
        %3354 = vmatpush1.msra.mxu0 %v1724
        %3355 = vmatprep.subr.mxu0 %v1727
        %3356 = vmatpush1.msra.mxu0 %v1726
        %3357 = vmatprep.subr.mxu0 %v1729
        %3358 = vmatpush1.msra.mxu0 %v1728
        %3359 = vmatprep.subr.mxu0 %v1731
        %3360 = vmatpush1.msra.mxu0 %v1730
        %3361 = vmatprep.subr.mxu0 %v1733
        %3362 = vmatpush1.msra.mxu0 %v1732
        %3363 = vmatprep.subr.mxu0 %v1735
        %3364 = vmatpush1.msra.mxu0 %v1734
        %3365 = vmatprep.subr.mxu0 %v1737
        %3366 = vmatpush1.msra.mxu0 %v1736
        %3367 = vmatprep.subr.mxu0 %v1739
        %3368 = vmatpush1.msra.mxu0 %v1738
        %3369 = vmatprep.subr.mxu0 %v1741
        %3370 = vmatpush1.msra.mxu0 %v1740
        %3371 = vmatprep.subr.mxu0 %v1743
        %3372 = vmatpush1.msra.mxu0 %v1742
        %3373 = vmatprep.subr.mxu0 %v1745
        %3374 = vmatpush1.msra.mxu0 %v1744
        %3375 = vmatprep.subr.mxu0 %v1747
        %3376 = vmatpush1.msra.mxu0 %v1746
        %3377 = vmatprep.subr.mxu0 %v1749
        %3378 = vmatpush1.msra.mxu0 %v1748
        %3379 = vmatprep.subr.mxu0 %v1751
        %3380 = vmatpush1.msra.mxu0 %v1750
        %3381 = vmatprep.subr.mxu0 %v1753
        %3382 = vmatpush1.msra.mxu0 %v1752
        %3383 = vmatprep.subr.mxu0 %v1755
        %3384 = vmatpush1.msra.mxu0 %v1754
        %3385 = vmatprep.subr.mxu0 %v1757
        %3386 = vmatpush1.msra.mxu0 %v1756
        %3387 = vmatprep.subr.mxu0 %v1759
        %3388 = vmatpush1.msra.mxu0 %v1758
        %3389 = vmatprep.mubr.f32.mxu0 %v2584
        %3390 = vmatmul.mubr.f32.gmra.mrb[0].mxu0 %v2583
        %v3391 = vpop.f32.mrb[0].mxu0
        %v3392 = vadd.f32 0.0, %v3391
        %v3393 = vpop.f32.mrb[0].mxu0
        %v3394 = vadd.f32 0.0, %v3393
        %3395 = vdwg.mxu0
        %s3396 = scalar_lea.vmem %s8, 20
        %v3397 = vld [vmem:[%s3396] sm:$0xf]
        %v3399 = vsel %vm505, %v3397, 0
        %3401 = vmatprep.subr.mxu0 %v3394
        %3402 = vmatpush1.msra.mxu0 %v3392
        %3403 = vmatprep.subr.mxu0 0.0
        %3404 = vmatpush1.msra.mxu0 0.0
        %3405 = vmatprep.subr.mxu0 0.0
        %3406 = vmatpush1.msra.mxu0 0.0
        %3407 = vmatprep.subr.mxu0 0.0
        %3408 = vmatpush1.msra.mxu0 0.0
        %3409 = vmatprep.subr.mxu0 0.0
        %3410 = vmatpush1.msra.mxu0 0.0
        %3411 = vmatprep.subr.mxu0 0.0
        %3412 = vmatpush1.msra.mxu0 0.0
        %3413 = vmatprep.subr.mxu0 0.0
        %3414 = vmatpush1.msra.mxu0 0.0
        %3415 = vmatprep.subr.mxu0 0.0
        %3416 = vmatpush1.msra.mxu0 0.0
        %3417 = vmatprep.subr.mxu0 0.0
        %3418 = vmatpush1.msra.mxu0 0.0
        %3419 = vmatprep.subr.mxu0 0.0
        %3420 = vmatpush1.msra.mxu0 0.0
        %3421 = vmatprep.subr.mxu0 0.0
        %3422 = vmatpush1.msra.mxu0 0.0
        %3423 = vmatprep.subr.mxu0 0.0
        %3424 = vmatpush1.msra.mxu0 0.0
        %3425 = vmatprep.subr.mxu0 0.0
        %3426 = vmatpush1.msra.mxu0 0.0
        %3427 = vmatprep.subr.mxu0 0.0
        %3428 = vmatpush1.msra.mxu0 0.0
        %3429 = vmatprep.subr.mxu0 0.0
        %3430 = vmatpush1.msra.mxu0 0.0
        %3431 = vmatprep.subr.mxu0 0.0
        %3432 = vmatpush1.msra.mxu0 0.0
        %3433 = vmatprep.subr.mxu0 0.0
        %3434 = vmatpush1.msra.mxu0 0.0
        %3435 = vmatprep.subr.mxu0 0.0
        %3436 = vmatpush1.msra.mxu0 0.0
        %3437 = vmatprep.subr.mxu0 0.0
        %3438 = vmatpush1.msra.mxu0 0.0
        %3439 = vmatprep.subr.mxu0 0.0
        %3440 = vmatpush1.msra.mxu0 0.0
        %3441 = vmatprep.subr.mxu0 0.0
        %3442 = vmatpush1.msra.mxu0 0.0
        %3443 = vmatprep.subr.mxu0 0.0
        %3444 = vmatpush1.msra.mxu0 0.0
        %3445 = vmatprep.subr.mxu0 0.0
        %3446 = vmatpush1.msra.mxu0 0.0
        %3447 = vmatprep.subr.mxu0 0.0
        %3448 = vmatpush1.msra.mxu0 0.0
        %3449 = vmatprep.subr.mxu0 0.0
        %3450 = vmatpush1.msra.mxu0 0.0
        %3451 = vmatprep.subr.mxu0 0.0
        %3452 = vmatpush1.msra.mxu0 0.0
        %3453 = vmatprep.subr.mxu0 0.0
        %3454 = vmatpush1.msra.mxu0 0.0
        %3455 = vmatprep.subr.mxu0 0.0
        %3456 = vmatpush1.msra.mxu0 0.0
        %3457 = vmatprep.subr.mxu0 0.0
        %3458 = vmatpush1.msra.mxu0 0.0
        %3459 = vmatprep.subr.mxu0 0.0
        %3460 = vmatpush1.msra.mxu0 0.0
        %3461 = vmatprep.subr.mxu0 0.0
        %3462 = vmatpush1.msra.mxu0 0.0
        %3463 = vmatprep.subr.mxu0 0.0
        %3464 = vmatpush1.msra.mxu0 0.0
        %3465 = vmatprep.mubr.f32.mxu0 0.0
        %3466 = vmatmul.mubr.f32.gmra.mrb[0].mxu0 %v3399
        %v3467 = vpop.f32.mrb[0].mxu0
        %v3468 = vadd.f32 0.0, %v3467
        %v3469 = vpop.f32.mrb[0].mxu0
        %v3470 = vadd.f32 0.0, %v3469
        %3471 = vdwg.mxu0
        %v3472 = vadd.f32 %v3323, %v3468
        %v3473 = vadd.f32 %v3324, %v3470
        %3474 = vmatprep.subr.mxu0 %v1917
        %3475 = vmatpush1.msra.mxu0 %v1916
        %3476 = vmatprep.subr.mxu0 %v1919
        %3477 = vmatpush1.msra.mxu0 %v1918
        %3478 = vmatprep.subr.mxu0 %v1921
        %3479 = vmatpush1.msra.mxu0 %v1920
        %3480 = vmatprep.subr.mxu0 %v1923
        %3481 = vmatpush1.msra.mxu0 %v1922
        %3482 = vmatprep.subr.mxu0 %v1925
        %3483 = vmatpush1.msra.mxu0 %v1924
        %3484 = vmatprep.subr.mxu0 %v1927
        %3485 = vmatpush1.msra.mxu0 %v1926
        %3486 = vmatprep.subr.mxu0 %v1929
        %3487 = vmatpush1.msra.mxu0 %v1928
        %3488 = vmatprep.subr.mxu0 %v1931
        %3489 = vmatpush1.msra.mxu0 %v1930
        %3490 = vmatprep.subr.mxu0 %v1933
        %3491 = vmatpush1.msra.mxu0 %v1932
        %3492 = vmatprep.subr.mxu0 %v1935
        %3493 = vmatpush1.msra.mxu0 %v1934
        %3494 = vmatprep.subr.mxu0 %v1937
        %3495 = vmatpush1.msra.mxu0 %v1936
        %3496 = vmatprep.subr.mxu0 %v1939
        %3497 = vmatpush1.msra.mxu0 %v1938
        %3498 = vmatprep.subr.mxu0 %v1941
        %3499 = vmatpush1.msra.mxu0 %v1940
        %3500 = vmatprep.subr.mxu0 %v1943
        %3501 = vmatpush1.msra.mxu0 %v1942
        %3502 = vmatprep.subr.mxu0 %v1945
        %3503 = vmatpush1.msra.mxu0 %v1944
        %3504 = vmatprep.subr.mxu0 %v1947
        %3505 = vmatpush1.msra.mxu0 %v1946
        %3506 = vmatprep.subr.mxu0 %v1949
        %3507 = vmatpush1.msra.mxu0 %v1948
        %3508 = vmatprep.subr.mxu0 %v1951
        %3509 = vmatpush1.msra.mxu0 %v1950
        %3510 = vmatprep.subr.mxu0 %v1953
        %3511 = vmatpush1.msra.mxu0 %v1952
        %3512 = vmatprep.subr.mxu0 %v1955
        %3513 = vmatpush1.msra.mxu0 %v1954
        %3514 = vmatprep.subr.mxu0 %v1957
        %3515 = vmatpush1.msra.mxu0 %v1956
        %3516 = vmatprep.subr.mxu0 %v1959
        %3517 = vmatpush1.msra.mxu0 %v1958
        %3518 = vmatprep.subr.mxu0 %v1961
        %3519 = vmatpush1.msra.mxu0 %v1960
        %3520 = vmatprep.subr.mxu0 %v1963
        %3521 = vmatpush1.msra.mxu0 %v1962
        %3522 = vmatprep.subr.mxu0 %v1965
        %3523 = vmatpush1.msra.mxu0 %v1964
        %3524 = vmatprep.subr.mxu0 %v1967
        %3525 = vmatpush1.msra.mxu0 %v1966
        %3526 = vmatprep.subr.mxu0 %v1969
        %3527 = vmatpush1.msra.mxu0 %v1968
        %3528 = vmatprep.subr.mxu0 %v1971
        %3529 = vmatpush1.msra.mxu0 %v1970
        %3530 = vmatprep.subr.mxu0 %v1973
        %3531 = vmatpush1.msra.mxu0 %v1972
        %3532 = vmatprep.subr.mxu0 %v1975
        %3533 = vmatpush1.msra.mxu0 %v1974
        %3534 = vmatprep.subr.mxu0 %v1977
        %3535 = vmatpush1.msra.mxu0 %v1976
        %3536 = vmatprep.subr.mxu0 %v1979
        %3537 = vmatpush1.msra.mxu0 %v1978
        %3538 = vmatprep.mubr.f32.mxu0 %v2584
        %3539 = vmatmul.mubr.f32.gmra.mrb[0].mxu0 %v2583
        %v3540 = vpop.f32.mrb[0].mxu0
        %v3541 = vadd.f32 0.0, %v3540
        %v3542 = vpop.f32.mrb[0].mxu0
        %v3543 = vadd.f32 0.0, %v3542
        %3544 = vdwg.mxu0
        %s3545 = scalar_lea.vmem %s8, 24
        %v3546 = vld [vmem:[%s3545] sm:$0xf]
        %v3548 = vsel %vm505, %v3546, 0
        %3550 = vmatprep.subr.mxu0 %v3543
        %3551 = vmatpush1.msra.mxu0 %v3541
        %3552 = vmatprep.subr.mxu0 0.0
        %3553 = vmatpush1.msra.mxu0 0.0
        %3554 = vmatprep.subr.mxu0 0.0
        %3555 = vmatpush1.msra.mxu0 0.0
        %3556 = vmatprep.subr.mxu0 0.0
        %3557 = vmatpush1.msra.mxu0 0.0
        %3558 = vmatprep.subr.mxu0 0.0
        %3559 = vmatpush1.msra.mxu0 0.0
        %3560 = vmatprep.subr.mxu0 0.0
        %3561 = vmatpush1.msra.mxu0 0.0
        %3562 = vmatprep.subr.mxu0 0.0
        %3563 = vmatpush1.msra.mxu0 0.0
        %3564 = vmatprep.subr.mxu0 0.0
        %3565 = vmatpush1.msra.mxu0 0.0
        %3566 = vmatprep.subr.mxu0 0.0
        %3567 = vmatpush1.msra.mxu0 0.0
        %3568 = vmatprep.subr.mxu0 0.0
        %3569 = vmatpush1.msra.mxu0 0.0
        %3570 = vmatprep.subr.mxu0 0.0
        %3571 = vmatpush1.msra.mxu0 0.0
        %3572 = vmatprep.subr.mxu0 0.0
        %3573 = vmatpush1.msra.mxu0 0.0
        %3574 = vmatprep.subr.mxu0 0.0
        %3575 = vmatpush1.msra.mxu0 0.0
        %3576 = vmatprep.subr.mxu0 0.0
        %3577 = vmatpush1.msra.mxu0 0.0
        %3578 = vmatprep.subr.mxu0 0.0
        %3579 = vmatpush1.msra.mxu0 0.0
        %3580 = vmatprep.subr.mxu0 0.0
        %3581 = vmatpush1.msra.mxu0 0.0
        %3582 = vmatprep.subr.mxu0 0.0
        %3583 = vmatpush1.msra.mxu0 0.0
        %3584 = vmatprep.subr.mxu0 0.0
        %3585 = vmatpush1.msra.mxu0 0.0
        %3586 = vmatprep.subr.mxu0 0.0
        %3587 = vmatpush1.msra.mxu0 0.0
        %3588 = vmatprep.subr.mxu0 0.0
        %3589 = vmatpush1.msra.mxu0 0.0
        %3590 = vmatprep.subr.mxu0 0.0
        %3591 = vmatpush1.msra.mxu0 0.0
        %3592 = vmatprep.subr.mxu0 0.0
        %3593 = vmatpush1.msra.mxu0 0.0
        %3594 = vmatprep.subr.mxu0 0.0
        %3595 = vmatpush1.msra.mxu0 0.0
        %3596 = vmatprep.subr.mxu0 0.0
        %3597 = vmatpush1.msra.mxu0 0.0
        %3598 = vmatprep.subr.mxu0 0.0
        %3599 = vmatpush1.msra.mxu0 0.0
        %3600 = vmatprep.subr.mxu0 0.0
        %3601 = vmatpush1.msra.mxu0 0.0
        %3602 = vmatprep.subr.mxu0 0.0
        %3603 = vmatpush1.msra.mxu0 0.0
        %3604 = vmatprep.subr.mxu0 0.0
        %3605 = vmatpush1.msra.mxu0 0.0
        %3606 = vmatprep.subr.mxu0 0.0
        %3607 = vmatpush1.msra.mxu0 0.0
        %3608 = vmatprep.subr.mxu0 0.0
        %3609 = vmatpush1.msra.mxu0 0.0
        %3610 = vmatprep.subr.mxu0 0.0
        %3611 = vmatpush1.msra.mxu0 0.0
        %3612 = vmatprep.subr.mxu0 0.0
        %3613 = vmatpush1.msra.mxu0 0.0
        %3614 = vmatprep.mubr.f32.mxu0 0.0
        %3615 = vmatmul.mubr.f32.gmra.mrb[0].mxu0 %v3548
        %v3616 = vpop.f32.mrb[0].mxu0
        %v3617 = vadd.f32 0.0, %v3616
        %v3618 = vpop.f32.mrb[0].mxu0
        %v3619 = vadd.f32 0.0, %v3618
        %3620 = vdwg.mxu0
        %v3621 = vadd.f32 %v3472, %v3617
        %v3622 = vadd.f32 %v3473, %v3619
        %3623 = vmatprep.subr.mxu0 %v2137
        %3624 = vmatpush1.msra.mxu0 %v2136
        %3625 = vmatprep.subr.mxu0 %v2139
        %3626 = vmatpush1.msra.mxu0 %v2138
        %3627 = vmatprep.subr.mxu0 %v2141
        %3628 = vmatpush1.msra.mxu0 %v2140
        %3629 = vmatprep.subr.mxu0 %v2143
        %3630 = vmatpush1.msra.mxu0 %v2142
        %3631 = vmatprep.subr.mxu0 %v2145
        %3632 = vmatpush1.msra.mxu0 %v2144
        %3633 = vmatprep.subr.mxu0 %v2147
        %3634 = vmatpush1.msra.mxu0 %v2146
        %3635 = vmatprep.subr.mxu0 %v2149
        %3636 = vmatpush1.msra.mxu0 %v2148
        %3637 = vmatprep.subr.mxu0 %v2151
        %3638 = vmatpush1.msra.mxu0 %v2150
        %3639 = vmatprep.subr.mxu0 %v2153
        %3640 = vmatpush1.msra.mxu0 %v2152
        %3641 = vmatprep.subr.mxu0 %v2155
        %3642 = vmatpush1.msra.mxu0 %v2154
        %3643 = vmatprep.subr.mxu0 %v2157
        %3644 = vmatpush1.msra.mxu0 %v2156
        %3645 = vmatprep.subr.mxu0 %v2159
        %3646 = vmatpush1.msra.mxu0 %v2158
        %3647 = vmatprep.subr.mxu0 %v2161
        %3648 = vmatpush1.msra.mxu0 %v2160
        %3649 = vmatprep.subr.mxu0 %v2163
        %3650 = vmatpush1.msra.mxu0 %v2162
        %3651 = vmatprep.subr.mxu0 %v2165
        %3652 = vmatpush1.msra.mxu0 %v2164
        %3653 = vmatprep.subr.mxu0 %v2167
        %3654 = vmatpush1.msra.mxu0 %v2166
        %3655 = vmatprep.subr.mxu0 %v2169
        %3656 = vmatpush1.msra.mxu0 %v2168
        %3657 = vmatprep.subr.mxu0 %v2171
        %3658 = vmatpush1.msra.mxu0 %v2170
        %3659 = vmatprep.subr.mxu0 %v2173
        %3660 = vmatpush1.msra.mxu0 %v2172
        %3661 = vmatprep.subr.mxu0 %v2175
        %3662 = vmatpush1.msra.mxu0 %v2174
        %3663 = vmatprep.subr.mxu0 %v2177
        %3664 = vmatpush1.msra.mxu0 %v2176
        %3665 = vmatprep.subr.mxu0 %v2179
        %3666 = vmatpush1.msra.mxu0 %v2178
        %3667 = vmatprep.subr.mxu0 %v2181
        %3668 = vmatpush1.msra.mxu0 %v2180
        %3669 = vmatprep.subr.mxu0 %v2183
        %3670 = vmatpush1.msra.mxu0 %v2182
        %3671 = vmatprep.subr.mxu0 %v2185
        %3672 = vmatpush1.msra.mxu0 %v2184
        %3673 = vmatprep.subr.mxu0 %v2187
        %3674 = vmatpush1.msra.mxu0 %v2186
        %3675 = vmatprep.subr.mxu0 %v2189
        %3676 = vmatpush1.msra.mxu0 %v2188
        %3677 = vmatprep.subr.mxu0 %v2191
        %3678 = vmatpush1.msra.mxu0 %v2190
        %3679 = vmatprep.subr.mxu0 %v2193
        %3680 = vmatpush1.msra.mxu0 %v2192
        %3681 = vmatprep.subr.mxu0 %v2195
        %3682 = vmatpush1.msra.mxu0 %v2194
        %3683 = vmatprep.subr.mxu0 %v2197
        %3684 = vmatpush1.msra.mxu0 %v2196
        %3685 = vmatprep.subr.mxu0 %v2199
        %3686 = vmatpush1.msra.mxu0 %v2198
        %3687 = vmatprep.mubr.f32.mxu0 %v2584
        %3688 = vmatmul.mubr.f32.gmra.mrb[0].mxu0 %v2583
        %v3689 = vpop.f32.mrb[0].mxu0
        %v3690 = vadd.f32 0.0, %v3689
        %v3691 = vpop.f32.mrb[0].mxu0
        %v3692 = vadd.f32 0.0, %v3691
        %3693 = vdwg.mxu0
        %s3694 = scalar_lea.vmem %s8, 28
        %v3695 = vld [vmem:[%s3694] sm:$0xf]
        %v3697 = vsel %vm505, %v3695, 0
        %3699 = vmatprep.subr.mxu0 %v3692
        %3700 = vmatpush1.msra.mxu0 %v3690
        %3701 = vmatprep.subr.mxu0 0.0
        %3702 = vmatpush1.msra.mxu0 0.0
        %3703 = vmatprep.subr.mxu0 0.0
        %3704 = vmatpush1.msra.mxu0 0.0
        %3705 = vmatprep.subr.mxu0 0.0
        %3706 = vmatpush1.msra.mxu0 0.0
        %3707 = vmatprep.subr.mxu0 0.0
        %3708 = vmatpush1.msra.mxu0 0.0
        %3709 = vmatprep.subr.mxu0 0.0
        %3710 = vmatpush1.msra.mxu0 0.0
        %3711 = vmatprep.subr.mxu0 0.0
        %3712 = vmatpush1.msra.mxu0 0.0
        %3713 = vmatprep.subr.mxu0 0.0
        %3714 = vmatpush1.msra.mxu0 0.0
        %3715 = vmatprep.subr.mxu0 0.0
        %3716 = vmatpush1.msra.mxu0 0.0
        %3717 = vmatprep.subr.mxu0 0.0
        %3718 = vmatpush1.msra.mxu0 0.0
        %3719 = vmatprep.subr.mxu0 0.0
        %3720 = vmatpush1.msra.mxu0 0.0
        %3721 = vmatprep.subr.mxu0 0.0
        %3722 = vmatpush1.msra.mxu0 0.0
        %3723 = vmatprep.subr.mxu0 0.0
        %3724 = vmatpush1.msra.mxu0 0.0
        %3725 = vmatprep.subr.mxu0 0.0
        %3726 = vmatpush1.msra.mxu0 0.0
        %3727 = vmatprep.subr.mxu0 0.0
        %3728 = vmatpush1.msra.mxu0 0.0
        %3729 = vmatprep.subr.mxu0 0.0
        %3730 = vmatpush1.msra.mxu0 0.0
        %3731 = vmatprep.subr.mxu0 0.0
        %3732 = vmatpush1.msra.mxu0 0.0
        %3733 = vmatprep.subr.mxu0 0.0
        %3734 = vmatpush1.msra.mxu0 0.0
        %3735 = vmatprep.subr.mxu0 0.0
        %3736 = vmatpush1.msra.mxu0 0.0
        %3737 = vmatprep.subr.mxu0 0.0
        %3738 = vmatpush1.msra.mxu0 0.0
        %3739 = vmatprep.subr.mxu0 0.0
        %3740 = vmatpush1.msra.mxu0 0.0
        %3741 = vmatprep.subr.mxu0 0.0
        %3742 = vmatpush1.msra.mxu0 0.0
        %3743 = vmatprep.subr.mxu0 0.0
        %3744 = vmatpush1.msra.mxu0 0.0
        %3745 = vmatprep.subr.mxu0 0.0
        %3746 = vmatpush1.msra.mxu0 0.0
        %3747 = vmatprep.subr.mxu0 0.0
        %3748 = vmatpush1.msra.mxu0 0.0
        %3749 = vmatprep.subr.mxu0 0.0
        %3750 = vmatpush1.msra.mxu0 0.0
        %3751 = vmatprep.subr.mxu0 0.0
        %3752 = vmatpush1.msra.mxu0 0.0
        %3753 = vmatprep.subr.mxu0 0.0
        %3754 = vmatpush1.msra.mxu0 0.0
        %3755 = vmatprep.subr.mxu0 0.0
        %3756 = vmatpush1.msra.mxu0 0.0
        %3757 = vmatprep.subr.mxu0 0.0
        %3758 = vmatpush1.msra.mxu0 0.0
        %3759 = vmatprep.subr.mxu0 0.0
        %3760 = vmatpush1.msra.mxu0 0.0
        %3761 = vmatprep.subr.mxu0 0.0
        %3762 = vmatpush1.msra.mxu0 0.0
        %3763 = vmatprep.mubr.f32.mxu0 0.0
        %3764 = vmatmul.mubr.f32.gmra.mrb[0].mxu0 %v3697
        %v3765 = vpop.f32.mrb[0].mxu0
        %v3766 = vadd.f32 0.0, %v3765
        %v3767 = vpop.f32.mrb[0].mxu0
        %v3768 = vadd.f32 0.0, %v3767
        %3769 = vdwg.mxu0
        %v3770 = vadd.f32 %v3621, %v3766
        %v3771 = vadd.f32 %v3622, %v3768
        %3772 = vmatprep.subr.mxu0 %v2357
        %3773 = vmatpush1.msra.mxu0 %v2356
        %3774 = vmatprep.subr.mxu0 %v2359
        %3775 = vmatpush1.msra.mxu0 %v2358
        %3776 = vmatprep.subr.mxu0 %v2361
        %3777 = vmatpush1.msra.mxu0 %v2360
        %3778 = vmatprep.subr.mxu0 %v2363
        %3779 = vmatpush1.msra.mxu0 %v2362
        %3780 = vmatprep.subr.mxu0 %v2365
        %3781 = vmatpush1.msra.mxu0 %v2364
        %3782 = vmatprep.subr.mxu0 %v2367
        %3783 = vmatpush1.msra.mxu0 %v2366
        %3784 = vmatprep.subr.mxu0 %v2369
        %3785 = vmatpush1.msra.mxu0 %v2368
        %3786 = vmatprep.subr.mxu0 %v2371
        %3787 = vmatpush1.msra.mxu0 %v2370
        %3788 = vmatprep.subr.mxu0 %v2373
        %3789 = vmatpush1.msra.mxu0 %v2372
        %3790 = vmatprep.subr.mxu0 %v2375
        %3791 = vmatpush1.msra.mxu0 %v2374
        %3792 = vmatprep.subr.mxu0 %v2377
        %3793 = vmatpush1.msra.mxu0 %v2376
        %3794 = vmatprep.subr.mxu0 %v2379
        %3795 = vmatpush1.msra.mxu0 %v2378
        %3796 = vmatprep.subr.mxu0 %v2381
        %3797 = vmatpush1.msra.mxu0 %v2380
        %3798 = vmatprep.subr.mxu0 %v2383
        %3799 = vmatpush1.msra.mxu0 %v2382
        %3800 = vmatprep.subr.mxu0 %v2385
        %3801 = vmatpush1.msra.mxu0 %v2384
        %3802 = vmatprep.subr.mxu0 %v2387
        %3803 = vmatpush1.msra.mxu0 %v2386
        %3804 = vmatprep.subr.mxu0 %v2389
        %3805 = vmatpush1.msra.mxu0 %v2388
        %3806 = vmatprep.subr.mxu0 %v2391
        %3807 = vmatpush1.msra.mxu0 %v2390
        %3808 = vmatprep.subr.mxu0 %v2393
        %3809 = vmatpush1.msra.mxu0 %v2392
        %3810 = vmatprep.subr.mxu0 %v2395
        %3811 = vmatpush1.msra.mxu0 %v2394
        %3812 = vmatprep.subr.mxu0 %v2397
        %3813 = vmatpush1.msra.mxu0 %v2396
        %3814 = vmatprep.subr.mxu0 %v2399
        %3815 = vmatpush1.msra.mxu0 %v2398
        %3816 = vmatprep.subr.mxu0 %v2401
        %3817 = vmatpush1.msra.mxu0 %v2400
        %3818 = vmatprep.subr.mxu0 %v2403
        %3819 = vmatpush1.msra.mxu0 %v2402
        %3820 = vmatprep.subr.mxu0 %v2405
        %3821 = vmatpush1.msra.mxu0 %v2404
        %3822 = vmatprep.subr.mxu0 %v2407
        %3823 = vmatpush1.msra.mxu0 %v2406
        %3824 = vmatprep.subr.mxu0 %v2409
        %3825 = vmatpush1.msra.mxu0 %v2408
        %3826 = vmatprep.subr.mxu0 %v2411
        %3827 = vmatpush1.msra.mxu0 %v2410
        %3828 = vmatprep.subr.mxu0 %v2413
        %3829 = vmatpush1.msra.mxu0 %v2412
        %3830 = vmatprep.subr.mxu0 %v2415
        %3831 = vmatpush1.msra.mxu0 %v2414
        %3832 = vmatprep.subr.mxu0 %v2417
        %3833 = vmatpush1.msra.mxu0 %v2416
        %3834 = vmatprep.subr.mxu0 %v2419
        %3835 = vmatpush1.msra.mxu0 %v2418
        %3836 = vmatprep.mubr.f32.mxu0 %v2584
        %3837 = vmatmul.mubr.f32.gmra.mrb[0].mxu0 %v2583
        %v3838 = vpop.f32.mrb[0].mxu0
        %v3839 = vadd.f32 0.0, %v3838
        %v3840 = vpop.f32.mrb[0].mxu0
        %v3841 = vadd.f32 0.0, %v3840
        %3842 = vdwg.mxu0
        %s3843 = scalar_lea.vmem %s8, 32
        %v3844 = vld [vmem:[%s3843] sm:$0xf]
        %v3846 = vsel %vm505, %v3844, 0
        %3848 = vmatprep.subr.mxu0 %v3841
        %3849 = vmatpush1.msra.mxu0 %v3839
        %3850 = vmatprep.subr.mxu0 0.0
        %3851 = vmatpush1.msra.mxu0 0.0
        %3852 = vmatprep.subr.mxu0 0.0
        %3853 = vmatpush1.msra.mxu0 0.0
        %3854 = vmatprep.subr.mxu0 0.0
        %3855 = vmatpush1.msra.mxu0 0.0
        %3856 = vmatprep.subr.mxu0 0.0
        %3857 = vmatpush1.msra.mxu0 0.0
        %3858 = vmatprep.subr.mxu0 0.0
        %3859 = vmatpush1.msra.mxu0 0.0
        %3860 = vmatprep.subr.mxu0 0.0
        %3861 = vmatpush1.msra.mxu0 0.0
        %3862 = vmatprep.subr.mxu0 0.0
        %3863 = vmatpush1.msra.mxu0 0.0
        %3864 = vmatprep.subr.mxu0 0.0
        %3865 = vmatpush1.msra.mxu0 0.0
        %3866 = vmatprep.subr.mxu0 0.0
        %3867 = vmatpush1.msra.mxu0 0.0
        %3868 = vmatprep.subr.mxu0 0.0
        %3869 = vmatpush1.msra.mxu0 0.0
        %3870 = vmatprep.subr.mxu0 0.0
        %3871 = vmatpush1.msra.mxu0 0.0
        %3872 = vmatprep.subr.mxu0 0.0
        %3873 = vmatpush1.msra.mxu0 0.0
        %3874 = vmatprep.subr.mxu0 0.0
        %3875 = vmatpush1.msra.mxu0 0.0
        %3876 = vmatprep.subr.mxu0 0.0
        %3877 = vmatpush1.msra.mxu0 0.0
        %3878 = vmatprep.subr.mxu0 0.0
        %3879 = vmatpush1.msra.mxu0 0.0
        %3880 = vmatprep.subr.mxu0 0.0
        %3881 = vmatpush1.msra.mxu0 0.0
        %3882 = vmatprep.subr.mxu0 0.0
        %3883 = vmatpush1.msra.mxu0 0.0
        %3884 = vmatprep.subr.mxu0 0.0
        %3885 = vmatpush1.msra.mxu0 0.0
        %3886 = vmatprep.subr.mxu0 0.0
        %3887 = vmatpush1.msra.mxu0 0.0
        %3888 = vmatprep.subr.mxu0 0.0
        %3889 = vmatpush1.msra.mxu0 0.0
        %3890 = vmatprep.subr.mxu0 0.0
        %3891 = vmatpush1.msra.mxu0 0.0
        %3892 = vmatprep.subr.mxu0 0.0
        %3893 = vmatpush1.msra.mxu0 0.0
        %3894 = vmatprep.subr.mxu0 0.0
        %3895 = vmatpush1.msra.mxu0 0.0
        %3896 = vmatprep.subr.mxu0 0.0
        %3897 = vmatpush1.msra.mxu0 0.0
        %3898 = vmatprep.subr.mxu0 0.0
        %3899 = vmatpush1.msra.mxu0 0.0
        %3900 = vmatprep.subr.mxu0 0.0
        %3901 = vmatpush1.msra.mxu0 0.0
        %3902 = vmatprep.subr.mxu0 0.0
        %3903 = vmatpush1.msra.mxu0 0.0
        %3904 = vmatprep.subr.mxu0 0.0
        %3905 = vmatpush1.msra.mxu0 0.0
        %3906 = vmatprep.subr.mxu0 0.0
        %3907 = vmatpush1.msra.mxu0 0.0
        %3908 = vmatprep.subr.mxu0 0.0
        %3909 = vmatpush1.msra.mxu0 0.0
        %3910 = vmatprep.subr.mxu0 0.0
        %3911 = vmatpush1.msra.mxu0 0.0
        %3912 = vmatprep.mubr.f32.mxu0 0.0
        %3913 = vmatmul.mubr.f32.gmra.mrb[0].mxu0 %v3846
        %v3914 = vpop.f32.mrb[0].mxu0
        %v3915 = vadd.f32 0.0, %v3914
        %v3916 = vpop.f32.mrb[0].mxu0
        %v3917 = vadd.f32 0.0, %v3916
        %3918 = vdwg.mxu0
        %v3919 = vadd.f32 %v3770, %v3915
        %v3920 = vadd.f32 %v3771, %v3917
        %v3921 = vld [vmem:[%s9] sm:$0xf]
        %3923 = vset.pattern.permute.xlu0 0
        %3924 = vperm.xlu0 %3923, %v3921
        %v3925 = vpop.permute.xlu0 %3924
        %v3927 = vadd.f32 %v3919, %v3925
        %v3928 = vadd.f32 %v3920, %v3925
        %v3929 = vld [vmem:[%s1] sm:$0xff]
        %v3930 = vld [vmem:[%s1 + $0x8] sm:$0xff]
        %v3931 = vld [vmem:[%s1 + $0x10] sm:$0xff]
        %v3932 = vld [vmem:[%s1 + $0x18] sm:$0xff]
        %v3933 = vld [vmem:[%s1 + $0x20] sm:$0xff]
        %v3934 = vld [vmem:[%s1 + $0x28] sm:$0xff]
        %v3935 = vld [vmem:[%s1 + $0x30] sm:$0xff]
        %v3936 = vld [vmem:[%s1 + $0x38] sm:$0xff]
        %v3937 = vld [vmem:[%s1 + $0x40] sm:$0xff]
        %v3938 = vld [vmem:[%s1 + $0x48] sm:$0xff]
        %v3939 = vld [vmem:[%s1 + $0x50] sm:$0xff]
        %v3940 = vld [vmem:[%s1 + $0x58] sm:$0xff]
        %v3941 = vld [vmem:[%s1 + $0x60] sm:$0xff]
        %v3942 = vld [vmem:[%s1 + $0x68] sm:$0xff]
        %v3943 = vld [vmem:[%s1 + $0x70] sm:$0xff]
        %v3944 = vld [vmem:[%s1 + $0x78] sm:$0xff]
        %v3945 = vld [vmem:[%s1 + $0x80] sm:$0xff]
        %v3946 = vld [vmem:[%s1 + $0x88] sm:$0xff]
        %v3947 = vld [vmem:[%s1 + $0x90] sm:$0xff]
        %v3948 = vld [vmem:[%s1 + $0x98] sm:$0xff]
        %v3949 = vld [vmem:[%s1 + $0xa0] sm:$0xff]
        %v3950 = vld [vmem:[%s1 + $0xa8] sm:$0xff]
        %v3951 = vld [vmem:[%s1 + $0xb0] sm:$0xff]
        %v3952 = vld [vmem:[%s1 + $0xb8] sm:$0xff]
        %v3953 = vld [vmem:[%s1 + $0xc0] sm:$0xff]
        %v3954 = vld [vmem:[%s1 + $0xc8] sm:$0xff]
        %v3955 = vld [vmem:[%s1 + $0xd0] sm:$0xff]
        %v3956 = vld [vmem:[%s1 + $0xd8] sm:$0xff]
        %v3957 = vld [vmem:[%s1 + $0xe0] sm:$0xff]
        %v3958 = vld [vmem:[%s1 + $0xe8] sm:$0xff]
        %v3959 = vld [vmem:[%s1 + $0xf0] sm:$0xff]
        %v3960 = vld [vmem:[%s1 + $0xf8] sm:$0xff]
        %v3961 = vld [vmem:[%s379] sm:$0x3]
        %3963 = vset.pattern.permute.xlu0 0
        %3964 = vperm.xlu0 %3963, %v3929
        %v3965 = vpop.permute.xlu0 %3964
        %3968 = vset.pattern.permute.xlu0 0
        %3969 = vperm.xlu0 %3968, %v3930
        %v3970 = vpop.permute.xlu0 %3969
        %3973 = vset.pattern.permute.xlu0 0
        %3974 = vperm.xlu0 %3973, %v3931
        %v3975 = vpop.permute.xlu0 %3974
        %3978 = vset.pattern.permute.xlu0 0
        %3979 = vperm.xlu0 %3978, %v3932
        %v3980 = vpop.permute.xlu0 %3979
        %3983 = vset.pattern.permute.xlu0 0
        %3984 = vperm.xlu0 %3983, %v3933
        %v3985 = vpop.permute.xlu0 %3984
        %3988 = vset.pattern.permute.xlu0 0
        %3989 = vperm.xlu0 %3988, %v3934
        %v3990 = vpop.permute.xlu0 %3989
        %3993 = vset.pattern.permute.xlu0 0
        %3994 = vperm.xlu0 %3993, %v3935
        %v3995 = vpop.permute.xlu0 %3994
        %3998 = vset.pattern.permute.xlu0 0
        %3999 = vperm.xlu0 %3998, %v3936
        %v4000 = vpop.permute.xlu0 %3999
        %4003 = vset.pattern.permute.xlu0 0
        %4004 = vperm.xlu0 %4003, %v3937
        %v4005 = vpop.permute.xlu0 %4004
        %4008 = vset.pattern.permute.xlu0 0
        %4009 = vperm.xlu0 %4008, %v3938
        %v4010 = vpop.permute.xlu0 %4009
        %4013 = vset.pattern.permute.xlu0 0
        %4014 = vperm.xlu0 %4013, %v3939
        %v4015 = vpop.permute.xlu0 %4014
        %4018 = vset.pattern.permute.xlu0 0
        %4019 = vperm.xlu0 %4018, %v3940
        %v4020 = vpop.permute.xlu0 %4019
        %4023 = vset.pattern.permute.xlu0 0
        %4024 = vperm.xlu0 %4023, %v3941
        %v4025 = vpop.permute.xlu0 %4024
        %4028 = vset.pattern.permute.xlu0 0
        %4029 = vperm.xlu0 %4028, %v3942
        %v4030 = vpop.permute.xlu0 %4029
        %4033 = vset.pattern.permute.xlu0 0
        %4034 = vperm.xlu0 %4033, %v3943
        %v4035 = vpop.permute.xlu0 %4034
        %4038 = vset.pattern.permute.xlu0 0
        %4039 = vperm.xlu0 %4038, %v3944
        %v4040 = vpop.permute.xlu0 %4039
        %4043 = vset.pattern.permute.xlu0 0
        %4044 = vperm.xlu0 %4043, %v3945
        %v4045 = vpop.permute.xlu0 %4044
        %4048 = vset.pattern.permute.xlu0 0
        %4049 = vperm.xlu0 %4048, %v3946
        %v4050 = vpop.permute.xlu0 %4049
        %4053 = vset.pattern.permute.xlu0 0
        %4054 = vperm.xlu0 %4053, %v3947
        %v4055 = vpop.permute.xlu0 %4054
        %4058 = vset.pattern.permute.xlu0 0
        %4059 = vperm.xlu0 %4058, %v3948
        %v4060 = vpop.permute.xlu0 %4059
        %4063 = vset.pattern.permute.xlu0 0
        %4064 = vperm.xlu0 %4063, %v3949
        %v4065 = vpop.permute.xlu0 %4064
        %4068 = vset.pattern.permute.xlu0 0
        %4069 = vperm.xlu0 %4068, %v3950
        %v4070 = vpop.permute.xlu0 %4069
        %4073 = vset.pattern.permute.xlu0 0
        %4074 = vperm.xlu0 %4073, %v3951
        %v4075 = vpop.permute.xlu0 %4074
        %4078 = vset.pattern.permute.xlu0 0
        %4079 = vperm.xlu0 %4078, %v3952
        %v4080 = vpop.permute.xlu0 %4079
        %4083 = vset.pattern.permute.xlu0 0
        %4084 = vperm.xlu0 %4083, %v3953
        %v4085 = vpop.permute.xlu0 %4084
        %4088 = vset.pattern.permute.xlu0 0
        %4089 = vperm.xlu0 %4088, %v3954
        %v4090 = vpop.permute.xlu0 %4089
        %4093 = vset.pattern.permute.xlu0 0
        %4094 = vperm.xlu0 %4093, %v3955
        %v4095 = vpop.permute.xlu0 %4094
        %4098 = vset.pattern.permute.xlu0 0
        %4099 = vperm.xlu0 %4098, %v3956
        %v4100 = vpop.permute.xlu0 %4099
        %4103 = vset.pattern.permute.xlu0 0
        %4104 = vperm.xlu0 %4103, %v3957
        %v4105 = vpop.permute.xlu0 %4104
        %4108 = vset.pattern.permute.xlu0 0
        %4109 = vperm.xlu0 %4108, %v3958
        %v4110 = vpop.permute.xlu0 %4109
        %4113 = vset.pattern.permute.xlu0 0
        %4114 = vperm.xlu0 %4113, %v3959
        %v4115 = vpop.permute.xlu0 %4114
        %4118 = vset.pattern.permute.xlu0 0
        %4119 = vperm.xlu0 %4118, %v3960
        %v4120 = vpop.permute.xlu0 %4119
        %v4122 = vlaneseq
        %v4123 = vshrl.u32 %v4122, 7
        %v4124 = vsub.s32 0, %v4123
        %v4125 = vrot.slane %v3961, %v4124
        %v4126 = vsub.f32 %v3965, %v4125
        %v4127 = vsub.f32 %v3970, %v4125
        %v4128 = vsub.f32 %v3975, %v4125
        %v4129 = vsub.f32 %v3980, %v4125
        %v4130 = vsub.f32 %v3985, %v4125
        %v4131 = vsub.f32 %v3990, %v4125
        %v4132 = vsub.f32 %v3995, %v4125
        %v4133 = vsub.f32 %v4000, %v4125
        %v4134 = vsub.f32 %v4005, %v4125
        %v4135 = vsub.f32 %v4010, %v4125
        %v4136 = vsub.f32 %v4015, %v4125
        %v4137 = vsub.f32 %v4020, %v4125
        %v4138 = vsub.f32 %v4025, %v4125
        %v4139 = vsub.f32 %v4030, %v4125
        %v4140 = vsub.f32 %v4035, %v4125
        %v4141 = vsub.f32 %v4040, %v4125
        %v4142 = vsub.f32 %v4045, %v4125
        %v4143 = vsub.f32 %v4050, %v4125
        %v4144 = vsub.f32 %v4055, %v4125
        %v4145 = vsub.f32 %v4060, %v4125
        %v4146 = vsub.f32 %v4065, %v4125
        %v4147 = vsub.f32 %v4070, %v4125
        %v4148 = vsub.f32 %v4075, %v4125
        %v4149 = vsub.f32 %v4080, %v4125
        %v4150 = vsub.f32 %v4085, %v4125
        %v4151 = vsub.f32 %v4090, %v4125
        %v4152 = vsub.f32 %v4095, %v4125
        %v4153 = vsub.f32 %v4100, %v4125
        %v4154 = vsub.f32 %v4105, %v4125
        %v4155 = vsub.f32 %v4110, %v4125
        %v4156 = vsub.f32 %v4115, %v4125
        %v4157 = vsub.f32 %v4120, %v4125
        %v4158 = vmul.f32 %v4126, %v4126
        %v4159 = vmul.f32 %v4127, %v4127
        %v4160 = vmul.f32 %v4128, %v4128
        %v4161 = vmul.f32 %v4129, %v4129
        %v4162 = vmul.f32 %v4130, %v4130
        %v4163 = vmul.f32 %v4131, %v4131
        %v4164 = vmul.f32 %v4132, %v4132
        %v4165 = vmul.f32 %v4133, %v4133
        %v4166 = vmul.f32 %v4134, %v4134
        %v4167 = vmul.f32 %v4135, %v4135
        %v4168 = vmul.f32 %v4136, %v4136
        %v4169 = vmul.f32 %v4137, %v4137
        %v4170 = vmul.f32 %v4138, %v4138
        %v4171 = vmul.f32 %v4139, %v4139
        %v4172 = vmul.f32 %v4140, %v4140
        %v4173 = vmul.f32 %v4141, %v4141
        %v4174 = vmul.f32 %v4142, %v4142
        %v4175 = vmul.f32 %v4143, %v4143
        %v4176 = vmul.f32 %v4144, %v4144
        %v4177 = vmul.f32 %v4145, %v4145
        %v4178 = vmul.f32 %v4146, %v4146
        %v4179 = vmul.f32 %v4147, %v4147
        %v4180 = vmul.f32 %v4148, %v4148
        %v4181 = vmul.f32 %v4149, %v4149
        %v4182 = vmul.f32 %v4150, %v4150
        %v4183 = vmul.f32 %v4151, %v4151
        %v4184 = vmul.f32 %v4152, %v4152
        %v4185 = vmul.f32 %v4153, %v4153
        %v4186 = vmul.f32 %v4154, %v4154
        %v4187 = vmul.f32 %v4155, %v4155
        %v4188 = vmul.f32 %v4156, %v4156
        %v4189 = vmul.f32 %v4157, %v4157
        %v4190 = vadd.f32 %v4158, 0.0
        %v4191 = vadd.f32 %v4159, 0.0
        %v4192 = vadd.f32 %v4160, 0.0
        %v4193 = vadd.f32 %v4161, 0.0
        %v4194 = vadd.f32 %v4162, 0.0
        %v4195 = vadd.f32 %v4163, 0.0
        %v4196 = vadd.f32 %v4164, 0.0
        %v4197 = vadd.f32 %v4165, 0.0
        %v4198 = vadd.f32 %v4166, 0.0
        %v4199 = vadd.f32 %v4167, 0.0
        %v4200 = vadd.f32 %v4168, 0.0
        %v4201 = vadd.f32 %v4169, 0.0
        %v4202 = vadd.f32 %v4170, 0.0
        %v4203 = vadd.f32 %v4171, 0.0
        %v4204 = vadd.f32 %v4172, 0.0
        %v4205 = vadd.f32 %v4173, 0.0
        %v4206 = vadd.f32 %v4174, 0.0
        %v4207 = vadd.f32 %v4175, 0.0
        %v4208 = vadd.f32 %v4176, 0.0
        %v4209 = vadd.f32 %v4177, 0.0
        %v4210 = vadd.f32 %v4178, 0.0
        %v4211 = vadd.f32 %v4179, 0.0
        %v4212 = vadd.f32 %v4180, 0.0
        %v4213 = vadd.f32 %v4181, 0.0
        %v4214 = vadd.f32 %v4182, 0.0
        %v4215 = vadd.f32 %v4183, 0.0
        %v4216 = vadd.f32 %v4184, 0.0
        %v4217 = vadd.f32 %v4185, 0.0
        %v4218 = vadd.f32 %v4186, 0.0
        %v4219 = vadd.f32 %v4187, 0.0
        %v4220 = vadd.f32 %v4188, 0.0
        %v4221 = vadd.f32 %v4189, 0.0
        %4222 = vset.pattern.permute.xlu0 1
        %4223 = vperm.xlu0 %4222, %v3929
        %v4224 = vpop.permute.xlu0 %4223
        %4226 = vset.pattern.permute.xlu0 1
        %4227 = vperm.xlu0 %4226, %v3930
        %v4228 = vpop.permute.xlu0 %4227
        %4230 = vset.pattern.permute.xlu0 1
        %4231 = vperm.xlu0 %4230, %v3931
        %v4232 = vpop.permute.xlu0 %4231
        %4234 = vset.pattern.permute.xlu0 1
        %4235 = vperm.xlu0 %4234, %v3932
        %v4236 = vpop.permute.xlu0 %4235
        %4238 = vset.pattern.permute.xlu0 1
        %4239 = vperm.xlu0 %4238, %v3933
        %v4240 = vpop.permute.xlu0 %4239
        %4242 = vset.pattern.permute.xlu0 1
        %4243 = vperm.xlu0 %4242, %v3934
        %v4244 = vpop.permute.xlu0 %4243
        %4246 = vset.pattern.permute.xlu0 1
        %4247 = vperm.xlu0 %4246, %v3935
        %v4248 = vpop.permute.xlu0 %4247
        %4250 = vset.pattern.permute.xlu0 1
        %4251 = vperm.xlu0 %4250, %v3936
        %v4252 = vpop.permute.xlu0 %4251
        %4254 = vset.pattern.permute.xlu0 1
        %4255 = vperm.xlu0 %4254, %v3937
        %v4256 = vpop.permute.xlu0 %4255
        %4258 = vset.pattern.permute.xlu0 1
        %4259 = vperm.xlu0 %4258, %v3938
        %v4260 = vpop.permute.xlu0 %4259
        %4262 = vset.pattern.permute.xlu0 1
        %4263 = vperm.xlu0 %4262, %v3939
        %v4264 = vpop.permute.xlu0 %4263
        %4266 = vset.pattern.permute.xlu0 1
        %4267 = vperm.xlu0 %4266, %v3940
        %v4268 = vpop.permute.xlu0 %4267
        %4270 = vset.pattern.permute.xlu0 1
        %4271 = vperm.xlu0 %4270, %v3941
        %v4272 = vpop.permute.xlu0 %4271
        %4274 = vset.pattern.permute.xlu0 1
        %4275 = vperm.xlu0 %4274, %v3942
        %v4276 = vpop.permute.xlu0 %4275
        %4278 = vset.pattern.permute.xlu0 1
        %4279 = vperm.xlu0 %4278, %v3943
        %v4280 = vpop.permute.xlu0 %4279
        %4282 = vset.pattern.permute.xlu0 1
        %4283 = vperm.xlu0 %4282, %v3944
        %v4284 = vpop.permute.xlu0 %4283
        %4286 = vset.pattern.permute.xlu0 1
        %4287 = vperm.xlu0 %4286, %v3945
        %v4288 = vpop.permute.xlu0 %4287
        %4290 = vset.pattern.permute.xlu0 1
        %4291 = vperm.xlu0 %4290, %v3946
        %v4292 = vpop.permute.xlu0 %4291
        %4294 = vset.pattern.permute.xlu0 1
        %4295 = vperm.xlu0 %4294, %v3947
        %v4296 = vpop.permute.xlu0 %4295
        %4298 = vset.pattern.permute.xlu0 1
        %4299 = vperm.xlu0 %4298, %v3948
        %v4300 = vpop.permute.xlu0 %4299
        %4302 = vset.pattern.permute.xlu0 1
        %4303 = vperm.xlu0 %4302, %v3949
        %v4304 = vpop.permute.xlu0 %4303
        %4306 = vset.pattern.permute.xlu0 1
        %4307 = vperm.xlu0 %4306, %v3950
        %v4308 = vpop.permute.xlu0 %4307
        %4310 = vset.pattern.permute.xlu0 1
        %4311 = vperm.xlu0 %4310, %v3951
        %v4312 = vpop.permute.xlu0 %4311
        %4314 = vset.pattern.permute.xlu0 1
        %4315 = vperm.xlu0 %4314, %v3952
        %v4316 = vpop.permute.xlu0 %4315
        %4318 = vset.pattern.permute.xlu0 1
        %4319 = vperm.xlu0 %4318, %v3953
        %v4320 = vpop.permute.xlu0 %4319
        %4322 = vset.pattern.permute.xlu0 1
        %4323 = vperm.xlu0 %4322, %v3954
        %v4324 = vpop.permute.xlu0 %4323
        %4326 = vset.pattern.permute.xlu0 1
        %4327 = vperm.xlu0 %4326, %v3955
        %v4328 = vpop.permute.xlu0 %4327
        %4330 = vset.pattern.permute.xlu0 1
        %4331 = vperm.xlu0 %4330, %v3956
        %v4332 = vpop.permute.xlu0 %4331
        %4334 = vset.pattern.permute.xlu0 1
        %4335 = vperm.xlu0 %4334, %v3957
        %v4336 = vpop.permute.xlu0 %4335
        %4338 = vset.pattern.permute.xlu0 1
        %4339 = vperm.xlu0 %4338, %v3958
        %v4340 = vpop.permute.xlu0 %4339
        %4342 = vset.pattern.permute.xlu0 1
        %4343 = vperm.xlu0 %4342, %v3959
        %v4344 = vpop.permute.xlu0 %4343
        %4346 = vset.pattern.permute.xlu0 1
        %4347 = vperm.xlu0 %4346, %v3960
        %v4348 = vpop.permute.xlu0 %4347
        %v4350 = vlaneseq
        %v4351 = vshrl.u32 %v4350, 7
        %v4352 = vsub.s32 1, %v4351
        %v4353 = vrot.slane %v3961, %v4352
        %v4354 = vsub.f32 %v4224, %v4353
        %v4355 = vsub.f32 %v4228, %v4353
        %v4356 = vsub.f32 %v4232, %v4353
        %v4357 = vsub.f32 %v4236, %v4353
        %v4358 = vsub.f32 %v4240, %v4353
        %v4359 = vsub.f32 %v4244, %v4353
        %v4360 = vsub.f32 %v4248, %v4353
        %v4361 = vsub.f32 %v4252, %v4353
        %v4362 = vsub.f32 %v4256, %v4353
        %v4363 = vsub.f32 %v4260, %v4353
        %v4364 = vsub.f32 %v4264, %v4353
        %v4365 = vsub.f32 %v4268, %v4353
        %v4366 = vsub.f32 %v4272, %v4353
        %v4367 = vsub.f32 %v4276, %v4353
        %v4368 = vsub.f32 %v4280, %v4353
        %v4369 = vsub.f32 %v4284, %v4353
        %v4370 = vsub.f32 %v4288, %v4353
        %v4371 = vsub.f32 %v4292, %v4353
        %v4372 = vsub.f32 %v4296, %v4353
        %v4373 = vsub.f32 %v4300, %v4353
        %v4374 = vsub.f32 %v4304, %v4353
        %v4375 = vsub.f32 %v4308, %v4353
        %v4376 = vsub.f32 %v4312, %v4353
        %v4377 = vsub.f32 %v4316, %v4353
        %v4378 = vsub.f32 %v4320, %v4353
        %v4379 = vsub.f32 %v4324, %v4353
        %v4380 = vsub.f32 %v4328, %v4353
        %v4381 = vsub.f32 %v4332, %v4353
        %v4382 = vsub.f32 %v4336, %v4353
        %v4383 = vsub.f32 %v4340, %v4353
        %v4384 = vsub.f32 %v4344, %v4353
        %v4385 = vsub.f32 %v4348, %v4353
        %v4386 = vmul.f32 %v4354, %v4354
        %v4387 = vmul.f32 %v4355, %v4355
        %v4388 = vmul.f32 %v4356, %v4356
        %v4389 = vmul.f32 %v4357, %v4357
        %v4390 = vmul.f32 %v4358, %v4358
        %v4391 = vmul.f32 %v4359, %v4359
        %v4392 = vmul.f32 %v4360, %v4360
        %v4393 = vmul.f32 %v4361, %v4361
        %v4394 = vmul.f32 %v4362, %v4362
        %v4395 = vmul.f32 %v4363, %v4363
        %v4396 = vmul.f32 %v4364, %v4364
        %v4397 = vmul.f32 %v4365, %v4365
        %v4398 = vmul.f32 %v4366, %v4366
        %v4399 = vmul.f32 %v4367, %v4367
        %v4400 = vmul.f32 %v4368, %v4368
        %v4401 = vmul.f32 %v4369, %v4369
        %v4402 = vmul.f32 %v4370, %v4370
        %v4403 = vmul.f32 %v4371, %v4371
        %v4404 = vmul.f32 %v4372, %v4372
        %v4405 = vmul.f32 %v4373, %v4373
        %v4406 = vmul.f32 %v4374, %v4374
        %v4407 = vmul.f32 %v4375, %v4375
        %v4408 = vmul.f32 %v4376, %v4376
        %v4409 = vmul.f32 %v4377, %v4377
        %v4410 = vmul.f32 %v4378, %v4378
        %v4411 = vmul.f32 %v4379, %v4379
        %v4412 = vmul.f32 %v4380, %v4380
        %v4413 = vmul.f32 %v4381, %v4381
        %v4414 = vmul.f32 %v4382, %v4382
        %v4415 = vmul.f32 %v4383, %v4383
        %v4416 = vmul.f32 %v4384, %v4384
        %v4417 = vmul.f32 %v4385, %v4385
        %v4418 = vadd.f32 %v4190, %v4386
        %v4419 = vadd.f32 %v4191, %v4387
        %v4420 = vadd.f32 %v4192, %v4388
        %v4421 = vadd.f32 %v4193, %v4389
        %v4422 = vadd.f32 %v4194, %v4390
        %v4423 = vadd.f32 %v4195, %v4391
        %v4424 = vadd.f32 %v4196, %v4392
        %v4425 = vadd.f32 %v4197, %v4393
        %v4426 = vadd.f32 %v4198, %v4394
        %v4427 = vadd.f32 %v4199, %v4395
        %v4428 = vadd.f32 %v4200, %v4396
        %v4429 = vadd.f32 %v4201, %v4397
        %v4430 = vadd.f32 %v4202, %v4398
        %v4431 = vadd.f32 %v4203, %v4399
        %v4432 = vadd.f32 %v4204, %v4400
        %v4433 = vadd.f32 %v4205, %v4401
        %v4434 = vadd.f32 %v4206, %v4402
        %v4435 = vadd.f32 %v4207, %v4403
        %v4436 = vadd.f32 %v4208, %v4404
        %v4437 = vadd.f32 %v4209, %v4405
        %v4438 = vadd.f32 %v4210, %v4406
        %v4439 = vadd.f32 %v4211, %v4407
        %v4440 = vadd.f32 %v4212, %v4408
        %v4441 = vadd.f32 %v4213, %v4409
        %v4442 = vadd.f32 %v4214, %v4410
        %v4443 = vadd.f32 %v4215, %v4411
        %v4444 = vadd.f32 %v4216, %v4412
        %v4445 = vadd.f32 %v4217, %v4413
        %v4446 = vadd.f32 %v4218, %v4414
        %v4447 = vadd.f32 %v4219, %v4415
        %v4448 = vadd.f32 %v4220, %v4416
        %v4449 = vadd.f32 %v4221, %v4417
        %v4450 = vsub.f32 0.0, %v4418
        %v4451 = vsub.f32 0.0, %v4419
        %v4452 = vsub.f32 0.0, %v4420
        %v4453 = vsub.f32 0.0, %v4421
        %v4454 = vsub.f32 0.0, %v4422
        %v4455 = vsub.f32 0.0, %v4423
        %v4456 = vsub.f32 0.0, %v4424
        %v4457 = vsub.f32 0.0, %v4425
        %v4458 = vsub.f32 0.0, %v4426
        %v4459 = vsub.f32 0.0, %v4427
        %v4460 = vsub.f32 0.0, %v4428
        %v4461 = vsub.f32 0.0, %v4429
        %v4462 = vsub.f32 0.0, %v4430
        %v4463 = vsub.f32 0.0, %v4431
        %v4464 = vsub.f32 0.0, %v4432
        %v4465 = vsub.f32 0.0, %v4433
        %v4466 = vsub.f32 0.0, %v4434
        %v4467 = vsub.f32 0.0, %v4435
        %v4468 = vsub.f32 0.0, %v4436
        %v4469 = vsub.f32 0.0, %v4437
        %v4470 = vsub.f32 0.0, %v4438
        %v4471 = vsub.f32 0.0, %v4439
        %v4472 = vsub.f32 0.0, %v4440
        %v4473 = vsub.f32 0.0, %v4441
        %v4474 = vsub.f32 0.0, %v4442
        %v4475 = vsub.f32 0.0, %v4443
        %v4476 = vsub.f32 0.0, %v4444
        %v4477 = vsub.f32 0.0, %v4445
        %v4478 = vsub.f32 0.0, %v4446
        %v4479 = vsub.f32 0.0, %v4447
        %v4480 = vsub.f32 0.0, %v4448
        %v4481 = vsub.f32 0.0, %v4449
        %v4482 = vmul.f32 %v4450, 2.0
        %v4483 = vmul.f32 %v4451, 2.0
        %v4484 = vmul.f32 %v4452, 2.0
        %v4485 = vmul.f32 %v4453, 2.0
        %v4486 = vmul.f32 %v4454, 2.0
        %v4487 = vmul.f32 %v4455, 2.0
        %v4488 = vmul.f32 %v4456, 2.0
        %v4489 = vmul.f32 %v4457, 2.0
        %v4490 = vmul.f32 %v4458, 2.0
        %v4491 = vmul.f32 %v4459, 2.0
        %v4492 = vmul.f32 %v4460, 2.0
        %v4493 = vmul.f32 %v4461, 2.0
        %v4494 = vmul.f32 %v4462, 2.0
        %v4495 = vmul.f32 %v4463, 2.0
        %v4496 = vmul.f32 %v4464, 2.0
        %v4497 = vmul.f32 %v4465, 2.0
        %v4498 = vmul.f32 %v4466, 2.0
        %v4499 = vmul.f32 %v4467, 2.0
        %v4500 = vmul.f32 %v4468, 2.0
        %v4501 = vmul.f32 %v4469, 2.0
        %v4502 = vmul.f32 %v4470, 2.0
        %v4503 = vmul.f32 %v4471, 2.0
        %v4504 = vmul.f32 %v4472, 2.0
        %v4505 = vmul.f32 %v4473, 2.0
        %v4506 = vmul.f32 %v4474, 2.0
        %v4507 = vmul.f32 %v4475, 2.0
        %v4508 = vmul.f32 %v4476, 2.0
        %v4509 = vmul.f32 %v4477, 2.0
        %v4510 = vmul.f32 %v4478, 2.0
        %v4511 = vmul.f32 %v4479, 2.0
        %v4512 = vmul.f32 %v4480, 2.0
        %v4513 = vmul.f32 %v4481, 2.0
        %v4514 = vmul.f32 %v4482, 1.442695
        %v4515 = vpow.pop %v4514
        %v4516 = vmul.f32 %v4483, 1.442695
        %v4517 = vpow.pop %v4516
        %v4518 = vmul.f32 %v4484, 1.442695
        %v4519 = vpow.pop %v4518
        %v4520 = vmul.f32 %v4485, 1.442695
        %v4521 = vpow.pop %v4520
        %v4522 = vmul.f32 %v4486, 1.442695
        %v4523 = vpow.pop %v4522
        %v4524 = vmul.f32 %v4487, 1.442695
        %v4525 = vpow.pop %v4524
        %v4526 = vmul.f32 %v4488, 1.442695
        %v4527 = vpow.pop %v4526
        %v4528 = vmul.f32 %v4489, 1.442695
        %v4529 = vpow.pop %v4528
        %v4530 = vmul.f32 %v4490, 1.442695
        %v4531 = vpow.pop %v4530
        %v4532 = vmul.f32 %v4491, 1.442695
        %v4533 = vpow.pop %v4532
        %v4534 = vmul.f32 %v4492, 1.442695
        %v4535 = vpow.pop %v4534
        %v4536 = vmul.f32 %v4493, 1.442695
        %v4537 = vpow.pop %v4536
        %v4538 = vmul.f32 %v4494, 1.442695
        %v4539 = vpow.pop %v4538
        %v4540 = vmul.f32 %v4495, 1.442695
        %v4541 = vpow.pop %v4540
        %v4542 = vmul.f32 %v4496, 1.442695
        %v4543 = vpow.pop %v4542
        %v4544 = vmul.f32 %v4497, 1.442695
        %v4545 = vpow.pop %v4544
        %v4546 = vmul.f32 %v4498, 1.442695
        %v4547 = vpow.pop %v4546
        %v4548 = vmul.f32 %v4499, 1.442695
        %v4549 = vpow.pop %v4548
        %v4550 = vmul.f32 %v4500, 1.442695
        %v4551 = vpow.pop %v4550
        %v4552 = vmul.f32 %v4501, 1.442695
        %v4553 = vpow.pop %v4552
        %v4554 = vmul.f32 %v4502, 1.442695
        %v4555 = vpow.pop %v4554
        %v4556 = vmul.f32 %v4503, 1.442695
        %v4557 = vpow.pop %v4556
        %v4558 = vmul.f32 %v4504, 1.442695
        %v4559 = vpow.pop %v4558
        %v4560 = vmul.f32 %v4505, 1.442695
        %v4561 = vpow.pop %v4560
        %v4562 = vmul.f32 %v4506, 1.442695
        %v4563 = vpow.pop %v4562
        %v4564 = vmul.f32 %v4507, 1.442695
        %v4565 = vpow.pop %v4564
        %v4566 = vmul.f32 %v4508, 1.442695
        %v4567 = vpow.pop %v4566
        %v4568 = vmul.f32 %v4509, 1.442695
        %v4569 = vpow.pop %v4568
        %v4570 = vmul.f32 %v4510, 1.442695
        %v4571 = vpow.pop %v4570
        %v4572 = vmul.f32 %v4511, 1.442695
        %v4573 = vpow.pop %v4572
        %v4574 = vmul.f32 %v4512, 1.442695
        %v4575 = vpow.pop %v4574
        %v4576 = vmul.f32 %v4513, 1.442695
        %v4577 = vpow.pop %v4576
        %4578 = vmatprep.subr.mxu0 0.0
        %4579 = vmatpush1.msra.mxu0 %v4515
        %4580 = vmatprep.subr.mxu0 0.0
        %4581 = vmatpush1.msra.mxu0 %v4517
        %4582 = vmatprep.subr.mxu0 0.0
        %4583 = vmatpush1.msra.mxu0 %v4519
        %4584 = vmatprep.subr.mxu0 0.0
        %4585 = vmatpush1.msra.mxu0 %v4521
        %4586 = vmatprep.subr.mxu0 0.0
        %4587 = vmatpush1.msra.mxu0 %v4523
        %4588 = vmatprep.subr.mxu0 0.0
        %4589 = vmatpush1.msra.mxu0 %v4525
        %4590 = vmatprep.subr.mxu0 0.0
        %4591 = vmatpush1.msra.mxu0 %v4527
        %4592 = vmatprep.subr.mxu0 0.0
        %4593 = vmatpush1.msra.mxu0 %v4529
        %4594 = vmatprep.subr.mxu0 0.0
        %4595 = vmatpush1.msra.mxu0 %v4531
        %4596 = vmatprep.subr.mxu0 0.0
        %4597 = vmatpush1.msra.mxu0 %v4533
        %4598 = vmatprep.subr.mxu0 0.0
        %4599 = vmatpush1.msra.mxu0 %v4535
        %4600 = vmatprep.subr.mxu0 0.0
        %4601 = vmatpush1.msra.mxu0 %v4537
        %4602 = vmatprep.subr.mxu0 0.0
        %4603 = vmatpush1.msra.mxu0 %v4539
        %4604 = vmatprep.subr.mxu0 0.0
        %4605 = vmatpush1.msra.mxu0 %v4541
        %4606 = vmatprep.subr.mxu0 0.0
        %4607 = vmatpush1.msra.mxu0 %v4543
        %4608 = vmatprep.subr.mxu0 0.0
        %4609 = vmatpush1.msra.mxu0 %v4545
        %4610 = vmatprep.subr.mxu0 0.0
        %4611 = vmatpush1.msra.mxu0 %v4547
        %4612 = vmatprep.subr.mxu0 0.0
        %4613 = vmatpush1.msra.mxu0 %v4549
        %4614 = vmatprep.subr.mxu0 0.0
        %4615 = vmatpush1.msra.mxu0 %v4551
        %4616 = vmatprep.subr.mxu0 0.0
        %4617 = vmatpush1.msra.mxu0 %v4553
        %4618 = vmatprep.subr.mxu0 0.0
        %4619 = vmatpush1.msra.mxu0 %v4555
        %4620 = vmatprep.subr.mxu0 0.0
        %4621 = vmatpush1.msra.mxu0 %v4557
        %4622 = vmatprep.subr.mxu0 0.0
        %4623 = vmatpush1.msra.mxu0 %v4559
        %4624 = vmatprep.subr.mxu0 0.0
        %4625 = vmatpush1.msra.mxu0 %v4561
        %4626 = vmatprep.subr.mxu0 0.0
        %4627 = vmatpush1.msra.mxu0 %v4563
        %4628 = vmatprep.subr.mxu0 0.0
        %4629 = vmatpush1.msra.mxu0 %v4565
        %4630 = vmatprep.subr.mxu0 0.0
        %4631 = vmatpush1.msra.mxu0 %v4567
        %4632 = vmatprep.subr.mxu0 0.0
        %4633 = vmatpush1.msra.mxu0 %v4569
        %4634 = vmatprep.subr.mxu0 0.0
        %4635 = vmatpush1.msra.mxu0 %v4571
        %4636 = vmatprep.subr.mxu0 0.0
        %4637 = vmatpush1.msra.mxu0 %v4573
        %4638 = vmatprep.subr.mxu0 0.0
        %4639 = vmatpush1.msra.mxu0 %v4575
        %4640 = vmatprep.subr.mxu0 0.0
        %4641 = vmatpush1.msra.mxu0 %v4577
        %4642 = vmatprep.mubr.f32.mxu0 %v3928
        %4643 = vmatmul.mubr.f32.gmra.mrb[0].mxu0 %v3927
        %v4644 = vpop.f32.mrb[0].mxu0
        %v4645 = vadd.f32 0.0, %v4644
        %v4646 = vpop.f32.mrb[0].mxu0
        %4647 = vdwg.mxu0
        %4648 = vmatprep.subr.mxu0 0.0
        %4649 = vmatpush1.msra.mxu0 %v4515
        %4650 = vmatprep.subr.mxu0 0.0
        %4651 = vmatpush1.msra.mxu0 %v4517
        %4652 = vmatprep.subr.mxu0 0.0
        %4653 = vmatpush1.msra.mxu0 %v4519
        %4654 = vmatprep.subr.mxu0 0.0
        %4655 = vmatpush1.msra.mxu0 %v4521
        %4656 = vmatprep.subr.mxu0 0.0
        %4657 = vmatpush1.msra.mxu0 %v4523
        %4658 = vmatprep.subr.mxu0 0.0
        %4659 = vmatpush1.msra.mxu0 %v4525
        %4660 = vmatprep.subr.mxu0 0.0
        %4661 = vmatpush1.msra.mxu0 %v4527
        %4662 = vmatprep.subr.mxu0 0.0
        %4663 = vmatpush1.msra.mxu0 %v4529
        %4664 = vmatprep.subr.mxu0 0.0
        %4665 = vmatpush1.msra.mxu0 %v4531
        %4666 = vmatprep.subr.mxu0 0.0
        %4667 = vmatpush1.msra.mxu0 %v4533
        %4668 = vmatprep.subr.mxu0 0.0
        %4669 = vmatpush1.msra.mxu0 %v4535
        %4670 = vmatprep.subr.mxu0 0.0
        %4671 = vmatpush1.msra.mxu0 %v4537
        %4672 = vmatprep.subr.mxu0 0.0
        %4673 = vmatpush1.msra.mxu0 %v4539
        %4674 = vmatprep.subr.mxu0 0.0
        %4675 = vmatpush1.msra.mxu0 %v4541
        %4676 = vmatprep.subr.mxu0 0.0
        %4677 = vmatpush1.msra.mxu0 %v4543
        %4678 = vmatprep.subr.mxu0 0.0
        %4679 = vmatpush1.msra.mxu0 %v4545
        %4680 = vmatprep.subr.mxu0 0.0
        %4681 = vmatpush1.msra.mxu0 %v4547
        %4682 = vmatprep.subr.mxu0 0.0
        %4683 = vmatpush1.msra.mxu0 %v4549
        %4684 = vmatprep.subr.mxu0 0.0
        %4685 = vmatpush1.msra.mxu0 %v4551
        %4686 = vmatprep.subr.mxu0 0.0
        %4687 = vmatpush1.msra.mxu0 %v4553
        %4688 = vmatprep.subr.mxu0 0.0
        %4689 = vmatpush1.msra.mxu0 %v4555
        %4690 = vmatprep.subr.mxu0 0.0
        %4691 = vmatpush1.msra.mxu0 %v4557
        %4692 = vmatprep.subr.mxu0 0.0
        %4693 = vmatpush1.msra.mxu0 %v4559
        %4694 = vmatprep.subr.mxu0 0.0
        %4695 = vmatpush1.msra.mxu0 %v4561
        %4696 = vmatprep.subr.mxu0 0.0
        %4697 = vmatpush1.msra.mxu0 %v4563
        %4698 = vmatprep.subr.mxu0 0.0
        %4699 = vmatpush1.msra.mxu0 %v4565
        %4700 = vmatprep.subr.mxu0 0.0
        %4701 = vmatpush1.msra.mxu0 %v4567
        %4702 = vmatprep.subr.mxu0 0.0
        %4703 = vmatpush1.msra.mxu0 %v4569
        %4704 = vmatprep.subr.mxu0 0.0
        %4705 = vmatpush1.msra.mxu0 %v4571
        %4706 = vmatprep.subr.mxu0 0.0
        %4707 = vmatpush1.msra.mxu0 %v4573
        %4708 = vmatprep.subr.mxu0 0.0
        %4709 = vmatpush1.msra.mxu0 %v4575
        %4710 = vmatprep.subr.mxu0 0.0
        %4711 = vmatpush1.msra.mxu0 %v4577
        %4712 = vmatprep.mubr.f32.mxu0 1.0
        %4713 = vmatmul.mubr.f32.gmra.mrb[0].mxu0 1.0
        %v4714 = vpop.f32.mrb[0].mxu0
        %v4715 = vadd.f32 0.0, %v4714
        %v4716 = vpop.f32.mrb[0].mxu0
        %4717 = vdwg.mxu0
        %v4718 = vrcp.pop %v4715
        %v4719 = vlaneseq
        %v4720 = vshrl.u32 %v4719, 7
        %v4721 = vsub.s32 0, %v4720
        %v4722 = vrot.slane %v4718, %v4721
        %v4723 = vmul.f32 %v4645, %v4722
        %vm4724 = vcmask 93184
        %4725 = vst.msk [vmem:[%s427] sm:$0xf] %vm4724, %v4723
        %s4726 = sand.u32 %s261, 1
        %s4727 = scalar_lea.sflag [#allocation4], %s4726
        %s4728 = sand.u32 %s261, 1
        %s4729 = smul.addr %s4728, 4
        %s4730 = scalar_lea.vmem [#allocation8], %s4729
        // Predicated region
        $region73: #{tpu_custom_call.1} parent=59 // pred_check
          %p4731 = pneg %p271
        $region74: #{tpu_custom_call.1} parent=59 // pred_check_branch
          %4733 = sbr.rel (%p4731) target = $region76
        $region75: #{tpu_custom_call.1} parent=59 // pred_region
          %s4735 = ssub.s32 64, 64
          %4736 = vsyncadd %s4727, %s4735
          %s4737 = smul.addr %s28, 64
          %s4738 = scalar_lea.hbm %s10, %s4737
          %s4740 = sshll.u32 %s4730, 4
          %s4741 = int_to_ptr.vmem [resolvable:$true] %s4740
          %4743 = dma.vmem_to_hbm [thread:$0]  %s4741, 64, %s4738, %s4727
        $region76: #{tpu_custom_call.1} parent=59 // pred_fallthru
          _
      $region60: #{tpu_custom_call.1} parent=5 // pred_fallthru
        _
      %p4744 = scmp.le.s32.totalorder 2, %s23
      // Predicated region
      $region77: #{tpu_custom_call.1} parent=5 // pred_check
        %p4745 = pneg %p4744
      $region78: #{tpu_custom_call.1} parent=5 // pred_check_branch
        %4747 = sbr.rel (%p4745) target = $region80
      $region79: #{tpu_custom_call.1} parent=5 // pred_region
        %s4748 = ssub.s32 %s23, 2
        // Predicated region
        $region81: #{tpu_custom_call.1} parent=79 // pred_check
          %p4749 = pneg %p277
        $region82: #{tpu_custom_call.1} parent=79 // pred_check_branch
          %4751 = sbr.rel (%p4749) target = $region84
        $region83: #{tpu_custom_call.1} parent=79 // pred_region
          %s4752 = sand.u32 %s262, 1
          %s4753 = scalar_lea.sflag [#allocation4], %s4752
          %s4754 = sand.u32 %s262, 1
          %s4755 = smul.addr %s4754, 4
          %s4756 = scalar_lea.vmem [#allocation8], %s4755
          %4757 = dma.done %s4753, 64
        $region84: #{tpu_custom_call.1} parent=79 // pred_fallthru
          _
      $region80: #{tpu_custom_call.1} parent=5 // pred_fallthru
        _
    $region6: #{tpu_custom_call.1} parent=1 // loop_footer
      %s27 = sadd.s32 1, %s23
    $region7: #{tpu_custom_call.1} parent=1 // loop_footer_branch
      %22 = sbr.rel target = $region3
    $region8: #{tpu_custom_call.1} parent=1 // loop_exit
      _
    %4758 = vsyncpa [#allocation3], 1
    %s4759 = scalar_lea.sflag [#allocation3], 1
    %4760 = vsyncpa %s4759, 1
    %4761 = vsyncpa [#allocation6], 1
    %s4762 = scalar_lea.sflag [#allocation6], 1
    %4763 = vsyncpa %s4762, 1
    %4764 = vsyncpa [#allocation4], 1
    %s4765 = scalar_lea.sflag [#allocation4], 1
    %4766 = vsyncpa %s4765, 1

</llo_original>
